<compile_context>
chip_gen: v7x
topology: tpu7x:2x2x1
jax: 0.10.0
libtpu: 0.0.40
codegen_flags: <defaults>
</compile_context>

<pallas_src>
import functools
import math

import jax
import jax.numpy as jnp
from jax import lax
from jax.experimental import pallas as pl
from jax.experimental.pallas import tpu as pltpu

EPS = 1e-5  # PyTorch LayerNorm default eps

# Row indices into the packed (16, E) f32 vector-parameter slab.
_BO, _BLO, _B2 = 0, 1, 2
_G1, _BE1, _G2, _BE2, _G3, _BE3 = 3, 4, 5, 6, 7, 8
_N_VECS = 16  # padded to a sublane multiple


def _layernorm(x, gamma, beta):
    mu = jnp.mean(x, axis=-1, keepdims=True)
    var = jnp.mean((x - mu) ** 2, axis=-1, keepdims=True)
    return (x - mu) * lax.rsqrt(var + EPS) * gamma + beta


def _softmax(x, axis):
    m = jnp.max(x, axis=axis, keepdims=True)
    e = jnp.exp(x - m)
    return e * pl.reciprocal(jnp.sum(e, axis=axis, keepdims=True), approx=True)


def transformer_block_kernel(x_ref, wqkv_ref, wout_ref, w1_ref, w2_ref,
                             bqkv_ref, vecs_ref, b1_ref, o_ref,
                             *, num_heads, block_batch, seq_len):
    f32, bf16 = jnp.float32, jnp.bfloat16
    x = x_ref[...].astype(f32)                   # (R, E) with R = block_batch * seq_len
    R, E = x.shape
    S = seq_len
    D = E // num_heads
    scale = 1.0 / math.sqrt(D)

    def vec(i):                                  # (1, E) f32 row; each row is used exactly once,
        return vecs_ref[i:i + 1, :]              # so its broadcast-add is never repeated work.

    # ---------------- Multi-head self-attention (q = k = v = x, mask=None) ----------------
    # Fused QKV: one MXU pass with N = 3E; biases fused in before the split.
    xb = x.astype(bf16)
    qkv = jnp.dot(xb, wqkv_ref[0], preferred_element_type=f32) + bqkv_ref[0:1, :]   # (R, 3E) f32
    qb = (qkv[:, 0:E] * scale).astype(bf16)      # fold 1/sqrt(D) into q once
    kb = qkv[:, E:2 * E].astype(bf16)
    vb = qkv[:, 2 * E:3 * E].astype(bf16)

    wo = wout_ref[0]                             # (E, E) bf16
    dn_q_kt = (((1,), (1,)), ((), ()))           # contract head dim of both -> q @ k^T, no .T
    # Static per-element / per-head loops. The output projection is folded per head into an
    # f32 accumulator, so no lane-axis concat of sub-128-lane head contexts is materialized.
    attended_rows = []
    for bi in range(block_batch):
        r0 = bi * S
        acc = jnp.zeros((S, E), f32)
        for h in range(num_heads):
            c0 = h * D
            s = lax.dot_general(qb[r0:r0 + S, c0:c0 + D], kb[r0:r0 + S, c0:c0 + D],
                                dn_q_kt, preferred_element_type=f32)                # (S, S)
            a = _softmax(s, axis=-1).astype(bf16)
            ctx = jnp.dot(a, vb[r0:r0 + S, c0:c0 + D], preferred_element_type=f32)  # (S, D)
            acc = acc + jnp.dot(ctx.astype(bf16), wo[c0:c0 + D, :],
                                preferred_element_type=f32)                         # (S, E)
        attended_rows.append(acc)
    attended = attended_rows[0] if block_batch == 1 else jnp.concatenate(attended_rows, axis=0)
    attended = attended + vec(_BO)

    # dropout -> identity (eval mode)
    x = _layernorm(x + attended, vec(_G1), vec(_BE1))

    # ---------------- Linear ("efficient") attention ---------------------------------------
    xb = x.astype(bf16)
    lqkv = jnp.dot(xb, wqkv_ref[1], preferred_element_type=f32) + bqkv_ref[1:2, :]  # (R, 3E)
    lq = _softmax(lqkv[:, 0:E], axis=-1)
    lk_logits = lqkv[:, E:2 * E]
    lv = lqkv[:, 2 * E:3 * E]

    dn_kt_v = (((0,), (0,)), ((), ()))           # contract the sequence axis -> k^T @ v, no .T
    local_rows = []
    for bi in range(block_batch):
        r0 = bi * S
        lk = _softmax(lk_logits[r0:r0 + S, :], axis=0)    # seq-axis softmax, per batch element
        context = lax.dot_general(lk.astype(bf16), lv[r0:r0 + S, :].astype(bf16),
                                  dn_kt_v, preferred_element_type=f32)              # (E, E)
        local_rows.append(jnp.dot(lq[r0:r0 + S, :].astype(bf16), context.astype(bf16),
                                  preferred_element_type=f32))                      # (S, E)
    local = local_rows[0] if block_batch == 1 else jnp.concatenate(local_rows, axis=0)
    local = jnp.dot(local.astype(bf16), wout_ref[1], preferred_element_type=f32) + vec(_BLO)

    x = _layernorm(x + local, vec(_G2), vec(_BE2))

    # ---------------- Feed-forward network ---------------------------------------------------
    xb = x.astype(bf16)
    h1 = jnp.dot(xb, w1_ref[...], preferred_element_type=f32) + b1_ref[...]
    h1 = jnp.maximum(h1, 0.0)                    # ReLU (f32)
    ff = jnp.dot(h1.astype(bf16), w2_ref[...], preferred_element_type=f32) + vec(_B2)

    x = _layernorm(x + ff, vec(_G3), vec(_BE3))
    o_ref[...] = x.astype(o_ref.dtype)


def init_params(key, embed_dim, ff_dim):
    """Deterministic PyTorch-style (uniform +/- 1/sqrt(fan_in)) Linear init."""
    keys = iter(jax.random.split(key, 16))

    def lin(fan_in, fan_out):
        kw, kb = jax.random.split(next(keys))
        bound = 1.0 / math.sqrt(fan_in)
        w = jax.random.uniform(kw, (fan_in, fan_out), jnp.float32, -bound, bound)
        b = jax.random.uniform(kb, (1, fan_out), jnp.float32, -bound, bound)
        return w, b

    E, F = embed_dim, ff_dim
    wq, bq = lin(E, E); wk, bk = lin(E, E); wv, bv = lin(E, E); wo, bo = lin(E, E)
    wlq, blq = lin(E, E); wlk, blk = lin(E, E); wlv, blv = lin(E, E); wlo, blo = lin(E, E)
    w1, b1 = lin(E, F); w2, b2 = lin(F, E)
    ones = jnp.ones((1, E), jnp.float32)
    zeros = jnp.zeros((1, E), jnp.float32)
    return [
        wq, bq, wk, bk, wv, bv, wo, bo,
        wlq, blq, wlk, blk, wlv, blv, wlo, blo,
        w1, b1, w2, b2,
        ones, zeros,   # norm1 gamma/beta
        ones, zeros,   # norm2 gamma/beta
        ones, zeros,   # norm3 gamma/beta
    ]


def _pick_block_batch(batch, seq):
    """Merge batch elements so each grid step feeds the MXU with ~256 rows (fills the M dim and
    amortizes the fixed per-step cost), while keeping B % bt == 0 and a layout-legal row block."""
    bt = max(1, min(batch, (256 + seq - 1) // seq))
    while bt > 1 and (batch % bt or (bt < batch and (bt * seq) % 8)):
        bt -= 1
    return bt


def _vmem_limit_bytes():
    """Generation-specific scoped-VMEM limit: v7x has 64 MiB physical per TC (leave DMA headroom);
    v5e/v6e have 128 MiB, so go well above the 16/32 MiB scoped default."""
    try:
        kind = jax.devices()[0].device_kind.lower()
    except Exception:
        return None
    if "v7" in kind:
        return 48 * 1024 * 1024
    if "v5" in kind or "v6" in kind:
        return 100 * 1024 * 1024
    return None


def transformer_block(x, params, num_heads, block_batch=None):
    B, S, E = x.shape
    (wq, bq, wk, bk, wv, bv, wo, bo,
     wlq, blq, wlk, blk, wlv, blv, wlo, blo,
     w1, b1, w2, b2, g1, be1, g2, be2, g3, be3) = params
    F = w1.shape[1]
    bf16 = jnp.bfloat16

    # Pack grid-invariant parameters (constant index_maps => fetched once, not per grid step):
    #   fused QKV weights (one (E,3E) block per attention) -> (2, E, 3E) bf16
    #   output projections wo / wlo                         -> (2, E, E)  bf16
    #   fused QKV biases                                    -> (2, 3E)    f32
    #   remaining E-wide biases + LayerNorm affine params   -> (16, E)    f32
    wqkv = jnp.stack([jnp.concatenate([wq, wk, wv], axis=1),
                      jnp.concatenate([wlq, wlk, wlv], axis=1)]).astype(bf16)
    wout = jnp.stack([wo, wlo]).astype(bf16)
    bqkv = jnp.concatenate([jnp.concatenate([bq, bk, bv], axis=1),
                            jnp.concatenate([blq, blk, blv], axis=1)], axis=0)
    vec_rows = [bo, blo, b2, g1, be1, g2, be2, g3, be3]
    vecs = jnp.concatenate(
        vec_rows + [jnp.zeros((_N_VECS - len(vec_rows), E), jnp.float32)], axis=0)
    w1b = w1.astype(bf16)
    w2b = w2.astype(bf16)

    bt = block_batch if block_batch is not None else _pick_block_batch(B, S)
    rows = bt * S
    x2 = x.reshape(B * S, E)   # row-major flatten; per-element attention handled in-kernel

    kernel = functools.partial(transformer_block_kernel, num_heads=num_heads,
                               block_batch=bt, seq_len=S)

    def run(single_buffer_params):
        def const_spec(shape):
            idx = lambda i, _shape=shape: (0,) * len(_shape)
            if single_buffer_params:
                # Fetched once (constant index_map): single-buffering halves their VMEM
                # footprint, which is what keeps production E/F resident on v7x's 64 MiB VMEM.
                return pl.BlockSpec(shape, idx, pipeline_mode=pl.Buffered(1))
            return pl.BlockSpec(shape, idx)

        return pl.pallas_call(
            kernel,
            out_shape=jax.ShapeDtypeStruct((B * S, E), x.dtype),
            grid_spec=pltpu.PrefetchScalarGridSpec(
                num_scalar_prefetch=0,
                grid=(B // bt,),
                in_specs=[
                    pl.BlockSpec((rows, E), lambda i: (i, 0)),   # activation rows (pipelined)
                    const_spec((2, E, 3 * E)),                   # fused QKV weights (MHA, linear)
                    const_spec((2, E, E)),                       # wo, wlo
                    const_spec((E, F)),                          # FFN w1
                    const_spec((F, E)),                          # FFN w2
                    const_spec((2, 3 * E)),                      # fused QKV biases
                    const_spec((_N_VECS, E)),                    # packed biases / LN params
                    const_spec((1, F)),                          # FFN b1
                ],
                out_specs=pl.BlockSpec((rows, E), lambda i: (i, 0)),
            ),
            compiler_params=pltpu.CompilerParams(
                dimension_semantics=("parallel",),   # row blocks independent (megacore on v7x)
                vmem_limit_bytes=_vmem_limit_bytes(),
            ),
        )(x2, wqkv, wout, w1b, w2b, bqkv, vecs, b1)

    try:
        out = run(single_buffer_params=True)
    except Exception:
        # Fallback for JAX builds where BlockSpec.pipeline_mode / pl.Buffered(1) is unavailable;
        # identical semantics, just default double-buffered parameter slabs.
        out = run(single_buffer_params=False)
    return out.reshape(B, S, E)


if __name__ == "__main__":
    B, S, E, H, F = 2, 8, 32, 4, 64   # batch, seq, embed_dim, num_heads, ff_dim

    key = jax.random.PRNGKey(0)
    kx, kp = jax.random.split(key)
    x = jax.random.normal(kx, (B, S, E), jnp.float32)
    params = init_params(kp, E, F)

    out = transformer_block(x, params, H)
    jax.block_until_ready(out)
    assert out.shape == (B, S, E) and out.dtype == jnp.float32
    print("KERNEL_OK")
</pallas_src>

<mosaic_0001>
module attributes {stable_mosaic.version = 11 : i64} {
  func.func @transformer_block_kernel(%arg0: i32, %arg1: memref<16x32xf32, #tpu.memory_space<vmem>>, %arg2: memref<2x32x96xbf16, #tpu.memory_space<vmem>>, %arg3: memref<2x32x32xbf16, #tpu.memory_space<vmem>>, %arg4: memref<32x64xbf16, #tpu.memory_space<vmem>>, %arg5: memref<64x32xbf16, #tpu.memory_space<vmem>>, %arg6: memref<2x96xf32, #tpu.memory_space<vmem>>, %arg7: memref<16x32xf32, #tpu.memory_space<vmem>>, %arg8: memref<1x64xf32, #tpu.memory_space<vmem>>, %arg9: memref<16x32xf32, #tpu.memory_space<vmem>>) attributes {dimension_semantics = [#tpu.dimension_semantics<parallel>], iteration_bounds = array<i64: 1>, scalar_prefetch = 0 : i64, scratch_operands = 0 : i64, tpu.core_type = #tpu.core_type<tc>, window_params = [{transform_indices = @transform_0, window_bounds = array<i64: 16, 32>}, {pipeline_mode = #tpu.pipeline_mode<synchronous>, transform_indices = @transform_1, window_bounds = array<i64: 2, 32, 96>}, {pipeline_mode = #tpu.pipeline_mode<synchronous>, transform_indices = @transform_2, window_bounds = array<i64: 2, 32, 32>}, {pipeline_mode = #tpu.pipeline_mode<synchronous>, transform_indices = @transform_3, window_bounds = array<i64: 32, 64>}, {pipeline_mode = #tpu.pipeline_mode<synchronous>, transform_indices = @transform_4, window_bounds = array<i64: 64, 32>}, {pipeline_mode = #tpu.pipeline_mode<synchronous>, transform_indices = @transform_5, window_bounds = array<i64: 2, 96>}, {pipeline_mode = #tpu.pipeline_mode<synchronous>, transform_indices = @transform_6, window_bounds = array<i64: 16, 32>}, {pipeline_mode = #tpu.pipeline_mode<synchronous>, transform_indices = @transform_7, window_bounds = array<i64: 1, 64>}, {transform_indices = @transform_8, window_bounds = array<i64: 16, 32>}]} {
    %c0 = arith.constant 0 : index
    %c0_0 = arith.constant 0 : index
    %0 = vector.load %arg1[%c0, %c0_0] : memref<16x32xf32, #tpu.memory_space<vmem>>, vector<16x32xf32>
    %1 = arith.truncf %0 : vector<16x32xf32> to vector<16x32xbf16>
    %c0_1 = arith.constant 0 : index
    %c0_2 = arith.constant 0 : index
    %c0_3 = arith.constant 0 : index
    %2 = vector.load %arg2[%c0_1, %c0_2, %c0_3] : memref<2x32x96xbf16, #tpu.memory_space<vmem>>, vector<1x32x96xbf16>
    %3 = vector.shape_cast %2 : vector<1x32x96xbf16> to vector<32x96xbf16>
    %cst = arith.constant dense<0.000000e+00> : vector<16x96xf32>
    %4 = tpu.matmul %1, %3, %cst {dimension_numbers = #tpu.dot_dimension_numbers<[1], [0], [0], [1], [0, 0, 1, 1], [], []>} : vector<16x32xbf16>, vector<32x96xbf16>, vector<16x96xf32> -> vector<16x96xf32>
    %c0_4 = arith.constant 0 : index
    %c0_5 = arith.constant 0 : index
    %5 = vector.load %arg6[%c0_4, %c0_5] : memref<2x96xf32, #tpu.memory_space<vmem>>, vector<1x96xf32>
    %6 = vector.broadcast %5 : vector<1x96xf32> to vector<16x96xf32>
    %7 = arith.addf %4, %6 : vector<16x96xf32>
    %8 = vector.extract_strided_slice %7 {offsets = [0, 0], sizes = [16, 32], strides = [1, 1]} : vector<16x96xf32> to vector<16x32xf32>
    %cst_6 = arith.constant 0.353553385 : f32
    %9 = vector.broadcast %cst_6 : f32 to vector<16x32xf32>
    %10 = arith.mulf %8, %9 : vector<16x32xf32>
    %11 = arith.truncf %10 : vector<16x32xf32> to vector<16x32xbf16>
    %12 = vector.extract_strided_slice %7 {offsets = [0, 32], sizes = [16, 32], strides = [1, 1]} : vector<16x96xf32> to vector<16x32xf32>
    %13 = arith.truncf %12 : vector<16x32xf32> to vector<16x32xbf16>
    %14 = vector.extract_strided_slice %7 {offsets = [0, 64], sizes = [16, 32], strides = [1, 1]} : vector<16x96xf32> to vector<16x32xf32>
    %15 = arith.truncf %14 : vector<16x32xf32> to vector<16x32xbf16>
    %c0_7 = arith.constant 0 : index
    %c0_8 = arith.constant 0 : index
    %c0_9 = arith.constant 0 : index
    %16 = vector.load %arg3[%c0_7, %c0_8, %c0_9] : memref<2x32x32xbf16, #tpu.memory_space<vmem>>, vector<1x32x32xbf16>
    %17 = vector.shape_cast %16 : vector<1x32x32xbf16> to vector<32x32xbf16>
    %cst_10 = arith.constant 0.000000e+00 : f32
    %18 = vector.broadcast %cst_10 : f32 to vector<8x32xf32>
    %19 = vector.extract_strided_slice %11 {offsets = [0, 0], sizes = [8, 8], strides = [1, 1]} : vector<16x32xbf16> to vector<8x8xbf16>
    %20 = vector.extract_strided_slice %13 {offsets = [0, 0], sizes = [8, 8], strides = [1, 1]} : vector<16x32xbf16> to vector<8x8xbf16>
    %cst_11 = arith.constant dense<0.000000e+00> : vector<8x8xf32>
    %21 = tpu.matmul %19, %20, %cst_11 {dimension_numbers = #tpu.dot_dimension_numbers<[1], [1], [0], [0], [0, 0, 1, 0], [], []>} : vector<8x8xbf16>, vector<8x8xbf16>, vector<8x8xf32> -> vector<8x8xf32>
    %cst_12 = arith.constant dense<0xFF800000> : vector<8xf32>
    %22 = vector.multi_reduction <maximumf>, %21, %cst_12 [1] : vector<8x8xf32> to vector<8xf32>
    %23 = vector.shape_cast %22 : vector<8xf32> to vector<8x1xf32>
    %24 = vector.broadcast %23 : vector<8x1xf32> to vector<8x8xf32>
    %25 = arith.subf %21, %24 : vector<8x8xf32>
    %26 = math.exp %25 : vector<8x8xf32>
    %cst_13 = arith.constant dense<0.000000e+00> : vector<8xf32>
    %27 = vector.multi_reduction <add>, %26, %cst_13 [1] : vector<8x8xf32> to vector<8xf32>
    %28 = vector.shape_cast %27 : vector<8xf32> to vector<8x1xf32>
    %29 = tpu.reciprocal %28 {approx = true} : vector<8x1xf32> -> vector<8x1xf32>
    %30 = vector.broadcast %29 : vector<8x1xf32> to vector<8x8xf32>
    %31 = arith.mulf %26, %30 : vector<8x8xf32>
    %32 = arith.truncf %31 : vector<8x8xf32> to vector<8x8xbf16>
    %33 = vector.extract_strided_slice %15 {offsets = [0, 0], sizes = [8, 8], strides = [1, 1]} : vector<16x32xbf16> to vector<8x8xbf16>
    %cst_14 = arith.constant dense<0.000000e+00> : vector<8x8xf32>
    %34 = tpu.matmul %32, %33, %cst_14 {dimension_numbers = #tpu.dot_dimension_numbers<[1], [0], [0], [1], [0, 0, 1, 1], [], []>} : vector<8x8xbf16>, vector<8x8xbf16>, vector<8x8xf32> -> vector<8x8xf32>
    %35 = arith.truncf %34 : vector<8x8xf32> to vector<8x8xbf16>
    %36 = vector.extract_strided_slice %17 {offsets = [0, 0], sizes = [8, 32], strides = [1, 1]} : vector<32x32xbf16> to vector<8x32xbf16>
    %cst_15 = arith.constant dense<0.000000e+00> : vector<8x32xf32>
    %37 = tpu.matmul %35, %36, %cst_15 {dimension_numbers = #tpu.dot_dimension_numbers<[1], [0], [0], [1], [0, 0, 1, 1], [], []>} : vector<8x8xbf16>, vector<8x32xbf16>, vector<8x32xf32> -> vector<8x32xf32>
    %38 = arith.addf %18, %37 : vector<8x32xf32>
    %39 = vector.extract_strided_slice %11 {offsets = [0, 8], sizes = [8, 8], strides = [1, 1]} : vector<16x32xbf16> to vector<8x8xbf16>
    %40 = vector.extract_strided_slice %13 {offsets = [0, 8], sizes = [8, 8], strides = [1, 1]} : vector<16x32xbf16> to vector<8x8xbf16>
    %cst_16 = arith.constant dense<0.000000e+00> : vector<8x8xf32>
    %41 = tpu.matmul %39, %40, %cst_16 {dimension_numbers = #tpu.dot_dimension_numbers<[1], [1], [0], [0], [0, 0, 1, 0], [], []>} : vector<8x8xbf16>, vector<8x8xbf16>, vector<8x8xf32> -> vector<8x8xf32>
    %cst_17 = arith.constant dense<0xFF800000> : vector<8xf32>
    %42 = vector.multi_reduction <maximumf>, %41, %cst_17 [1] : vector<8x8xf32> to vector<8xf32>
    %43 = vector.shape_cast %42 : vector<8xf32> to vector<8x1xf32>
    %44 = vector.broadcast %43 : vector<8x1xf32> to vector<8x8xf32>
    %45 = arith.subf %41, %44 : vector<8x8xf32>
    %46 = math.exp %45 : vector<8x8xf32>
    %cst_18 = arith.constant dense<0.000000e+00> : vector<8xf32>
    %47 = vector.multi_reduction <add>, %46, %cst_18 [1] : vector<8x8xf32> to vector<8xf32>
    %48 = vector.shape_cast %47 : vector<8xf32> to vector<8x1xf32>
    %49 = tpu.reciprocal %48 {approx = true} : vector<8x1xf32> -> vector<8x1xf32>
    %50 = vector.broadcast %49 : vector<8x1xf32> to vector<8x8xf32>
    %51 = arith.mulf %46, %50 : vector<8x8xf32>
    %52 = arith.truncf %51 : vector<8x8xf32> to vector<8x8xbf16>
    %53 = vector.extract_strided_slice %15 {offsets = [0, 8], sizes = [8, 8], strides = [1, 1]} : vector<16x32xbf16> to vector<8x8xbf16>
    %cst_19 = arith.constant dense<0.000000e+00> : vector<8x8xf32>
    %54 = tpu.matmul %52, %53, %cst_19 {dimension_numbers = #tpu.dot_dimension_numbers<[1], [0], [0], [1], [0, 0, 1, 1], [], []>} : vector<8x8xbf16>, vector<8x8xbf16>, vector<8x8xf32> -> vector<8x8xf32>
    %55 = arith.truncf %54 : vector<8x8xf32> to vector<8x8xbf16>
    %56 = vector.extract_strided_slice %17 {offsets = [8, 0], sizes = [8, 32], strides = [1, 1]} : vector<32x32xbf16> to vector<8x32xbf16>
    %cst_20 = arith.constant dense<0.000000e+00> : vector<8x32xf32>
    %57 = tpu.matmul %55, %56, %cst_20 {dimension_numbers = #tpu.dot_dimension_numbers<[1], [0], [0], [1], [0, 0, 1, 1], [], []>} : vector<8x8xbf16>, vector<8x32xbf16>, vector<8x32xf32> -> vector<8x32xf32>
    %58 = arith.addf %38, %57 : vector<8x32xf32>
    %59 = vector.extract_strided_slice %11 {offsets = [0, 16], sizes = [8, 8], strides = [1, 1]} : vector<16x32xbf16> to vector<8x8xbf16>
    %60 = vector.extract_strided_slice %13 {offsets = [0, 16], sizes = [8, 8], strides = [1, 1]} : vector<16x32xbf16> to vector<8x8xbf16>
    %cst_21 = arith.constant dense<0.000000e+00> : vector<8x8xf32>
    %61 = tpu.matmul %59, %60, %cst_21 {dimension_numbers = #tpu.dot_dimension_numbers<[1], [1], [0], [0], [0, 0, 1, 0], [], []>} : vector<8x8xbf16>, vector<8x8xbf16>, vector<8x8xf32> -> vector<8x8xf32>
    %cst_22 = arith.constant dense<0xFF800000> : vector<8xf32>
    %62 = vector.multi_reduction <maximumf>, %61, %cst_22 [1] : vector<8x8xf32> to vector<8xf32>
    %63 = vector.shape_cast %62 : vector<8xf32> to vector<8x1xf32>
    %64 = vector.broadcast %63 : vector<8x1xf32> to vector<8x8xf32>
    %65 = arith.subf %61, %64 : vector<8x8xf32>
    %66 = math.exp %65 : vector<8x8xf32>
    %cst_23 = arith.constant dense<0.000000e+00> : vector<8xf32>
    %67 = vector.multi_reduction <add>, %66, %cst_23 [1] : vector<8x8xf32> to vector<8xf32>
    %68 = vector.shape_cast %67 : vector<8xf32> to vector<8x1xf32>
    %69 = tpu.reciprocal %68 {approx = true} : vector<8x1xf32> -> vector<8x1xf32>
    %70 = vector.broadcast %69 : vector<8x1xf32> to vector<8x8xf32>
    %71 = arith.mulf %66, %70 : vector<8x8xf32>
    %72 = arith.truncf %71 : vector<8x8xf32> to vector<8x8xbf16>
    %73 = vector.extract_strided_slice %15 {offsets = [0, 16], sizes = [8, 8], strides = [1, 1]} : vector<16x32xbf16> to vector<8x8xbf16>
    %cst_24 = arith.constant dense<0.000000e+00> : vector<8x8xf32>
    %74 = tpu.matmul %72, %73, %cst_24 {dimension_numbers = #tpu.dot_dimension_numbers<[1], [0], [0], [1], [0, 0, 1, 1], [], []>} : vector<8x8xbf16>, vector<8x8xbf16>, vector<8x8xf32> -> vector<8x8xf32>
    %75 = arith.truncf %74 : vector<8x8xf32> to vector<8x8xbf16>
    %76 = vector.extract_strided_slice %17 {offsets = [16, 0], sizes = [8, 32], strides = [1, 1]} : vector<32x32xbf16> to vector<8x32xbf16>
    %cst_25 = arith.constant dense<0.000000e+00> : vector<8x32xf32>
    %77 = tpu.matmul %75, %76, %cst_25 {dimension_numbers = #tpu.dot_dimension_numbers<[1], [0], [0], [1], [0, 0, 1, 1], [], []>} : vector<8x8xbf16>, vector<8x32xbf16>, vector<8x32xf32> -> vector<8x32xf32>
    %78 = arith.addf %58, %77 : vector<8x32xf32>
    %79 = vector.extract_strided_slice %11 {offsets = [0, 24], sizes = [8, 8], strides = [1, 1]} : vector<16x32xbf16> to vector<8x8xbf16>
    %80 = vector.extract_strided_slice %13 {offsets = [0, 24], sizes = [8, 8], strides = [1, 1]} : vector<16x32xbf16> to vector<8x8xbf16>
    %cst_26 = arith.constant dense<0.000000e+00> : vector<8x8xf32>
    %81 = tpu.matmul %79, %80, %cst_26 {dimension_numbers = #tpu.dot_dimension_numbers<[1], [1], [0], [0], [0, 0, 1, 0], [], []>} : vector<8x8xbf16>, vector<8x8xbf16>, vector<8x8xf32> -> vector<8x8xf32>
    %cst_27 = arith.constant dense<0xFF800000> : vector<8xf32>
    %82 = vector.multi_reduction <maximumf>, %81, %cst_27 [1] : vector<8x8xf32> to vector<8xf32>
    %83 = vector.shape_cast %82 : vector<8xf32> to vector<8x1xf32>
    %84 = vector.broadcast %83 : vector<8x1xf32> to vector<8x8xf32>
    %85 = arith.subf %81, %84 : vector<8x8xf32>
    %86 = math.exp %85 : vector<8x8xf32>
    %cst_28 = arith.constant dense<0.000000e+00> : vector<8xf32>
    %87 = vector.multi_reduction <add>, %86, %cst_28 [1] : vector<8x8xf32> to vector<8xf32>
    %88 = vector.shape_cast %87 : vector<8xf32> to vector<8x1xf32>
    %89 = tpu.reciprocal %88 {approx = true} : vector<8x1xf32> -> vector<8x1xf32>
    %90 = vector.broadcast %89 : vector<8x1xf32> to vector<8x8xf32>
    %91 = arith.mulf %86, %90 : vector<8x8xf32>
    %92 = arith.truncf %91 : vector<8x8xf32> to vector<8x8xbf16>
    %93 = vector.extract_strided_slice %15 {offsets = [0, 24], sizes = [8, 8], strides = [1, 1]} : vector<16x32xbf16> to vector<8x8xbf16>
    %cst_29 = arith.constant dense<0.000000e+00> : vector<8x8xf32>
    %94 = tpu.matmul %92, %93, %cst_29 {dimension_numbers = #tpu.dot_dimension_numbers<[1], [0], [0], [1], [0, 0, 1, 1], [], []>} : vector<8x8xbf16>, vector<8x8xbf16>, vector<8x8xf32> -> vector<8x8xf32>
    %95 = arith.truncf %94 : vector<8x8xf32> to vector<8x8xbf16>
    %96 = vector.extract_strided_slice %17 {offsets = [24, 0], sizes = [8, 32], strides = [1, 1]} : vector<32x32xbf16> to vector<8x32xbf16>
    %cst_30 = arith.constant dense<0.000000e+00> : vector<8x32xf32>
    %97 = tpu.matmul %95, %96, %cst_30 {dimension_numbers = #tpu.dot_dimension_numbers<[1], [0], [0], [1], [0, 0, 1, 1], [], []>} : vector<8x8xbf16>, vector<8x32xbf16>, vector<8x32xf32> -> vector<8x32xf32>
    %98 = arith.addf %78, %97 : vector<8x32xf32>
    %cst_31 = arith.constant 0.000000e+00 : f32
    %99 = vector.broadcast %cst_31 : f32 to vector<8x32xf32>
    %100 = vector.extract_strided_slice %11 {offsets = [8, 0], sizes = [8, 8], strides = [1, 1]} : vector<16x32xbf16> to vector<8x8xbf16>
    %101 = vector.extract_strided_slice %13 {offsets = [8, 0], sizes = [8, 8], strides = [1, 1]} : vector<16x32xbf16> to vector<8x8xbf16>
    %cst_32 = arith.constant dense<0.000000e+00> : vector<8x8xf32>
    %102 = tpu.matmul %100, %101, %cst_32 {dimension_numbers = #tpu.dot_dimension_numbers<[1], [1], [0], [0], [0, 0, 1, 0], [], []>} : vector<8x8xbf16>, vector<8x8xbf16>, vector<8x8xf32> -> vector<8x8xf32>
    %cst_33 = arith.constant dense<0xFF800000> : vector<8xf32>
    %103 = vector.multi_reduction <maximumf>, %102, %cst_33 [1] : vector<8x8xf32> to vector<8xf32>
    %104 = vector.shape_cast %103 : vector<8xf32> to vector<8x1xf32>
    %105 = vector.broadcast %104 : vector<8x1xf32> to vector<8x8xf32>
    %106 = arith.subf %102, %105 : vector<8x8xf32>
    %107 = math.exp %106 : vector<8x8xf32>
    %cst_34 = arith.constant dense<0.000000e+00> : vector<8xf32>
    %108 = vector.multi_reduction <add>, %107, %cst_34 [1] : vector<8x8xf32> to vector<8xf32>
    %109 = vector.shape_cast %108 : vector<8xf32> to vector<8x1xf32>
    %110 = tpu.reciprocal %109 {approx = true} : vector<8x1xf32> -> vector<8x1xf32>
    %111 = vector.broadcast %110 : vector<8x1xf32> to vector<8x8xf32>
    %112 = arith.mulf %107, %111 : vector<8x8xf32>
    %113 = arith.truncf %112 : vector<8x8xf32> to vector<8x8xbf16>
    %114 = vector.extract_strided_slice %15 {offsets = [8, 0], sizes = [8, 8], strides = [1, 1]} : vector<16x32xbf16> to vector<8x8xbf16>
    %cst_35 = arith.constant dense<0.000000e+00> : vector<8x8xf32>
    %115 = tpu.matmul %113, %114, %cst_35 {dimension_numbers = #tpu.dot_dimension_numbers<[1], [0], [0], [1], [0, 0, 1, 1], [], []>} : vector<8x8xbf16>, vector<8x8xbf16>, vector<8x8xf32> -> vector<8x8xf32>
    %116 = arith.truncf %115 : vector<8x8xf32> to vector<8x8xbf16>
    %117 = vector.extract_strided_slice %17 {offsets = [0, 0], sizes = [8, 32], strides = [1, 1]} : vector<32x32xbf16> to vector<8x32xbf16>
    %cst_36 = arith.constant dense<0.000000e+00> : vector<8x32xf32>
    %118 = tpu.matmul %116, %117, %cst_36 {dimension_numbers = #tpu.dot_dimension_numbers<[1], [0], [0], [1], [0, 0, 1, 1], [], []>} : vector<8x8xbf16>, vector<8x32xbf16>, vector<8x32xf32> -> vector<8x32xf32>
    %119 = arith.addf %99, %118 : vector<8x32xf32>
    %120 = vector.extract_strided_slice %11 {offsets = [8, 8], sizes = [8, 8], strides = [1, 1]} : vector<16x32xbf16> to vector<8x8xbf16>
    %121 = vector.extract_strided_slice %13 {offsets = [8, 8], sizes = [8, 8], strides = [1, 1]} : vector<16x32xbf16> to vector<8x8xbf16>
    %cst_37 = arith.constant dense<0.000000e+00> : vector<8x8xf32>
    %122 = tpu.matmul %120, %121, %cst_37 {dimension_numbers = #tpu.dot_dimension_numbers<[1], [1], [0], [0], [0, 0, 1, 0], [], []>} : vector<8x8xbf16>, vector<8x8xbf16>, vector<8x8xf32> -> vector<8x8xf32>
    %cst_38 = arith.constant dense<0xFF800000> : vector<8xf32>
    %123 = vector.multi_reduction <maximumf>, %122, %cst_38 [1] : vector<8x8xf32> to vector<8xf32>
    %124 = vector.shape_cast %123 : vector<8xf32> to vector<8x1xf32>
    %125 = vector.broadcast %124 : vector<8x1xf32> to vector<8x8xf32>
    %126 = arith.subf %122, %125 : vector<8x8xf32>
    %127 = math.exp %126 : vector<8x8xf32>
    %cst_39 = arith.constant dense<0.000000e+00> : vector<8xf32>
    %128 = vector.multi_reduction <add>, %127, %cst_39 [1] : vector<8x8xf32> to vector<8xf32>
    %129 = vector.shape_cast %128 : vector<8xf32> to vector<8x1xf32>
    %130 = tpu.reciprocal %129 {approx = true} : vector<8x1xf32> -> vector<8x1xf32>
    %131 = vector.broadcast %130 : vector<8x1xf32> to vector<8x8xf32>
    %132 = arith.mulf %127, %131 : vector<8x8xf32>
    %133 = arith.truncf %132 : vector<8x8xf32> to vector<8x8xbf16>
    %134 = vector.extract_strided_slice %15 {offsets = [8, 8], sizes = [8, 8], strides = [1, 1]} : vector<16x32xbf16> to vector<8x8xbf16>
    %cst_40 = arith.constant dense<0.000000e+00> : vector<8x8xf32>
    %135 = tpu.matmul %133, %134, %cst_40 {dimension_numbers = #tpu.dot_dimension_numbers<[1], [0], [0], [1], [0, 0, 1, 1], [], []>} : vector<8x8xbf16>, vector<8x8xbf16>, vector<8x8xf32> -> vector<8x8xf32>
    %136 = arith.truncf %135 : vector<8x8xf32> to vector<8x8xbf16>
    %137 = vector.extract_strided_slice %17 {offsets = [8, 0], sizes = [8, 32], strides = [1, 1]} : vector<32x32xbf16> to vector<8x32xbf16>
    %cst_41 = arith.constant dense<0.000000e+00> : vector<8x32xf32>
    %138 = tpu.matmul %136, %137, %cst_41 {dimension_numbers = #tpu.dot_dimension_numbers<[1], [0], [0], [1], [0, 0, 1, 1], [], []>} : vector<8x8xbf16>, vector<8x32xbf16>, vector<8x32xf32> -> vector<8x32xf32>
    %139 = arith.addf %119, %138 : vector<8x32xf32>
    %140 = vector.extract_strided_slice %11 {offsets = [8, 16], sizes = [8, 8], strides = [1, 1]} : vector<16x32xbf16> to vector<8x8xbf16>
    %141 = vector.extract_strided_slice %13 {offsets = [8, 16], sizes = [8, 8], strides = [1, 1]} : vector<16x32xbf16> to vector<8x8xbf16>
    %cst_42 = arith.constant dense<0.000000e+00> : vector<8x8xf32>
    %142 = tpu.matmul %140, %141, %cst_42 {dimension_numbers = #tpu.dot_dimension_numbers<[1], [1], [0], [0], [0, 0, 1, 0], [], []>} : vector<8x8xbf16>, vector<8x8xbf16>, vector<8x8xf32> -> vector<8x8xf32>
    %cst_43 = arith.constant dense<0xFF800000> : vector<8xf32>
    %143 = vector.multi_reduction <maximumf>, %142, %cst_43 [1] : vector<8x8xf32> to vector<8xf32>
    %144 = vector.shape_cast %143 : vector<8xf32> to vector<8x1xf32>
    %145 = vector.broadcast %144 : vector<8x1xf32> to vector<8x8xf32>
    %146 = arith.subf %142, %145 : vector<8x8xf32>
    %147 = math.exp %146 : vector<8x8xf32>
    %cst_44 = arith.constant dense<0.000000e+00> : vector<8xf32>
    %148 = vector.multi_reduction <add>, %147, %cst_44 [1] : vector<8x8xf32> to vector<8xf32>
    %149 = vector.shape_cast %148 : vector<8xf32> to vector<8x1xf32>
    %150 = tpu.reciprocal %149 {approx = true} : vector<8x1xf32> -> vector<8x1xf32>
    %151 = vector.broadcast %150 : vector<8x1xf32> to vector<8x8xf32>
    %152 = arith.mulf %147, %151 : vector<8x8xf32>
    %153 = arith.truncf %152 : vector<8x8xf32> to vector<8x8xbf16>
    %154 = vector.extract_strided_slice %15 {offsets = [8, 16], sizes = [8, 8], strides = [1, 1]} : vector<16x32xbf16> to vector<8x8xbf16>
    %cst_45 = arith.constant dense<0.000000e+00> : vector<8x8xf32>
    %155 = tpu.matmul %153, %154, %cst_45 {dimension_numbers = #tpu.dot_dimension_numbers<[1], [0], [0], [1], [0, 0, 1, 1], [], []>} : vector<8x8xbf16>, vector<8x8xbf16>, vector<8x8xf32> -> vector<8x8xf32>
    %156 = arith.truncf %155 : vector<8x8xf32> to vector<8x8xbf16>
    %157 = vector.extract_strided_slice %17 {offsets = [16, 0], sizes = [8, 32], strides = [1, 1]} : vector<32x32xbf16> to vector<8x32xbf16>
    %cst_46 = arith.constant dense<0.000000e+00> : vector<8x32xf32>
    %158 = tpu.matmul %156, %157, %cst_46 {dimension_numbers = #tpu.dot_dimension_numbers<[1], [0], [0], [1], [0, 0, 1, 1], [], []>} : vector<8x8xbf16>, vector<8x32xbf16>, vector<8x32xf32> -> vector<8x32xf32>
    %159 = arith.addf %139, %158 : vector<8x32xf32>
    %160 = vector.extract_strided_slice %11 {offsets = [8, 24], sizes = [8, 8], strides = [1, 1]} : vector<16x32xbf16> to vector<8x8xbf16>
    %161 = vector.extract_strided_slice %13 {offsets = [8, 24], sizes = [8, 8], strides = [1, 1]} : vector<16x32xbf16> to vector<8x8xbf16>
    %cst_47 = arith.constant dense<0.000000e+00> : vector<8x8xf32>
    %162 = tpu.matmul %160, %161, %cst_47 {dimension_numbers = #tpu.dot_dimension_numbers<[1], [1], [0], [0], [0, 0, 1, 0], [], []>} : vector<8x8xbf16>, vector<8x8xbf16>, vector<8x8xf32> -> vector<8x8xf32>
    %cst_48 = arith.constant dense<0xFF800000> : vector<8xf32>
    %163 = vector.multi_reduction <maximumf>, %162, %cst_48 [1] : vector<8x8xf32> to vector<8xf32>
    %164 = vector.shape_cast %163 : vector<8xf32> to vector<8x1xf32>
    %165 = vector.broadcast %164 : vector<8x1xf32> to vector<8x8xf32>
    %166 = arith.subf %162, %165 : vector<8x8xf32>
    %167 = math.exp %166 : vector<8x8xf32>
    %cst_49 = arith.constant dense<0.000000e+00> : vector<8xf32>
    %168 = vector.multi_reduction <add>, %167, %cst_49 [1] : vector<8x8xf32> to vector<8xf32>
    %169 = vector.shape_cast %168 : vector<8xf32> to vector<8x1xf32>
    %170 = tpu.reciprocal %169 {approx = true} : vector<8x1xf32> -> vector<8x1xf32>
    %171 = vector.broadcast %170 : vector<8x1xf32> to vector<8x8xf32>
    %172 = arith.mulf %167, %171 : vector<8x8xf32>
    %173 = arith.truncf %172 : vector<8x8xf32> to vector<8x8xbf16>
    %174 = vector.extract_strided_slice %15 {offsets = [8, 24], sizes = [8, 8], strides = [1, 1]} : vector<16x32xbf16> to vector<8x8xbf16>
    %cst_50 = arith.constant dense<0.000000e+00> : vector<8x8xf32>
    %175 = tpu.matmul %173, %174, %cst_50 {dimension_numbers = #tpu.dot_dimension_numbers<[1], [0], [0], [1], [0, 0, 1, 1], [], []>} : vector<8x8xbf16>, vector<8x8xbf16>, vector<8x8xf32> -> vector<8x8xf32>
    %176 = arith.truncf %175 : vector<8x8xf32> to vector<8x8xbf16>
    %177 = vector.extract_strided_slice %17 {offsets = [24, 0], sizes = [8, 32], strides = [1, 1]} : vector<32x32xbf16> to vector<8x32xbf16>
    %cst_51 = arith.constant dense<0.000000e+00> : vector<8x32xf32>
    %178 = tpu.matmul %176, %177, %cst_51 {dimension_numbers = #tpu.dot_dimension_numbers<[1], [0], [0], [1], [0, 0, 1, 1], [], []>} : vector<8x8xbf16>, vector<8x32xbf16>, vector<8x32xf32> -> vector<8x32xf32>
    %179 = arith.addf %159, %178 : vector<8x32xf32>
    %180 = tpu.concatenate %98, %179 in 0 : vector<8x32xf32>, vector<8x32xf32> -> vector<16x32xf32>
    %c0_52 = arith.constant 0 : index
    %c0_53 = arith.constant 0 : index
    %181 = vector.load %arg7[%c0_52, %c0_53] : memref<16x32xf32, #tpu.memory_space<vmem>>, vector<1x32xf32>
    %182 = vector.broadcast %181 : vector<1x32xf32> to vector<16x32xf32>
    %183 = arith.addf %180, %182 : vector<16x32xf32>
    %184 = arith.addf %0, %183 : vector<16x32xf32>
    %c3 = arith.constant 3 : index
    %c0_54 = arith.constant 0 : index
    %185 = vector.load %arg7[%c3, %c0_54] : memref<16x32xf32, #tpu.memory_space<vmem>>, vector<1x32xf32>
    %c4 = arith.constant 4 : index
    %c0_55 = arith.constant 0 : index
    %186 = vector.load %arg7[%c4, %c0_55] : memref<16x32xf32, #tpu.memory_space<vmem>>, vector<1x32xf32>
    %cst_56 = arith.constant dense<0.000000e+00> : vector<16xf32>
    %187 = vector.multi_reduction <add>, %184, %cst_56 [1] : vector<16x32xf32> to vector<16xf32>
    %188 = vector.shape_cast %187 : vector<16xf32> to vector<16x1xf32>
    %cst_57 = arith.constant 3.200000e+01 : f32
    %189 = vector.broadcast %cst_57 : f32 to vector<16x1xf32>
    %190 = arith.divf %188, %189 : vector<16x1xf32>
    %191 = vector.broadcast %190 : vector<16x1xf32> to vector<16x32xf32>
    %192 = arith.subf %184, %191 : vector<16x32xf32>
    %193 = arith.mulf %192, %192 : vector<16x32xf32>
    %cst_58 = arith.constant dense<0.000000e+00> : vector<16xf32>
    %194 = vector.multi_reduction <add>, %193, %cst_58 [1] : vector<16x32xf32> to vector<16xf32>
    %195 = vector.shape_cast %194 : vector<16xf32> to vector<16x1xf32>
    %cst_59 = arith.constant 3.200000e+01 : f32
    %196 = vector.broadcast %cst_59 : f32 to vector<16x1xf32>
    %197 = arith.divf %195, %196 : vector<16x1xf32>
    %198 = vector.broadcast %190 : vector<16x1xf32> to vector<16x32xf32>
    %199 = arith.subf %184, %198 : vector<16x32xf32>
    %cst_60 = arith.constant 9.99999974E-6 : f32
    %200 = vector.broadcast %cst_60 : f32 to vector<16x1xf32>
    %201 = arith.addf %197, %200 : vector<16x1xf32>
    %202 = math.rsqrt %201 : vector<16x1xf32>
    %203 = vector.broadcast %202 : vector<16x1xf32> to vector<16x32xf32>
    %204 = arith.mulf %199, %203 : vector<16x32xf32>
    %205 = vector.broadcast %185 : vector<1x32xf32> to vector<16x32xf32>
    %206 = arith.mulf %204, %205 : vector<16x32xf32>
    %207 = vector.broadcast %186 : vector<1x32xf32> to vector<16x32xf32>
    %208 = arith.addf %206, %207 : vector<16x32xf32>
    %209 = arith.truncf %208 : vector<16x32xf32> to vector<16x32xbf16>
    %c1 = arith.constant 1 : index
    %c0_61 = arith.constant 0 : index
    %c0_62 = arith.constant 0 : index
    %210 = vector.load %arg2[%c1, %c0_61, %c0_62] : memref<2x32x96xbf16, #tpu.memory_space<vmem>>, vector<1x32x96xbf16>
    %211 = vector.shape_cast %210 : vector<1x32x96xbf16> to vector<32x96xbf16>
    %cst_63 = arith.constant dense<0.000000e+00> : vector<16x96xf32>
    %212 = tpu.matmul %209, %211, %cst_63 {dimension_numbers = #tpu.dot_dimension_numbers<[1], [0], [0], [1], [0, 0, 1, 1], [], []>} : vector<16x32xbf16>, vector<32x96xbf16>, vector<16x96xf32> -> vector<16x96xf32>
    %c1_64 = arith.constant 1 : index
    %c0_65 = arith.constant 0 : index
    %213 = vector.load %arg6[%c1_64, %c0_65] : memref<2x96xf32, #tpu.memory_space<vmem>>, vector<1x96xf32>
    %214 = vector.broadcast %213 : vector<1x96xf32> to vector<16x96xf32>
    %215 = arith.addf %212, %214 : vector<16x96xf32>
    %216 = vector.extract_strided_slice %215 {offsets = [0, 0], sizes = [16, 32], strides = [1, 1]} : vector<16x96xf32> to vector<16x32xf32>
    %cst_66 = arith.constant dense<0xFF800000> : vector<16xf32>
    %217 = vector.multi_reduction <maximumf>, %216, %cst_66 [1] : vector<16x32xf32> to vector<16xf32>
    %218 = vector.shape_cast %217 : vector<16xf32> to vector<16x1xf32>
    %219 = vector.broadcast %218 : vector<16x1xf32> to vector<16x32xf32>
    %220 = arith.subf %216, %219 : vector<16x32xf32>
    %221 = math.exp %220 : vector<16x32xf32>
    %cst_67 = arith.constant dense<0.000000e+00> : vector<16xf32>
    %222 = vector.multi_reduction <add>, %221, %cst_67 [1] : vector<16x32xf32> to vector<16xf32>
    %223 = vector.shape_cast %222 : vector<16xf32> to vector<16x1xf32>
    %224 = tpu.reciprocal %223 {approx = true} : vector<16x1xf32> -> vector<16x1xf32>
    %225 = vector.broadcast %224 : vector<16x1xf32> to vector<16x32xf32>
    %226 = arith.mulf %221, %225 : vector<16x32xf32>
    %227 = vector.extract_strided_slice %215 {offsets = [0, 32], sizes = [16, 32], strides = [1, 1]} : vector<16x96xf32> to vector<16x32xf32>
    %228 = vector.extract_strided_slice %215 {offsets = [0, 64], sizes = [16, 32], strides = [1, 1]} : vector<16x96xf32> to vector<16x32xf32>
    %229 = vector.extract_strided_slice %227 {offsets = [0, 0], sizes = [8, 32], strides = [1, 1]} : vector<16x32xf32> to vector<8x32xf32>
    %cst_68 = arith.constant dense<0xFF800000> : vector<32xf32>
    %230 = vector.multi_reduction <maximumf>, %229, %cst_68 [0] : vector<8x32xf32> to vector<32xf32>
    %231 = vector.shape_cast %230 : vector<32xf32> to vector<1x32xf32>
    %232 = vector.broadcast %231 : vector<1x32xf32> to vector<8x32xf32>
    %233 = arith.subf %229, %232 : vector<8x32xf32>
    %234 = math.exp %233 : vector<8x32xf32>
    %cst_69 = arith.constant dense<0.000000e+00> : vector<32xf32>
    %235 = vector.multi_reduction <add>, %234, %cst_69 [0] : vector<8x32xf32> to vector<32xf32>
    %236 = vector.shape_cast %235 : vector<32xf32> to vector<1x32xf32>
    %237 = tpu.reciprocal %236 {approx = true} : vector<1x32xf32> -> vector<1x32xf32>
    %238 = vector.broadcast %237 : vector<1x32xf32> to vector<8x32xf32>
    %239 = arith.mulf %234, %238 : vector<8x32xf32>
    %240 = arith.truncf %239 : vector<8x32xf32> to vector<8x32xbf16>
    %241 = vector.extract_strided_slice %228 {offsets = [0, 0], sizes = [8, 32], strides = [1, 1]} : vector<16x32xf32> to vector<8x32xf32>
    %242 = arith.truncf %241 : vector<8x32xf32> to vector<8x32xbf16>
    %cst_70 = arith.constant dense<0.000000e+00> : vector<32x32xf32>
    %243 = tpu.matmul %240, %242, %cst_70 {dimension_numbers = #tpu.dot_dimension_numbers<[0], [0], [1], [1], [0, 1, 1, 1], [], []>} : vector<8x32xbf16>, vector<8x32xbf16>, vector<32x32xf32> -> vector<32x32xf32>
    %244 = vector.extract_strided_slice %226 {offsets = [0, 0], sizes = [8, 32], strides = [1, 1]} : vector<16x32xf32> to vector<8x32xf32>
    %245 = arith.truncf %244 : vector<8x32xf32> to vector<8x32xbf16>
    %246 = arith.truncf %243 : vector<32x32xf32> to vector<32x32xbf16>
    %cst_71 = arith.constant dense<0.000000e+00> : vector<8x32xf32>
    %247 = tpu.matmul %245, %246, %cst_71 {dimension_numbers = #tpu.dot_dimension_numbers<[1], [0], [0], [1], [0, 0, 1, 1], [], []>} : vector<8x32xbf16>, vector<32x32xbf16>, vector<8x32xf32> -> vector<8x32xf32>
    %248 = vector.extract_strided_slice %227 {offsets = [8, 0], sizes = [8, 32], strides = [1, 1]} : vector<16x32xf32> to vector<8x32xf32>
    %cst_72 = arith.constant dense<0xFF800000> : vector<32xf32>
    %249 = vector.multi_reduction <maximumf>, %248, %cst_72 [0] : vector<8x32xf32> to vector<32xf32>
    %250 = vector.shape_cast %249 : vector<32xf32> to vector<1x32xf32>
    %251 = vector.broadcast %250 : vector<1x32xf32> to vector<8x32xf32>
    %252 = arith.subf %248, %251 : vector<8x32xf32>
    %253 = math.exp %252 : vector<8x32xf32>
    %cst_73 = arith.constant dense<0.000000e+00> : vector<32xf32>
    %254 = vector.multi_reduction <add>, %253, %cst_73 [0] : vector<8x32xf32> to vector<32xf32>
    %255 = vector.shape_cast %254 : vector<32xf32> to vector<1x32xf32>
    %256 = tpu.reciprocal %255 {approx = true} : vector<1x32xf32> -> vector<1x32xf32>
    %257 = vector.broadcast %256 : vector<1x32xf32> to vector<8x32xf32>
    %258 = arith.mulf %253, %257 : vector<8x32xf32>
    %259 = arith.truncf %258 : vector<8x32xf32> to vector<8x32xbf16>
    %260 = vector.extract_strided_slice %228 {offsets = [8, 0], sizes = [8, 32], strides = [1, 1]} : vector<16x32xf32> to vector<8x32xf32>
    %261 = arith.truncf %260 : vector<8x32xf32> to vector<8x32xbf16>
    %cst_74 = arith.constant dense<0.000000e+00> : vector<32x32xf32>
    %262 = tpu.matmul %259, %261, %cst_74 {dimension_numbers = #tpu.dot_dimension_numbers<[0], [0], [1], [1], [0, 1, 1, 1], [], []>} : vector<8x32xbf16>, vector<8x32xbf16>, vector<32x32xf32> -> vector<32x32xf32>
    %263 = vector.extract_strided_slice %226 {offsets = [8, 0], sizes = [8, 32], strides = [1, 1]} : vector<16x32xf32> to vector<8x32xf32>
    %264 = arith.truncf %263 : vector<8x32xf32> to vector<8x32xbf16>
    %265 = arith.truncf %262 : vector<32x32xf32> to vector<32x32xbf16>
    %cst_75 = arith.constant dense<0.000000e+00> : vector<8x32xf32>
    %266 = tpu.matmul %264, %265, %cst_75 {dimension_numbers = #tpu.dot_dimension_numbers<[1], [0], [0], [1], [0, 0, 1, 1], [], []>} : vector<8x32xbf16>, vector<32x32xbf16>, vector<8x32xf32> -> vector<8x32xf32>
    %267 = tpu.concatenate %247, %266 in 0 : vector<8x32xf32>, vector<8x32xf32> -> vector<16x32xf32>
    %268 = arith.truncf %267 : vector<16x32xf32> to vector<16x32xbf16>
    %c1_76 = arith.constant 1 : index
    %c0_77 = arith.constant 0 : index
    %c0_78 = arith.constant 0 : index
    %269 = vector.load %arg3[%c1_76, %c0_77, %c0_78] : memref<2x32x32xbf16, #tpu.memory_space<vmem>>, vector<1x32x32xbf16>
    %270 = vector.shape_cast %269 : vector<1x32x32xbf16> to vector<32x32xbf16>
    %cst_79 = arith.constant dense<0.000000e+00> : vector<16x32xf32>
    %271 = tpu.matmul %268, %270, %cst_79 {dimension_numbers = #tpu.dot_dimension_numbers<[1], [0], [0], [1], [0, 0, 1, 1], [], []>} : vector<16x32xbf16>, vector<32x32xbf16>, vector<16x32xf32> -> vector<16x32xf32>
    %c1_80 = arith.constant 1 : index
    %c0_81 = arith.constant 0 : index
    %272 = vector.load %arg7[%c1_80, %c0_81] : memref<16x32xf32, #tpu.memory_space<vmem>>, vector<1x32xf32>
    %273 = vector.broadcast %272 : vector<1x32xf32> to vector<16x32xf32>
    %274 = arith.addf %271, %273 : vector<16x32xf32>
    %275 = arith.addf %208, %274 : vector<16x32xf32>
    %c5 = arith.constant 5 : index
    %c0_82 = arith.constant 0 : index
    %276 = vector.load %arg7[%c5, %c0_82] : memref<16x32xf32, #tpu.memory_space<vmem>>, vector<1x32xf32>
    %c6 = arith.constant 6 : index
    %c0_83 = arith.constant 0 : index
    %277 = vector.load %arg7[%c6, %c0_83] : memref<16x32xf32, #tpu.memory_space<vmem>>, vector<1x32xf32>
    %cst_84 = arith.constant dense<0.000000e+00> : vector<16xf32>
    %278 = vector.multi_reduction <add>, %275, %cst_84 [1] : vector<16x32xf32> to vector<16xf32>
    %279 = vector.shape_cast %278 : vector<16xf32> to vector<16x1xf32>
    %cst_85 = arith.constant 3.200000e+01 : f32
    %280 = vector.broadcast %cst_85 : f32 to vector<16x1xf32>
    %281 = arith.divf %279, %280 : vector<16x1xf32>
    %282 = vector.broadcast %281 : vector<16x1xf32> to vector<16x32xf32>
    %283 = arith.subf %275, %282 : vector<16x32xf32>
    %284 = arith.mulf %283, %283 : vector<16x32xf32>
    %cst_86 = arith.constant dense<0.000000e+00> : vector<16xf32>
    %285 = vector.multi_reduction <add>, %284, %cst_86 [1] : vector<16x32xf32> to vector<16xf32>
    %286 = vector.shape_cast %285 : vector<16xf32> to vector<16x1xf32>
    %cst_87 = arith.constant 3.200000e+01 : f32
    %287 = vector.broadcast %cst_87 : f32 to vector<16x1xf32>
    %288 = arith.divf %286, %287 : vector<16x1xf32>
    %289 = vector.broadcast %281 : vector<16x1xf32> to vector<16x32xf32>
    %290 = arith.subf %275, %289 : vector<16x32xf32>
    %cst_88 = arith.constant 9.99999974E-6 : f32
    %291 = vector.broadcast %cst_88 : f32 to vector<16x1xf32>
    %292 = arith.addf %288, %291 : vector<16x1xf32>
    %293 = math.rsqrt %292 : vector<16x1xf32>
    %294 = vector.broadcast %293 : vector<16x1xf32> to vector<16x32xf32>
    %295 = arith.mulf %290, %294 : vector<16x32xf32>
    %296 = vector.broadcast %276 : vector<1x32xf32> to vector<16x32xf32>
    %297 = arith.mulf %295, %296 : vector<16x32xf32>
    %298 = vector.broadcast %277 : vector<1x32xf32> to vector<16x32xf32>
    %299 = arith.addf %297, %298 : vector<16x32xf32>
    %300 = arith.truncf %299 : vector<16x32xf32> to vector<16x32xbf16>
    %c0_89 = arith.constant 0 : index
    %c0_90 = arith.constant 0 : index
    %301 = vector.load %arg4[%c0_89, %c0_90] : memref<32x64xbf16, #tpu.memory_space<vmem>>, vector<32x64xbf16>
    %cst_91 = arith.constant dense<0.000000e+00> : vector<16x64xf32>
    %302 = tpu.matmul %300, %301, %cst_91 {dimension_numbers = #tpu.dot_dimension_numbers<[1], [0], [0], [1], [0, 0, 1, 1], [], []>} : vector<16x32xbf16>, vector<32x64xbf16>, vector<16x64xf32> -> vector<16x64xf32>
    %c0_92 = arith.constant 0 : index
    %c0_93 = arith.constant 0 : index
    %303 = vector.load %arg8[%c0_92, %c0_93] : memref<1x64xf32, #tpu.memory_space<vmem>>, vector<1x64xf32>
    %304 = vector.broadcast %303 : vector<1x64xf32> to vector<16x64xf32>
    %305 = arith.addf %302, %304 : vector<16x64xf32>
    %cst_94 = arith.constant 0.000000e+00 : f32
    %306 = vector.broadcast %cst_94 : f32 to vector<16x64xf32>
    %307 = arith.maximumf %305, %306 : vector<16x64xf32>
    %308 = arith.truncf %307 : vector<16x64xf32> to vector<16x64xbf16>
    %c0_95 = arith.constant 0 : index
    %c0_96 = arith.constant 0 : index
    %309 = vector.load %arg5[%c0_95, %c0_96] : memref<64x32xbf16, #tpu.memory_space<vmem>>, vector<64x32xbf16>
    %cst_97 = arith.constant dense<0.000000e+00> : vector<16x32xf32>
    %310 = tpu.matmul %308, %309, %cst_97 {dimension_numbers = #tpu.dot_dimension_numbers<[1], [0], [0], [1], [0, 0, 1, 1], [], []>} : vector<16x64xbf16>, vector<64x32xbf16>, vector<16x32xf32> -> vector<16x32xf32>
    %c2 = arith.constant 2 : index
    %c0_98 = arith.constant 0 : index
    %311 = vector.load %arg7[%c2, %c0_98] : memref<16x32xf32, #tpu.memory_space<vmem>>, vector<1x32xf32>
    %312 = vector.broadcast %311 : vector<1x32xf32> to vector<16x32xf32>
    %313 = arith.addf %310, %312 : vector<16x32xf32>
    %314 = arith.addf %299, %313 : vector<16x32xf32>
    %c7 = arith.constant 7 : index
    %c0_99 = arith.constant 0 : index
    %315 = vector.load %arg7[%c7, %c0_99] : memref<16x32xf32, #tpu.memory_space<vmem>>, vector<1x32xf32>
    %c8 = arith.constant 8 : index
    %c0_100 = arith.constant 0 : index
    %316 = vector.load %arg7[%c8, %c0_100] : memref<16x32xf32, #tpu.memory_space<vmem>>, vector<1x32xf32>
    %cst_101 = arith.constant dense<0.000000e+00> : vector<16xf32>
    %317 = vector.multi_reduction <add>, %314, %cst_101 [1] : vector<16x32xf32> to vector<16xf32>
    %318 = vector.shape_cast %317 : vector<16xf32> to vector<16x1xf32>
    %cst_102 = arith.constant 3.200000e+01 : f32
    %319 = vector.broadcast %cst_102 : f32 to vector<16x1xf32>
    %320 = arith.divf %318, %319 : vector<16x1xf32>
    %321 = vector.broadcast %320 : vector<16x1xf32> to vector<16x32xf32>
    %322 = arith.subf %314, %321 : vector<16x32xf32>
    %323 = arith.mulf %322, %322 : vector<16x32xf32>
    %cst_103 = arith.constant dense<0.000000e+00> : vector<16xf32>
    %324 = vector.multi_reduction <add>, %323, %cst_103 [1] : vector<16x32xf32> to vector<16xf32>
    %325 = vector.shape_cast %324 : vector<16xf32> to vector<16x1xf32>
    %cst_104 = arith.constant 3.200000e+01 : f32
    %326 = vector.broadcast %cst_104 : f32 to vector<16x1xf32>
    %327 = arith.divf %325, %326 : vector<16x1xf32>
    %328 = vector.broadcast %320 : vector<16x1xf32> to vector<16x32xf32>
    %329 = arith.subf %314, %328 : vector<16x32xf32>
    %cst_105 = arith.constant 9.99999974E-6 : f32
    %330 = vector.broadcast %cst_105 : f32 to vector<16x1xf32>
    %331 = arith.addf %327, %330 : vector<16x1xf32>
    %332 = math.rsqrt %331 : vector<16x1xf32>
    %333 = vector.broadcast %332 : vector<16x1xf32> to vector<16x32xf32>
    %334 = arith.mulf %329, %333 : vector<16x32xf32>
    %335 = vector.broadcast %315 : vector<1x32xf32> to vector<16x32xf32>
    %336 = arith.mulf %334, %335 : vector<16x32xf32>
    %337 = vector.broadcast %316 : vector<1x32xf32> to vector<16x32xf32>
    %338 = arith.addf %336, %337 : vector<16x32xf32>
    %c0_106 = arith.constant 0 : index
    %c0_107 = arith.constant 0 : index
    %339 = vector.load %arg9[%c0_106, %c0_107] : memref<16x32xf32, #tpu.memory_space<vmem>>, vector<16x32xf32>
    tpu.vector_store %arg9[%c0_106, %c0_107], %338 {strides = array<i32>} : memref<16x32xf32, #tpu.memory_space<vmem>>, vector<16x32xf32>,
    return
  }
  func.func @transform_0(%arg0: i32) -> (i32, i32) {
    %c0_i32 = arith.constant 0 : i32
    %c0_i32_0 = arith.constant 0 : i32
    return %arg0, %c0_i32 : i32, i32
  }
  func.func @transform_1(%arg0: i32) -> (i32, i32, i32) {
    %c0_i32 = arith.constant 0 : i32
    %c0_i32_0 = arith.constant 0 : i32
    %c0_i32_1 = arith.constant 0 : i32
    %c0_i32_2 = arith.constant 0 : i32
    return %c0_i32, %c0_i32_0, %c0_i32_1 : i32, i32, i32
  }
  func.func @transform_2(%arg0: i32) -> (i32, i32, i32) {
    %c0_i32 = arith.constant 0 : i32
    %c0_i32_0 = arith.constant 0 : i32
    %c0_i32_1 = arith.constant 0 : i32
    %c0_i32_2 = arith.constant 0 : i32
    return %c0_i32, %c0_i32_0, %c0_i32_1 : i32, i32, i32
  }
  func.func @transform_3(%arg0: i32) -> (i32, i32) {
    %c0_i32 = arith.constant 0 : i32
    %c0_i32_0 = arith.constant 0 : i32
    %c0_i32_1 = arith.constant 0 : i32
    return %c0_i32, %c0_i32_0 : i32, i32
  }
  func.func @transform_4(%arg0: i32) -> (i32, i32) {
    %c0_i32 = arith.constant 0 : i32
    %c0_i32_0 = arith.constant 0 : i32
    %c0_i32_1 = arith.constant 0 : i32
    return %c0_i32, %c0_i32_0 : i32, i32
  }
  func.func @transform_5(%arg0: i32) -> (i32, i32) {
    %c0_i32 = arith.constant 0 : i32
    %c0_i32_0 = arith.constant 0 : i32
    %c0_i32_1 = arith.constant 0 : i32
    return %c0_i32, %c0_i32_0 : i32, i32
  }
  func.func @transform_6(%arg0: i32) -> (i32, i32) {
    %c0_i32 = arith.constant 0 : i32
    %c0_i32_0 = arith.constant 0 : i32
    %c0_i32_1 = arith.constant 0 : i32
    return %c0_i32, %c0_i32_0 : i32, i32
  }
  func.func @transform_7(%arg0: i32) -> (i32, i32) {
    %c0_i32 = arith.constant 0 : i32
    %c0_i32_0 = arith.constant 0 : i32
    %c0_i32_1 = arith.constant 0 : i32
    return %c0_i32, %c0_i32_0 : i32, i32
  }
  func.func @transform_8(%arg0: i32) -> (i32, i32) {
    %c0_i32 = arith.constant 0 : i32
    %c0_i32_0 = arith.constant 0 : i32
    return %arg0, %c0_i32 : i32, i32
  }
}

module attributes {stable_mosaic.version = 11 : i64} {
  func.func @transformer_block_kernel(%arg0: i32, %arg1: memref<16x32xf32, #tpu.memory_space<vmem>>, %arg2: memref<2x32x96xbf16, #tpu.memory_space<vmem>>, %arg3: memref<2x32x32xbf16, #tpu.memory_space<vmem>>, %arg4: memref<32x64xbf16, #tpu.memory_space<vmem>>, %arg5: memref<64x32xbf16, #tpu.memory_space<vmem>>, %arg6: memref<2x96xf32, #tpu.memory_space<vmem>>, %arg7: memref<16x32xf32, #tpu.memory_space<vmem>>, %arg8: memref<1x64xf32, #tpu.memory_space<vmem>>, %arg9: memref<16x32xf32, #tpu.memory_space<vmem>>) attributes {dimension_semantics = [#tpu.dimension_semantics<parallel>], iteration_bounds = array<i64: 1>, scalar_prefetch = 0 : i64, scratch_operands = 0 : i64, tpu.core_type = #tpu.core_type<tc>, window_params = [{transform_indices = @transform_0, window_bounds = array<i64: 16, 32>}, {pipeline_mode = #tpu.pipeline_mode<synchronous>, transform_indices = @transform_1, window_bounds = array<i64: 2, 32, 96>}, {pipeline_mode = #tpu.pipeline_mode<synchronous>, transform_indices = @transform_2, window_bounds = array<i64: 2, 32, 32>}, {pipeline_mode = #tpu.pipeline_mode<synchronous>, transform_indices = @transform_3, window_bounds = array<i64: 32, 64>}, {pipeline_mode = #tpu.pipeline_mode<synchronous>, transform_indices = @transform_4, window_bounds = array<i64: 64, 32>}, {pipeline_mode = #tpu.pipeline_mode<synchronous>, transform_indices = @transform_5, window_bounds = array<i64: 2, 96>}, {pipeline_mode = #tpu.pipeline_mode<synchronous>, transform_indices = @transform_6, window_bounds = array<i64: 16, 32>}, {pipeline_mode = #tpu.pipeline_mode<synchronous>, transform_indices = @transform_7, window_bounds = array<i64: 1, 64>}, {transform_indices = @transform_8, window_bounds = array<i64: 16, 32>}]} {
    %c0 = arith.constant 0 : index
    %c0_0 = arith.constant 0 : index
    %0 = vector.load %arg1[%c0, %c0_0] : memref<16x32xf32, #tpu.memory_space<vmem>>, vector<16x32xf32>
    %1 = arith.truncf %0 : vector<16x32xf32> to vector<16x32xbf16>
    %c0_1 = arith.constant 0 : index
    %c0_2 = arith.constant 0 : index
    %c0_3 = arith.constant 0 : index
    %2 = vector.load %arg2[%c0_1, %c0_2, %c0_3] : memref<2x32x96xbf16, #tpu.memory_space<vmem>>, vector<1x32x96xbf16>
    %3 = vector.shape_cast %2 : vector<1x32x96xbf16> to vector<32x96xbf16>
    %cst = arith.constant dense<0.000000e+00> : vector<16x96xf32>
    %4 = tpu.matmul %1, %3, %cst {dimension_numbers = #tpu.dot_dimension_numbers<[1], [0], [0], [1], [0, 0, 1, 1], [], []>} : vector<16x32xbf16>, vector<32x96xbf16>, vector<16x96xf32> -> vector<16x96xf32>
    %c0_4 = arith.constant 0 : index
    %c0_5 = arith.constant 0 : index
    %5 = vector.load %arg6[%c0_4, %c0_5] : memref<2x96xf32, #tpu.memory_space<vmem>>, vector<1x96xf32>
    %6 = vector.broadcast %5 : vector<1x96xf32> to vector<16x96xf32>
    %7 = arith.addf %4, %6 : vector<16x96xf32>
    %8 = vector.extract_strided_slice %7 {offsets = [0, 0], sizes = [16, 32], strides = [1, 1]} : vector<16x96xf32> to vector<16x32xf32>
    %cst_6 = arith.constant 0.353553385 : f32
    %9 = vector.broadcast %cst_6 : f32 to vector<16x32xf32>
    %10 = arith.mulf %8, %9 : vector<16x32xf32>
    %11 = arith.truncf %10 : vector<16x32xf32> to vector<16x32xbf16>
    %12 = vector.extract_strided_slice %7 {offsets = [0, 32], sizes = [16, 32], strides = [1, 1]} : vector<16x96xf32> to vector<16x32xf32>
    %13 = arith.truncf %12 : vector<16x32xf32> to vector<16x32xbf16>
    %14 = vector.extract_strided_slice %7 {offsets = [0, 64], sizes = [16, 32], strides = [1, 1]} : vector<16x96xf32> to vector<16x32xf32>
    %15 = arith.truncf %14 : vector<16x32xf32> to vector<16x32xbf16>
    %c0_7 = arith.constant 0 : index
    %c0_8 = arith.constant 0 : index
    %c0_9 = arith.constant 0 : index
    %16 = vector.load %arg3[%c0_7, %c0_8, %c0_9] : memref<2x32x32xbf16, #tpu.memory_space<vmem>>, vector<1x32x32xbf16>
    %17 = vector.shape_cast %16 : vector<1x32x32xbf16> to vector<32x32xbf16>
    %cst_10 = arith.constant 0.000000e+00 : f32
    %18 = vector.broadcast %cst_10 : f32 to vector<8x32xf32>
    %19 = vector.extract_strided_slice %11 {offsets = [0, 0], sizes = [8, 8], strides = [1, 1]} : vector<16x32xbf16> to vector<8x8xbf16>
    %20 = vector.extract_strided_slice %13 {offsets = [0, 0], sizes = [8, 8], strides = [1, 1]} : vector<16x32xbf16> to vector<8x8xbf16>
    %cst_11 = arith.constant dense<0.000000e+00> : vector<8x8xf32>
    %21 = tpu.matmul %19, %20, %cst_11 {dimension_numbers = #tpu.dot_dimension_numbers<[1], [1], [0], [0], [0, 0, 1, 0], [], []>} : vector<8x8xbf16>, vector<8x8xbf16>, vector<8x8xf32> -> vector<8x8xf32>
    %cst_12 = arith.constant dense<0xFF800000> : vector<8xf32>
    %22 = vector.multi_reduction <maximumf>, %21, %cst_12 [1] : vector<8x8xf32> to vector<8xf32>
    %23 = vector.shape_cast %22 : vector<8xf32> to vector<8x1xf32>
    %24 = vector.broadcast %23 : vector<8x1xf32> to vector<8x8xf32>
    %25 = arith.subf %21, %24 : vector<8x8xf32>
    %26 = math.exp %25 : vector<8x8xf32>
    %cst_13 = arith.constant dense<0.000000e+00> : vector<8xf32>
    %27 = vector.multi_reduction <add>, %26, %cst_13 [1] : vector<8x8xf32> to vector<8xf32>
    %28 = vector.shape_cast %27 : vector<8xf32> to vector<8x1xf32>
    %29 = tpu.reciprocal %28 {approx = true} : vector<8x1xf32> -> vector<8x1xf32>
    %30 = vector.broadcast %29 : vector<8x1xf32> to vector<8x8xf32>
    %31 = arith.mulf %26, %30 : vector<8x8xf32>
    %32 = arith.truncf %31 : vector<8x8xf32> to vector<8x8xbf16>
    %33 = vector.extract_strided_slice %15 {offsets = [0, 0], sizes = [8, 8], strides = [1, 1]} : vector<16x32xbf16> to vector<8x8xbf16>
    %cst_14 = arith.constant dense<0.000000e+00> : vector<8x8xf32>
    %34 = tpu.matmul %32, %33, %cst_14 {dimension_numbers = #tpu.dot_dimension_numbers<[1], [0], [0], [1], [0, 0, 1, 1], [], []>} : vector<8x8xbf16>, vector<8x8xbf16>, vector<8x8xf32> -> vector<8x8xf32>
    %35 = arith.truncf %34 : vector<8x8xf32> to vector<8x8xbf16>
    %36 = vector.extract_strided_slice %17 {offsets = [0, 0], sizes = [8, 32], strides = [1, 1]} : vector<32x32xbf16> to vector<8x32xbf16>
    %cst_15 = arith.constant dense<0.000000e+00> : vector<8x32xf32>
    %37 = tpu.matmul %35, %36, %cst_15 {dimension_numbers = #tpu.dot_dimension_numbers<[1], [0], [0], [1], [0, 0, 1, 1], [], []>} : vector<8x8xbf16>, vector<8x32xbf16>, vector<8x32xf32> -> vector<8x32xf32>
    %38 = arith.addf %18, %37 : vector<8x32xf32>
    %39 = vector.extract_strided_slice %11 {offsets = [0, 8], sizes = [8, 8], strides = [1, 1]} : vector<16x32xbf16> to vector<8x8xbf16>
    %40 = vector.extract_strided_slice %13 {offsets = [0, 8], sizes = [8, 8], strides = [1, 1]} : vector<16x32xbf16> to vector<8x8xbf16>
    %cst_16 = arith.constant dense<0.000000e+00> : vector<8x8xf32>
    %41 = tpu.matmul %39, %40, %cst_16 {dimension_numbers = #tpu.dot_dimension_numbers<[1], [1], [0], [0], [0, 0, 1, 0], [], []>} : vector<8x8xbf16>, vector<8x8xbf16>, vector<8x8xf32> -> vector<8x8xf32>
    %cst_17 = arith.constant dense<0xFF800000> : vector<8xf32>
    %42 = vector.multi_reduction <maximumf>, %41, %cst_17 [1] : vector<8x8xf32> to vector<8xf32>
    %43 = vector.shape_cast %42 : vector<8xf32> to vector<8x1xf32>
    %44 = vector.broadcast %43 : vector<8x1xf32> to vector<8x8xf32>
    %45 = arith.subf %41, %44 : vector<8x8xf32>
    %46 = math.exp %45 : vector<8x8xf32>
    %cst_18 = arith.constant dense<0.000000e+00> : vector<8xf32>
    %47 = vector.multi_reduction <add>, %46, %cst_18 [1] : vector<8x8xf32> to vector<8xf32>
    %48 = vector.shape_cast %47 : vector<8xf32> to vector<8x1xf32>
    %49 = tpu.reciprocal %48 {approx = true} : vector<8x1xf32> -> vector<8x1xf32>
    %50 = vector.broadcast %49 : vector<8x1xf32> to vector<8x8xf32>
    %51 = arith.mulf %46, %50 : vector<8x8xf32>
    %52 = arith.truncf %51 : vector<8x8xf32> to vector<8x8xbf16>
    %53 = vector.extract_strided_slice %15 {offsets = [0, 8], sizes = [8, 8], strides = [1, 1]} : vector<16x32xbf16> to vector<8x8xbf16>
    %cst_19 = arith.constant dense<0.000000e+00> : vector<8x8xf32>
    %54 = tpu.matmul %52, %53, %cst_19 {dimension_numbers = #tpu.dot_dimension_numbers<[1], [0], [0], [1], [0, 0, 1, 1], [], []>} : vector<8x8xbf16>, vector<8x8xbf16>, vector<8x8xf32> -> vector<8x8xf32>
    %55 = arith.truncf %54 : vector<8x8xf32> to vector<8x8xbf16>
    %56 = vector.extract_strided_slice %17 {offsets = [8, 0], sizes = [8, 32], strides = [1, 1]} : vector<32x32xbf16> to vector<8x32xbf16>
    %cst_20 = arith.constant dense<0.000000e+00> : vector<8x32xf32>
    %57 = tpu.matmul %55, %56, %cst_20 {dimension_numbers = #tpu.dot_dimension_numbers<[1], [0], [0], [1], [0, 0, 1, 1], [], []>} : vector<8x8xbf16>, vector<8x32xbf16>, vector<8x32xf32> -> vector<8x32xf32>
    %58 = arith.addf %38, %57 : vector<8x32xf32>
    %59 = vector.extract_strided_slice %11 {offsets = [0, 16], sizes = [8, 8], strides = [1, 1]} : vector<16x32xbf16> to vector<8x8xbf16>
    %60 = vector.extract_strided_slice %13 {offsets = [0, 16], sizes = [8, 8], strides = [1, 1]} : vector<16x32xbf16> to vector<8x8xbf16>
    %cst_21 = arith.constant dense<0.000000e+00> : vector<8x8xf32>
    %61 = tpu.matmul %59, %60, %cst_21 {dimension_numbers = #tpu.dot_dimension_numbers<[1], [1], [0], [0], [0, 0, 1, 0], [], []>} : vector<8x8xbf16>, vector<8x8xbf16>, vector<8x8xf32> -> vector<8x8xf32>
    %cst_22 = arith.constant dense<0xFF800000> : vector<8xf32>
    %62 = vector.multi_reduction <maximumf>, %61, %cst_22 [1] : vector<8x8xf32> to vector<8xf32>
    %63 = vector.shape_cast %62 : vector<8xf32> to vector<8x1xf32>
    %64 = vector.broadcast %63 : vector<8x1xf32> to vector<8x8xf32>
    %65 = arith.subf %61, %64 : vector<8x8xf32>
    %66 = math.exp %65 : vector<8x8xf32>
    %cst_23 = arith.constant dense<0.000000e+00> : vector<8xf32>
    %67 = vector.multi_reduction <add>, %66, %cst_23 [1] : vector<8x8xf32> to vector<8xf32>
    %68 = vector.shape_cast %67 : vector<8xf32> to vector<8x1xf32>
    %69 = tpu.reciprocal %68 {approx = true} : vector<8x1xf32> -> vector<8x1xf32>
    %70 = vector.broadcast %69 : vector<8x1xf32> to vector<8x8xf32>
    %71 = arith.mulf %66, %70 : vector<8x8xf32>
    %72 = arith.truncf %71 : vector<8x8xf32> to vector<8x8xbf16>
    %73 = vector.extract_strided_slice %15 {offsets = [0, 16], sizes = [8, 8], strides = [1, 1]} : vector<16x32xbf16> to vector<8x8xbf16>
    %cst_24 = arith.constant dense<0.000000e+00> : vector<8x8xf32>
    %74 = tpu.matmul %72, %73, %cst_24 {dimension_numbers = #tpu.dot_dimension_numbers<[1], [0], [0], [1], [0, 0, 1, 1], [], []>} : vector<8x8xbf16>, vector<8x8xbf16>, vector<8x8xf32> -> vector<8x8xf32>
    %75 = arith.truncf %74 : vector<8x8xf32> to vector<8x8xbf16>
    %76 = vector.extract_strided_slice %17 {offsets = [16, 0], sizes = [8, 32], strides = [1, 1]} : vector<32x32xbf16> to vector<8x32xbf16>
    %cst_25 = arith.constant dense<0.000000e+00> : vector<8x32xf32>
    %77 = tpu.matmul %75, %76, %cst_25 {dimension_numbers = #tpu.dot_dimension_numbers<[1], [0], [0], [1], [0, 0, 1, 1], [], []>} : vector<8x8xbf16>, vector<8x32xbf16>, vector<8x32xf32> -> vector<8x32xf32>
    %78 = arith.addf %58, %77 : vector<8x32xf32>
    %79 = vector.extract_strided_slice %11 {offsets = [0, 24], sizes = [8, 8], strides = [1, 1]} : vector<16x32xbf16> to vector<8x8xbf16>
    %80 = vector.extract_strided_slice %13 {offsets = [0, 24], sizes = [8, 8], strides = [1, 1]} : vector<16x32xbf16> to vector<8x8xbf16>
    %cst_26 = arith.constant dense<0.000000e+00> : vector<8x8xf32>
    %81 = tpu.matmul %79, %80, %cst_26 {dimension_numbers = #tpu.dot_dimension_numbers<[1], [1], [0], [0], [0, 0, 1, 0], [], []>} : vector<8x8xbf16>, vector<8x8xbf16>, vector<8x8xf32> -> vector<8x8xf32>
    %cst_27 = arith.constant dense<0xFF800000> : vector<8xf32>
    %82 = vector.multi_reduction <maximumf>, %81, %cst_27 [1] : vector<8x8xf32> to vector<8xf32>
    %83 = vector.shape_cast %82 : vector<8xf32> to vector<8x1xf32>
    %84 = vector.broadcast %83 : vector<8x1xf32> to vector<8x8xf32>
    %85 = arith.subf %81, %84 : vector<8x8xf32>
    %86 = math.exp %85 : vector<8x8xf32>
    %cst_28 = arith.constant dense<0.000000e+00> : vector<8xf32>
    %87 = vector.multi_reduction <add>, %86, %cst_28 [1] : vector<8x8xf32> to vector<8xf32>
    %88 = vector.shape_cast %87 : vector<8xf32> to vector<8x1xf32>
    %89 = tpu.reciprocal %88 {approx = true} : vector<8x1xf32> -> vector<8x1xf32>
    %90 = vector.broadcast %89 : vector<8x1xf32> to vector<8x8xf32>
    %91 = arith.mulf %86, %90 : vector<8x8xf32>
    %92 = arith.truncf %91 : vector<8x8xf32> to vector<8x8xbf16>
    %93 = vector.extract_strided_slice %15 {offsets = [0, 24], sizes = [8, 8], strides = [1, 1]} : vector<16x32xbf16> to vector<8x8xbf16>
    %cst_29 = arith.constant dense<0.000000e+00> : vector<8x8xf32>
    %94 = tpu.matmul %92, %93, %cst_29 {dimension_numbers = #tpu.dot_dimension_numbers<[1], [0], [0], [1], [0, 0, 1, 1], [], []>} : vector<8x8xbf16>, vector<8x8xbf16>, vector<8x8xf32> -> vector<8x8xf32>
    %95 = arith.truncf %94 : vector<8x8xf32> to vector<8x8xbf16>
    %96 = vector.extract_strided_slice %17 {offsets = [24, 0], sizes = [8, 32], strides = [1, 1]} : vector<32x32xbf16> to vector<8x32xbf16>
    %cst_30 = arith.constant dense<0.000000e+00> : vector<8x32xf32>
    %97 = tpu.matmul %95, %96, %cst_30 {dimension_numbers = #tpu.dot_dimension_numbers<[1], [0], [0], [1], [0, 0, 1, 1], [], []>} : vector<8x8xbf16>, vector<8x32xbf16>, vector<8x32xf32> -> vector<8x32xf32>
    %98 = arith.addf %78, %97 : vector<8x32xf32>
    %cst_31 = arith.constant 0.000000e+00 : f32
    %99 = vector.broadcast %cst_31 : f32 to vector<8x32xf32>
    %100 = vector.extract_strided_slice %11 {offsets = [8, 0], sizes = [8, 8], strides = [1, 1]} : vector<16x32xbf16> to vector<8x8xbf16>
    %101 = vector.extract_strided_slice %13 {offsets = [8, 0], sizes = [8, 8], strides = [1, 1]} : vector<16x32xbf16> to vector<8x8xbf16>
    %cst_32 = arith.constant dense<0.000000e+00> : vector<8x8xf32>
    %102 = tpu.matmul %100, %101, %cst_32 {dimension_numbers = #tpu.dot_dimension_numbers<[1], [1], [0], [0], [0, 0, 1, 0], [], []>} : vector<8x8xbf16>, vector<8x8xbf16>, vector<8x8xf32> -> vector<8x8xf32>
    %cst_33 = arith.constant dense<0xFF800000> : vector<8xf32>
    %103 = vector.multi_reduction <maximumf>, %102, %cst_33 [1] : vector<8x8xf32> to vector<8xf32>
    %104 = vector.shape_cast %103 : vector<8xf32> to vector<8x1xf32>
    %105 = vector.broadcast %104 : vector<8x1xf32> to vector<8x8xf32>
    %106 = arith.subf %102, %105 : vector<8x8xf32>
    %107 = math.exp %106 : vector<8x8xf32>
    %cst_34 = arith.constant dense<0.000000e+00> : vector<8xf32>
    %108 = vector.multi_reduction <add>, %107, %cst_34 [1] : vector<8x8xf32> to vector<8xf32>
    %109 = vector.shape_cast %108 : vector<8xf32> to vector<8x1xf32>
    %110 = tpu.reciprocal %109 {approx = true} : vector<8x1xf32> -> vector<8x1xf32>
    %111 = vector.broadcast %110 : vector<8x1xf32> to vector<8x8xf32>
    %112 = arith.mulf %107, %111 : vector<8x8xf32>
    %113 = arith.truncf %112 : vector<8x8xf32> to vector<8x8xbf16>
    %114 = vector.extract_strided_slice %15 {offsets = [8, 0], sizes = [8, 8], strides = [1, 1]} : vector<16x32xbf16> to vector<8x8xbf16>
    %cst_35 = arith.constant dense<0.000000e+00> : vector<8x8xf32>
    %115 = tpu.matmul %113, %114, %cst_35 {dimension_numbers = #tpu.dot_dimension_numbers<[1], [0], [0], [1], [0, 0, 1, 1], [], []>} : vector<8x8xbf16>, vector<8x8xbf16>, vector<8x8xf32> -> vector<8x8xf32>
    %116 = arith.truncf %115 : vector<8x8xf32> to vector<8x8xbf16>
    %117 = vector.extract_strided_slice %17 {offsets = [0, 0], sizes = [8, 32], strides = [1, 1]} : vector<32x32xbf16> to vector<8x32xbf16>
    %cst_36 = arith.constant dense<0.000000e+00> : vector<8x32xf32>
    %118 = tpu.matmul %116, %117, %cst_36 {dimension_numbers = #tpu.dot_dimension_numbers<[1], [0], [0], [1], [0, 0, 1, 1], [], []>} : vector<8x8xbf16>, vector<8x32xbf16>, vector<8x32xf32> -> vector<8x32xf32>
    %119 = arith.addf %99, %118 : vector<8x32xf32>
    %120 = vector.extract_strided_slice %11 {offsets = [8, 8], sizes = [8, 8], strides = [1, 1]} : vector<16x32xbf16> to vector<8x8xbf16>
    %121 = vector.extract_strided_slice %13 {offsets = [8, 8], sizes = [8, 8], strides = [1, 1]} : vector<16x32xbf16> to vector<8x8xbf16>
    %cst_37 = arith.constant dense<0.000000e+00> : vector<8x8xf32>
    %122 = tpu.matmul %120, %121, %cst_37 {dimension_numbers = #tpu.dot_dimension_numbers<[1], [1], [0], [0], [0, 0, 1, 0], [], []>} : vector<8x8xbf16>, vector<8x8xbf16>, vector<8x8xf32> -> vector<8x8xf32>
    %cst_38 = arith.constant dense<0xFF800000> : vector<8xf32>
    %123 = vector.multi_reduction <maximumf>, %122, %cst_38 [1] : vector<8x8xf32> to vector<8xf32>
    %124 = vector.shape_cast %123 : vector<8xf32> to vector<8x1xf32>
    %125 = vector.broadcast %124 : vector<8x1xf32> to vector<8x8xf32>
    %126 = arith.subf %122, %125 : vector<8x8xf32>
    %127 = math.exp %126 : vector<8x8xf32>
    %cst_39 = arith.constant dense<0.000000e+00> : vector<8xf32>
    %128 = vector.multi_reduction <add>, %127, %cst_39 [1] : vector<8x8xf32> to vector<8xf32>
    %129 = vector.shape_cast %128 : vector<8xf32> to vector<8x1xf32>
    %130 = tpu.reciprocal %129 {approx = true} : vector<8x1xf32> -> vector<8x1xf32>
    %131 = vector.broadcast %130 : vector<8x1xf32> to vector<8x8xf32>
    %132 = arith.mulf %127, %131 : vector<8x8xf32>
    %133 = arith.truncf %132 : vector<8x8xf32> to vector<8x8xbf16>
    %134 = vector.extract_strided_slice %15 {offsets = [8, 8], sizes = [8, 8], strides = [1, 1]} : vector<16x32xbf16> to vector<8x8xbf16>
    %cst_40 = arith.constant dense<0.000000e+00> : vector<8x8xf32>
    %135 = tpu.matmul %133, %134, %cst_40 {dimension_numbers = #tpu.dot_dimension_numbers<[1], [0], [0], [1], [0, 0, 1, 1], [], []>} : vector<8x8xbf16>, vector<8x8xbf16>, vector<8x8xf32> -> vector<8x8xf32>
    %136 = arith.truncf %135 : vector<8x8xf32> to vector<8x8xbf16>
    %137 = vector.extract_strided_slice %17 {offsets = [8, 0], sizes = [8, 32], strides = [1, 1]} : vector<32x32xbf16> to vector<8x32xbf16>
    %cst_41 = arith.constant dense<0.000000e+00> : vector<8x32xf32>
    %138 = tpu.matmul %136, %137, %cst_41 {dimension_numbers = #tpu.dot_dimension_numbers<[1], [0], [0], [1], [0, 0, 1, 1], [], []>} : vector<8x8xbf16>, vector<8x32xbf16>, vector<8x32xf32> -> vector<8x32xf32>
    %139 = arith.addf %119, %138 : vector<8x32xf32>
    %140 = vector.extract_strided_slice %11 {offsets = [8, 16], sizes = [8, 8], strides = [1, 1]} : vector<16x32xbf16> to vector<8x8xbf16>
    %141 = vector.extract_strided_slice %13 {offsets = [8, 16], sizes = [8, 8], strides = [1, 1]} : vector<16x32xbf16> to vector<8x8xbf16>
    %cst_42 = arith.constant dense<0.000000e+00> : vector<8x8xf32>
    %142 = tpu.matmul %140, %141, %cst_42 {dimension_numbers = #tpu.dot_dimension_numbers<[1], [1], [0], [0], [0, 0, 1, 0], [], []>} : vector<8x8xbf16>, vector<8x8xbf16>, vector<8x8xf32> -> vector<8x8xf32>
    %cst_43 = arith.constant dense<0xFF800000> : vector<8xf32>
    %143 = vector.multi_reduction <maximumf>, %142, %cst_43 [1] : vector<8x8xf32> to vector<8xf32>
    %144 = vector.shape_cast %143 : vector<8xf32> to vector<8x1xf32>
    %145 = vector.broadcast %144 : vector<8x1xf32> to vector<8x8xf32>
    %146 = arith.subf %142, %145 : vector<8x8xf32>
    %147 = math.exp %146 : vector<8x8xf32>
    %cst_44 = arith.constant dense<0.000000e+00> : vector<8xf32>
    %148 = vector.multi_reduction <add>, %147, %cst_44 [1] : vector<8x8xf32> to vector<8xf32>
    %149 = vector.shape_cast %148 : vector<8xf32> to vector<8x1xf32>
    %150 = tpu.reciprocal %149 {approx = true} : vector<8x1xf32> -> vector<8x1xf32>
    %151 = vector.broadcast %150 : vector<8x1xf32> to vector<8x8xf32>
    %152 = arith.mulf %147, %151 : vector<8x8xf32>
    %153 = arith.truncf %152 : vector<8x8xf32> to vector<8x8xbf16>
    %154 = vector.extract_strided_slice %15 {offsets = [8, 16], sizes = [8, 8], strides = [1, 1]} : vector<16x32xbf16> to vector<8x8xbf16>
    %cst_45 = arith.constant dense<0.000000e+00> : vector<8x8xf32>
    %155 = tpu.matmul %153, %154, %cst_45 {dimension_numbers = #tpu.dot_dimension_numbers<[1], [0], [0], [1], [0, 0, 1, 1], [], []>} : vector<8x8xbf16>, vector<8x8xbf16>, vector<8x8xf32> -> vector<8x8xf32>
    %156 = arith.truncf %155 : vector<8x8xf32> to vector<8x8xbf16>
    %157 = vector.extract_strided_slice %17 {offsets = [16, 0], sizes = [8, 32], strides = [1, 1]} : vector<32x32xbf16> to vector<8x32xbf16>
    %cst_46 = arith.constant dense<0.000000e+00> : vector<8x32xf32>
    %158 = tpu.matmul %156, %157, %cst_46 {dimension_numbers = #tpu.dot_dimension_numbers<[1], [0], [0], [1], [0, 0, 1, 1], [], []>} : vector<8x8xbf16>, vector<8x32xbf16>, vector<8x32xf32> -> vector<8x32xf32>
    %159 = arith.addf %139, %158 : vector<8x32xf32>
    %160 = vector.extract_strided_slice %11 {offsets = [8, 24], sizes = [8, 8], strides = [1, 1]} : vector<16x32xbf16> to vector<8x8xbf16>
    %161 = vector.extract_strided_slice %13 {offsets = [8, 24], sizes = [8, 8], strides = [1, 1]} : vector<16x32xbf16> to vector<8x8xbf16>
    %cst_47 = arith.constant dense<0.000000e+00> : vector<8x8xf32>
    %162 = tpu.matmul %160, %161, %cst_47 {dimension_numbers = #tpu.dot_dimension_numbers<[1], [1], [0], [0], [0, 0, 1, 0], [], []>} : vector<8x8xbf16>, vector<8x8xbf16>, vector<8x8xf32> -> vector<8x8xf32>
    %cst_48 = arith.constant dense<0xFF800000> : vector<8xf32>
    %163 = vector.multi_reduction <maximumf>, %162, %cst_48 [1] : vector<8x8xf32> to vector<8xf32>
    %164 = vector.shape_cast %163 : vector<8xf32> to vector<8x1xf32>
    %165 = vector.broadcast %164 : vector<8x1xf32> to vector<8x8xf32>
    %166 = arith.subf %162, %165 : vector<8x8xf32>
    %167 = math.exp %166 : vector<8x8xf32>
    %cst_49 = arith.constant dense<0.000000e+00> : vector<8xf32>
    %168 = vector.multi_reduction <add>, %167, %cst_49 [1] : vector<8x8xf32> to vector<8xf32>
    %169 = vector.shape_cast %168 : vector<8xf32> to vector<8x1xf32>
    %170 = tpu.reciprocal %169 {approx = true} : vector<8x1xf32> -> vector<8x1xf32>
    %171 = vector.broadcast %170 : vector<8x1xf32> to vector<8x8xf32>
    %172 = arith.mulf %167, %171 : vector<8x8xf32>
    %173 = arith.truncf %172 : vector<8x8xf32> to vector<8x8xbf16>
    %174 = vector.extract_strided_slice %15 {offsets = [8, 24], sizes = [8, 8], strides = [1, 1]} : vector<16x32xbf16> to vector<8x8xbf16>
    %cst_50 = arith.constant dense<0.000000e+00> : vector<8x8xf32>
    %175 = tpu.matmul %173, %174, %cst_50 {dimension_numbers = #tpu.dot_dimension_numbers<[1], [0], [0], [1], [0, 0, 1, 1], [], []>} : vector<8x8xbf16>, vector<8x8xbf16>, vector<8x8xf32> -> vector<8x8xf32>
    %176 = arith.truncf %175 : vector<8x8xf32> to vector<8x8xbf16>
    %177 = vector.extract_strided_slice %17 {offsets = [24, 0], sizes = [8, 32], strides = [1, 1]} : vector<32x32xbf16> to vector<8x32xbf16>
    %cst_51 = arith.constant dense<0.000000e+00> : vector<8x32xf32>
    %178 = tpu.matmul %176, %177, %cst_51 {dimension_numbers = #tpu.dot_dimension_numbers<[1], [0], [0], [1], [0, 0, 1, 1], [], []>} : vector<8x8xbf16>, vector<8x32xbf16>, vector<8x32xf32> -> vector<8x32xf32>
    %179 = arith.addf %159, %178 : vector<8x32xf32>
    %180 = tpu.concatenate %98, %179 in 0 : vector<8x32xf32>, vector<8x32xf32> -> vector<16x32xf32>
    %c0_52 = arith.constant 0 : index
    %c0_53 = arith.constant 0 : index
    %181 = vector.load %arg7[%c0_52, %c0_53] : memref<16x32xf32, #tpu.memory_space<vmem>>, vector<1x32xf32>
    %182 = vector.broadcast %181 : vector<1x32xf32> to vector<16x32xf32>
    %183 = arith.addf %180, %182 : vector<16x32xf32>
    %184 = arith.addf %0, %183 : vector<16x32xf32>
    %c3 = arith.constant 3 : index
    %c0_54 = arith.constant 0 : index
    %185 = vector.load %arg7[%c3, %c0_54] : memref<16x32xf32, #tpu.memory_space<vmem>>, vector<1x32xf32>
    %c4 = arith.constant 4 : index
    %c0_55 = arith.constant 0 : index
    %186 = vector.load %arg7[%c4, %c0_55] : memref<16x32xf32, #tpu.memory_space<vmem>>, vector<1x32xf32>
    %cst_56 = arith.constant dense<0.000000e+00> : vector<16xf32>
    %187 = vector.multi_reduction <add>, %184, %cst_56 [1] : vector<16x32xf32> to vector<16xf32>
    %188 = vector.shape_cast %187 : vector<16xf32> to vector<16x1xf32>
    %cst_57 = arith.constant 3.200000e+01 : f32
    %189 = vector.broadcast %cst_57 : f32 to vector<16x1xf32>
    %190 = arith.divf %188, %189 : vector<16x1xf32>
    %191 = vector.broadcast %190 : vector<16x1xf32> to vector<16x32xf32>
    %192 = arith.subf %184, %191 : vector<16x32xf32>
    %193 = arith.mulf %192, %192 : vector<16x32xf32>
    %cst_58 = arith.constant dense<0.000000e+00> : vector<16xf32>
    %194 = vector.multi_reduction <add>, %193, %cst_58 [1] : vector<16x32xf32> to vector<16xf32>
    %195 = vector.shape_cast %194 : vector<16xf32> to vector<16x1xf32>
    %cst_59 = arith.constant 3.200000e+01 : f32
    %196 = vector.broadcast %cst_59 : f32 to vector<16x1xf32>
    %197 = arith.divf %195, %196 : vector<16x1xf32>
    %198 = vector.broadcast %190 : vector<16x1xf32> to vector<16x32xf32>
    %199 = arith.subf %184, %198 : vector<16x32xf32>
    %cst_60 = arith.constant 9.99999974E-6 : f32
    %200 = vector.broadcast %cst_60 : f32 to vector<16x1xf32>
    %201 = arith.addf %197, %200 : vector<16x1xf32>
    %202 = math.rsqrt %201 : vector<16x1xf32>
    %203 = vector.broadcast %202 : vector<16x1xf32> to vector<16x32xf32>
    %204 = arith.mulf %199, %203 : vector<16x32xf32>
    %205 = vector.broadcast %185 : vector<1x32xf32> to vector<16x32xf32>
    %206 = arith.mulf %204, %205 : vector<16x32xf32>
    %207 = vector.broadcast %186 : vector<1x32xf32> to vector<16x32xf32>
    %208 = arith.addf %206, %207 : vector<16x32xf32>
    %209 = arith.truncf %208 : vector<16x32xf32> to vector<16x32xbf16>
    %c1 = arith.constant 1 : index
    %c0_61 = arith.constant 0 : index
    %c0_62 = arith.constant 0 : index
    %210 = vector.load %arg2[%c1, %c0_61, %c0_62] : memref<2x32x96xbf16, #tpu.memory_space<vmem>>, vector<1x32x96xbf16>
    %211 = vector.shape_cast %210 : vector<1x32x96xbf16> to vector<32x96xbf16>
    %cst_63 = arith.constant dense<0.000000e+00> : vector<16x96xf32>
    %212 = tpu.matmul %209, %211, %cst_63 {dimension_numbers = #tpu.dot_dimension_numbers<[1], [0], [0], [1], [0, 0, 1, 1], [], []>} : vector<16x32xbf16>, vector<32x96xbf16>, vector<16x96xf32> -> vector<16x96xf32>
    %c1_64 = arith.constant 1 : index
    %c0_65 = arith.constant 0 : index
    %213 = vector.load %arg6[%c1_64, %c0_65] : memref<2x96xf32, #tpu.memory_space<vmem>>, vector<1x96xf32>
    %214 = vector.broadcast %213 : vector<1x96xf32> to vector<16x96xf32>
    %215 = arith.addf %212, %214 : vector<16x96xf32>
    %216 = vector.extract_strided_slice %215 {offsets = [0, 0], sizes = [16, 32], strides = [1, 1]} : vector<16x96xf32> to vector<16x32xf32>
    %cst_66 = arith.constant dense<0xFF800000> : vector<16xf32>
    %217 = vector.multi_reduction <maximumf>, %216, %cst_66 [1] : vector<16x32xf32> to vector<16xf32>
    %218 = vector.shape_cast %217 : vector<16xf32> to vector<16x1xf32>
    %219 = vector.broadcast %218 : vector<16x1xf32> to vector<16x32xf32>
    %220 = arith.subf %216, %219 : vector<16x32xf32>
    %221 = math.exp %220 : vector<16x32xf32>
    %cst_67 = arith.constant dense<0.000000e+00> : vector<16xf32>
    %222 = vector.multi_reduction <add>, %221, %cst_67 [1] : vector<16x32xf32> to vector<16xf32>
    %223 = vector.shape_cast %222 : vector<16xf32> to vector<16x1xf32>
    %224 = tpu.reciprocal %223 {approx = true} : vector<16x1xf32> -> vector<16x1xf32>
    %225 = vector.broadcast %224 : vector<16x1xf32> to vector<16x32xf32>
    %226 = arith.mulf %221, %225 : vector<16x32xf32>
    %227 = vector.extract_strided_slice %215 {offsets = [0, 32], sizes = [16, 32], strides = [1, 1]} : vector<16x96xf32> to vector<16x32xf32>
    %228 = vector.extract_strided_slice %215 {offsets = [0, 64], sizes = [16, 32], strides = [1, 1]} : vector<16x96xf32> to vector<16x32xf32>
    %229 = vector.extract_strided_slice %227 {offsets = [0, 0], sizes = [8, 32], strides = [1, 1]} : vector<16x32xf32> to vector<8x32xf32>
    %cst_68 = arith.constant dense<0xFF800000> : vector<32xf32>
    %230 = vector.multi_reduction <maximumf>, %229, %cst_68 [0] : vector<8x32xf32> to vector<32xf32>
    %231 = vector.shape_cast %230 : vector<32xf32> to vector<1x32xf32>
    %232 = vector.broadcast %231 : vector<1x32xf32> to vector<8x32xf32>
    %233 = arith.subf %229, %232 : vector<8x32xf32>
    %234 = math.exp %233 : vector<8x32xf32>
    %cst_69 = arith.constant dense<0.000000e+00> : vector<32xf32>
    %235 = vector.multi_reduction <add>, %234, %cst_69 [0] : vector<8x32xf32> to vector<32xf32>
    %236 = vector.shape_cast %235 : vector<32xf32> to vector<1x32xf32>
    %237 = tpu.reciprocal %236 {approx = true} : vector<1x32xf32> -> vector<1x32xf32>
    %238 = vector.broadcast %237 : vector<1x32xf32> to vector<8x32xf32>
    %239 = arith.mulf %234, %238 : vector<8x32xf32>
    %240 = arith.truncf %239 : vector<8x32xf32> to vector<8x32xbf16>
    %241 = vector.extract_strided_slice %228 {offsets = [0, 0], sizes = [8, 32], strides = [1, 1]} : vector<16x32xf32> to vector<8x32xf32>
    %242 = arith.truncf %241 : vector<8x32xf32> to vector<8x32xbf16>
    %cst_70 = arith.constant dense<0.000000e+00> : vector<32x32xf32>
    %243 = tpu.matmul %240, %242, %cst_70 {dimension_numbers = #tpu.dot_dimension_numbers<[0], [0], [1], [1], [0, 1, 1, 1], [], []>} : vector<8x32xbf16>, vector<8x32xbf16>, vector<32x32xf32> -> vector<32x32xf32>
    %244 = vector.extract_strided_slice %226 {offsets = [0, 0], sizes = [8, 32], strides = [1, 1]} : vector<16x32xf32> to vector<8x32xf32>
    %245 = arith.truncf %244 : vector<8x32xf32> to vector<8x32xbf16>
    %246 = arith.truncf %243 : vector<32x32xf32> to vector<32x32xbf16>
    %cst_71 = arith.constant dense<0.000000e+00> : vector<8x32xf32>
    %247 = tpu.matmul %245, %246, %cst_71 {dimension_numbers = #tpu.dot_dimension_numbers<[1], [0], [0], [1], [0, 0, 1, 1], [], []>} : vector<8x32xbf16>, vector<32x32xbf16>, vector<8x32xf32> -> vector<8x32xf32>
    %248 = vector.extract_strided_slice %227 {offsets = [8, 0], sizes = [8, 32], strides = [1, 1]} : vector<16x32xf32> to vector<8x32xf32>
    %cst_72 = arith.constant dense<0xFF800000> : vector<32xf32>
    %249 = vector.multi_reduction <maximumf>, %248, %cst_72 [0] : vector<8x32xf32> to vector<32xf32>
    %250 = vector.shape_cast %249 : vector<32xf32> to vector<1x32xf32>
    %251 = vector.broadcast %250 : vector<1x32xf32> to vector<8x32xf32>
    %252 = arith.subf %248, %251 : vector<8x32xf32>
    %253 = math.exp %252 : vector<8x32xf32>
    %cst_73 = arith.constant dense<0.000000e+00> : vector<32xf32>
    %254 = vector.multi_reduction <add>, %253, %cst_73 [0] : vector<8x32xf32> to vector<32xf32>
    %255 = vector.shape_cast %254 : vector<32xf32> to vector<1x32xf32>
    %256 = tpu.reciprocal %255 {approx = true} : vector<1x32xf32> -> vector<1x32xf32>
    %257 = vector.broadcast %256 : vector<1x32xf32> to vector<8x32xf32>
    %258 = arith.mulf %253, %257 : vector<8x32xf32>
    %259 = arith.truncf %258 : vector<8x32xf32> to vector<8x32xbf16>
    %260 = vector.extract_strided_slice %228 {offsets = [8, 0], sizes = [8, 32], strides = [1, 1]} : vector<16x32xf32> to vector<8x32xf32>
    %261 = arith.truncf %260 : vector<8x32xf32> to vector<8x32xbf16>
    %cst_74 = arith.constant dense<0.000000e+00> : vector<32x32xf32>
    %262 = tpu.matmul %259, %261, %cst_74 {dimension_numbers = #tpu.dot_dimension_numbers<[0], [0], [1], [1], [0, 1, 1, 1], [], []>} : vector<8x32xbf16>, vector<8x32xbf16>, vector<32x32xf32> -> vector<32x32xf32>
    %263 = vector.extract_strided_slice %226 {offsets = [8, 0], sizes = [8, 32], strides = [1, 1]} : vector<16x32xf32> to vector<8x32xf32>
    %264 = arith.truncf %263 : vector<8x32xf32> to vector<8x32xbf16>
    %265 = arith.truncf %262 : vector<32x32xf32> to vector<32x32xbf16>
    %cst_75 = arith.constant dense<0.000000e+00> : vector<8x32xf32>
    %266 = tpu.matmul %264, %265, %cst_75 {dimension_numbers = #tpu.dot_dimension_numbers<[1], [0], [0], [1], [0, 0, 1, 1], [], []>} : vector<8x32xbf16>, vector<32x32xbf16>, vector<8x32xf32> -> vector<8x32xf32>
    %267 = tpu.concatenate %247, %266 in 0 : vector<8x32xf32>, vector<8x32xf32> -> vector<16x32xf32>
    %268 = arith.truncf %267 : vector<16x32xf32> to vector<16x32xbf16>
    %c1_76 = arith.constant 1 : index
    %c0_77 = arith.constant 0 : index
    %c0_78 = arith.constant 0 : index
    %269 = vector.load %arg3[%c1_76, %c0_77, %c0_78] : memref<2x32x32xbf16, #tpu.memory_space<vmem>>, vector<1x32x32xbf16>
    %270 = vector.shape_cast %269 : vector<1x32x32xbf16> to vector<32x32xbf16>
    %cst_79 = arith.constant dense<0.000000e+00> : vector<16x32xf32>
    %271 = tpu.matmul %268, %270, %cst_79 {dimension_numbers = #tpu.dot_dimension_numbers<[1], [0], [0], [1], [0, 0, 1, 1], [], []>} : vector<16x32xbf16>, vector<32x32xbf16>, vector<16x32xf32> -> vector<16x32xf32>
    %c1_80 = arith.constant 1 : index
    %c0_81 = arith.constant 0 : index
    %272 = vector.load %arg7[%c1_80, %c0_81] : memref<16x32xf32, #tpu.memory_space<vmem>>, vector<1x32xf32>
    %273 = vector.broadcast %272 : vector<1x32xf32> to vector<16x32xf32>
    %274 = arith.addf %271, %273 : vector<16x32xf32>
    %275 = arith.addf %208, %274 : vector<16x32xf32>
    %c5 = arith.constant 5 : index
    %c0_82 = arith.constant 0 : index
    %276 = vector.load %arg7[%c5, %c0_82] : memref<16x32xf32, #tpu.memory_space<vmem>>, vector<1x32xf32>
    %c6 = arith.constant 6 : index
    %c0_83 = arith.constant 0 : index
    %277 = vector.load %arg7[%c6, %c0_83] : memref<16x32xf32, #tpu.memory_space<vmem>>, vector<1x32xf32>
    %cst_84 = arith.constant dense<0.000000e+00> : vector<16xf32>
    %278 = vector.multi_reduction <add>, %275, %cst_84 [1] : vector<16x32xf32> to vector<16xf32>
    %279 = vector.shape_cast %278 : vector<16xf32> to vector<16x1xf32>
    %cst_85 = arith.constant 3.200000e+01 : f32
    %280 = vector.broadcast %cst_85 : f32 to vector<16x1xf32>
    %281 = arith.divf %279, %280 : vector<16x1xf32>
    %282 = vector.broadcast %281 : vector<16x1xf32> to vector<16x32xf32>
    %283 = arith.subf %275, %282 : vector<16x32xf32>
    %284 = arith.mulf %283, %283 : vector<16x32xf32>
    %cst_86 = arith.constant dense<0.000000e+00> : vector<16xf32>
    %285 = vector.multi_reduction <add>, %284, %cst_86 [1] : vector<16x32xf32> to vector<16xf32>
    %286 = vector.shape_cast %285 : vector<16xf32> to vector<16x1xf32>
    %cst_87 = arith.constant 3.200000e+01 : f32
    %287 = vector.broadcast %cst_87 : f32 to vector<16x1xf32>
    %288 = arith.divf %286, %287 : vector<16x1xf32>
    %289 = vector.broadcast %281 : vector<16x1xf32> to vector<16x32xf32>
    %290 = arith.subf %275, %289 : vector<16x32xf32>
    %cst_88 = arith.constant 9.99999974E-6 : f32
    %291 = vector.broadcast %cst_88 : f32 to vector<16x1xf32>
    %292 = arith.addf %288, %291 : vector<16x1xf32>
    %293 = math.rsqrt %292 : vector<16x1xf32>
    %294 = vector.broadcast %293 : vector<16x1xf32> to vector<16x32xf32>
    %295 = arith.mulf %290, %294 : vector<16x32xf32>
    %296 = vector.broadcast %276 : vector<1x32xf32> to vector<16x32xf32>
    %297 = arith.mulf %295, %296 : vector<16x32xf32>
    %298 = vector.broadcast %277 : vector<1x32xf32> to vector<16x32xf32>
    %299 = arith.addf %297, %298 : vector<16x32xf32>
    %300 = arith.truncf %299 : vector<16x32xf32> to vector<16x32xbf16>
    %c0_89 = arith.constant 0 : index
    %c0_90 = arith.constant 0 : index
    %301 = vector.load %arg4[%c0_89, %c0_90] : memref<32x64xbf16, #tpu.memory_space<vmem>>, vector<32x64xbf16>
    %cst_91 = arith.constant dense<0.000000e+00> : vector<16x64xf32>
    %302 = tpu.matmul %300, %301, %cst_91 {dimension_numbers = #tpu.dot_dimension_numbers<[1], [0], [0], [1], [0, 0, 1, 1], [], []>} : vector<16x32xbf16>, vector<32x64xbf16>, vector<16x64xf32> -> vector<16x64xf32>
    %c0_92 = arith.constant 0 : index
    %c0_93 = arith.constant 0 : index
    %303 = vector.load %arg8[%c0_92, %c0_93] : memref<1x64xf32, #tpu.memory_space<vmem>>, vector<1x64xf32>
    %304 = vector.broadcast %303 : vector<1x64xf32> to vector<16x64xf32>
    %305 = arith.addf %302, %304 : vector<16x64xf32>
    %cst_94 = arith.constant 0.000000e+00 : f32
    %306 = vector.broadcast %cst_94 : f32 to vector<16x64xf32>
    %307 = arith.maximumf %305, %306 : vector<16x64xf32>
    %308 = arith.truncf %307 : vector<16x64xf32> to vector<16x64xbf16>
    %c0_95 = arith.constant 0 : index
    %c0_96 = arith.constant 0 : index
    %309 = vector.load %arg5[%c0_95, %c0_96] : memref<64x32xbf16, #tpu.memory_space<vmem>>, vector<64x32xbf16>
    %cst_97 = arith.constant dense<0.000000e+00> : vector<16x32xf32>
    %310 = tpu.matmul %308, %309, %cst_97 {dimension_numbers = #tpu.dot_dimension_numbers<[1], [0], [0], [1], [0, 0, 1, 1], [], []>} : vector<16x64xbf16>, vector<64x32xbf16>, vector<16x32xf32> -> vector<16x32xf32>
    %c2 = arith.constant 2 : index
    %c0_98 = arith.constant 0 : index
    %311 = vector.load %arg7[%c2, %c0_98] : memref<16x32xf32, #tpu.memory_space<vmem>>, vector<1x32xf32>
    %312 = vector.broadcast %311 : vector<1x32xf32> to vector<16x32xf32>
    %313 = arith.addf %310, %312 : vector<16x32xf32>
    %314 = arith.addf %299, %313 : vector<16x32xf32>
    %c7 = arith.constant 7 : index
    %c0_99 = arith.constant 0 : index
    %315 = vector.load %arg7[%c7, %c0_99] : memref<16x32xf32, #tpu.memory_space<vmem>>, vector<1x32xf32>
    %c8 = arith.constant 8 : index
    %c0_100 = arith.constant 0 : index
    %316 = vector.load %arg7[%c8, %c0_100] : memref<16x32xf32, #tpu.memory_space<vmem>>, vector<1x32xf32>
    %cst_101 = arith.constant dense<0.000000e+00> : vector<16xf32>
    %317 = vector.multi_reduction <add>, %314, %cst_101 [1] : vector<16x32xf32> to vector<16xf32>
    %318 = vector.shape_cast %317 : vector<16xf32> to vector<16x1xf32>
    %cst_102 = arith.constant 3.200000e+01 : f32
    %319 = vector.broadcast %cst_102 : f32 to vector<16x1xf32>
    %320 = arith.divf %318, %319 : vector<16x1xf32>
    %321 = vector.broadcast %320 : vector<16x1xf32> to vector<16x32xf32>
    %322 = arith.subf %314, %321 : vector<16x32xf32>
    %323 = arith.mulf %322, %322 : vector<16x32xf32>
    %cst_103 = arith.constant dense<0.000000e+00> : vector<16xf32>
    %324 = vector.multi_reduction <add>, %323, %cst_103 [1] : vector<16x32xf32> to vector<16xf32>
    %325 = vector.shape_cast %324 : vector<16xf32> to vector<16x1xf32>
    %cst_104 = arith.constant 3.200000e+01 : f32
    %326 = vector.broadcast %cst_104 : f32 to vector<16x1xf32>
    %327 = arith.divf %325, %326 : vector<16x1xf32>
    %328 = vector.broadcast %320 : vector<16x1xf32> to vector<16x32xf32>
    %329 = arith.subf %314, %328 : vector<16x32xf32>
    %cst_105 = arith.constant 9.99999974E-6 : f32
    %330 = vector.broadcast %cst_105 : f32 to vector<16x1xf32>
    %331 = arith.addf %327, %330 : vector<16x1xf32>
    %332 = math.rsqrt %331 : vector<16x1xf32>
    %333 = vector.broadcast %332 : vector<16x1xf32> to vector<16x32xf32>
    %334 = arith.mulf %329, %333 : vector<16x32xf32>
    %335 = vector.broadcast %315 : vector<1x32xf32> to vector<16x32xf32>
    %336 = arith.mulf %334, %335 : vector<16x32xf32>
    %337 = vector.broadcast %316 : vector<1x32xf32> to vector<16x32xf32>
    %338 = arith.addf %336, %337 : vector<16x32xf32>
    %c0_106 = arith.constant 0 : index
    %c0_107 = arith.constant 0 : index
    %339 = vector.load %arg9[%c0_106, %c0_107] : memref<16x32xf32, #tpu.memory_space<vmem>>, vector<16x32xf32>
    tpu.vector_store %arg9[%c0_106, %c0_107], %338 {strides = array<i32>} : memref<16x32xf32, #tpu.memory_space<vmem>>, vector<16x32xf32>,
    return
  }
  func.func @transform_0(%arg0: i32) -> (i32, i32) {
    %c0_i32 = arith.constant 0 : i32
    %c0_i32_0 = arith.constant 0 : i32
    return %arg0, %c0_i32 : i32, i32
  }
  func.func @transform_1(%arg0: i32) -> (i32, i32, i32) {
    %c0_i32 = arith.constant 0 : i32
    %c0_i32_0 = arith.constant 0 : i32
    %c0_i32_1 = arith.constant 0 : i32
    %c0_i32_2 = arith.constant 0 : i32
    return %c0_i32, %c0_i32_0, %c0_i32_1 : i32, i32, i32
  }
  func.func @transform_2(%arg0: i32) -> (i32, i32, i32) {
    %c0_i32 = arith.constant 0 : i32
    %c0_i32_0 = arith.constant 0 : i32
    %c0_i32_1 = arith.constant 0 : i32
    %c0_i32_2 = arith.constant 0 : i32
    return %c0_i32, %c0_i32_0, %c0_i32_1 : i32, i32, i32
  }
  func.func @transform_3(%arg0: i32) -> (i32, i32) {
    %c0_i32 = arith.constant 0 : i32
    %c0_i32_0 = arith.constant 0 : i32
    %c0_i32_1 = arith.constant 0 : i32
    return %c0_i32, %c0_i32_0 : i32, i32
  }
  func.func @transform_4(%arg0: i32) -> (i32, i32) {
    %c0_i32 = arith.constant 0 : i32
    %c0_i32_0 = arith.constant 0 : i32
    %c0_i32_1 = arith.constant 0 : i32
    return %c0_i32, %c0_i32_0 : i32, i32
  }
  func.func @transform_5(%arg0: i32) -> (i32, i32) {
    %c0_i32 = arith.constant 0 : i32
    %c0_i32_0 = arith.constant 0 : i32
    %c0_i32_1 = arith.constant 0 : i32
    return %c0_i32, %c0_i32_0 : i32, i32
  }
  func.func @transform_6(%arg0: i32) -> (i32, i32) {
    %c0_i32 = arith.constant 0 : i32
    %c0_i32_0 = arith.constant 0 : i32
    %c0_i32_1 = arith.constant 0 : i32
    return %c0_i32, %c0_i32_0 : i32, i32
  }
  func.func @transform_7(%arg0: i32) -> (i32, i32) {
    %c0_i32 = arith.constant 0 : i32
    %c0_i32_0 = arith.constant 0 : i32
    %c0_i32_1 = arith.constant 0 : i32
    return %c0_i32, %c0_i32_0 : i32, i32
  }
  func.func @transform_8(%arg0: i32) -> (i32, i32) {
    %c0_i32 = arith.constant 0 : i32
    %c0_i32_0 = arith.constant 0 : i32
    return %arg0, %c0_i32 : i32, i32
  }
}

</mosaic_0001>

<llo_original>
// kernel: tpu_custom_call.1
$region0: #{tpu_custom_call.1}
  #allocation0 [shape = 'u32[]', space=smem, size = 0x4, offset = 0x4, fixed_abs, tag = 'smem constant byte address 0x4 - core index']
  #allocation1 [shape = 'u32[144,128]{1,0:T(1,128)}', space=vmem, size = 0x12000, scoped, tag = 'internal scratch']
  %s0 = inlined_call_operand.vmem [shape: f32[16,32], index: 0, kind: input, shape index: {}]
  %s1 = inlined_call_operand.vmem [shape: bf16[2,32,96], index: 1, kind: input, shape index: {}]
  %s2 = inlined_call_operand.hbm [shape: bf16[2,32,32], index: 2, kind: input, shape index: {}]
  %s3 = inlined_call_operand.hbm [shape: bf16[32,64], index: 3, kind: input, shape index: {}]
  %s4 = inlined_call_operand.vmem [shape: bf16[64,32], index: 4, kind: input, shape index: {}]
  %s5 = inlined_call_operand.vmem [shape: f32[2,96], index: 5, kind: input, shape index: {}]
  %s6 = inlined_call_operand.vmem [shape: f32[16,32], index: 6, kind: input, shape index: {}]
  %s7 = inlined_call_operand.vmem [shape: f32[1,64], index: 7, kind: input, shape index: {}]
  %s8 = inlined_call_operand.hbm [shape: f32[16,32], index: 8, kind: output, shape index: {}]
  %s9 = sld [smem:[#allocation0]]
  $region50: #{tpu_custom_call.1} parent=0
    _
  %s11 = ssub.s32 1, %s9
  %s12 = scalar_select 0, %s11, %s9
  $region1: #{tpu_custom_call.1} parent=0
    #allocation2 [shape = 'u8[16384]{0}', space=vmem, size = 0x4000, scoped, tag = 'input window, operand 2, single buffered']
    #allocation3 [shape = 's32[1]{0}', space=sflag, size = 0x4, scoped, tag = 'scoped memory for tpu_custom_call.1']
    #allocation4 [shape = 's32[1]{0}', space=sflag, size = 0x4, scoped, tag = 'scoped memory for tpu_custom_call.1']
    #allocation5 [shape = 'u8[8192]{0}', space=vmem, size = 0x2000, scoped, tag = 'input window, operand 3, single buffered']
    #allocation6 [shape = 's32[1]{0}', space=sflag, size = 0x4, scoped, tag = 'scoped memory for tpu_custom_call.1']
    #allocation7 [shape = 'u8[8192]{0}', space=vmem, size = 0x2000, scoped, tag = 'output window, operand 0, single buffered']
    %13 = vsyncpa [#allocation3], 0
    %14 = vsyncpa [#allocation6], 0
    %15 = vsyncpa [#allocation4], 0
    // Predicated region
    $region2: #{tpu_custom_call.1} parent=1 // pred_check
      _
    $region3: #{tpu_custom_call.1} parent=1 // pred_check_branch
      %17 = sbr.rel (0) target = $region5
    $region4: #{tpu_custom_call.1} parent=1 // pred_region
      _
    $region5: #{tpu_custom_call.1} parent=1 // pred_fallthru
      _
    // Predicated region
    $region6: #{tpu_custom_call.1} parent=1 // pred_check
      _
    $region7: #{tpu_custom_call.1} parent=1 // pred_check_branch
      %19 = sbr.rel (0) target = $region9
    $region8: #{tpu_custom_call.1} parent=1 // pred_region
      _
    $region9: #{tpu_custom_call.1} parent=1 // pred_fallthru
      _
    // Predicated region
    $region10: #{tpu_custom_call.1} parent=1 // pred_check
      _
    $region11: #{tpu_custom_call.1} parent=1 // pred_check_branch
      %21 = sbr.rel (0) target = $region13
    $region12: #{tpu_custom_call.1} parent=1 // pred_region
      %s23 = ssub.s32 512, 512
      %24 = vsyncadd [#allocation3], %s23
      %s25 = sshll.u32 [#allocation2], 4
      %s26 = int_to_ptr.vmem [resolvable:$true] %s25
      %31 = dma.hbm_to_vmem [thread:$0]  %s2, 512, %s26, [#allocation3], 64, 64, 4
    $region13: #{tpu_custom_call.1} parent=1 // pred_fallthru
      _
    // Predicated region
    $region14: #{tpu_custom_call.1} parent=1 // pred_check
      _
    $region15: #{tpu_custom_call.1} parent=1 // pred_check_branch
      %33 = sbr.rel (0) target = $region17
    $region16: #{tpu_custom_call.1} parent=1 // pred_region
      %s35 = ssub.s32 256, 256
      %36 = vsyncadd [#allocation6], %s35
      %s37 = sshll.u32 [#allocation5], 4
      %s38 = int_to_ptr.vmem [resolvable:$true] %s37
      %43 = dma.hbm_to_vmem [thread:$0]  %s3, 256, %s38, [#allocation6], 64, 64, 4
    $region17: #{tpu_custom_call.1} parent=1 // pred_fallthru
      _
    // Predicated region
    $region18: #{tpu_custom_call.1} parent=1 // pred_check
      _
    $region19: #{tpu_custom_call.1} parent=1 // pred_check_branch
      %45 = sbr.rel (0) target = $region21
    $region20: #{tpu_custom_call.1} parent=1 // pred_region
      _
    $region21: #{tpu_custom_call.1} parent=1 // pred_fallthru
      _
    // Predicated region
    $region22: #{tpu_custom_call.1} parent=1 // pred_check
      _
    $region23: #{tpu_custom_call.1} parent=1 // pred_check_branch
      %47 = sbr.rel (0) target = $region25
    $region24: #{tpu_custom_call.1} parent=1 // pred_region
      _
    $region25: #{tpu_custom_call.1} parent=1 // pred_fallthru
      _
    // Predicated region
    $region26: #{tpu_custom_call.1} parent=1 // pred_check
      _
    $region27: #{tpu_custom_call.1} parent=1 // pred_check_branch
      %49 = sbr.rel (0) target = $region29
    $region28: #{tpu_custom_call.1} parent=1 // pred_region
      _
    $region29: #{tpu_custom_call.1} parent=1 // pred_fallthru
      _
    // Predicated region
    $region30: #{tpu_custom_call.1} parent=1 // pred_check
      _
    $region31: #{tpu_custom_call.1} parent=1 // pred_check_branch
      %51 = sbr.rel (0) target = $region33
    $region32: #{tpu_custom_call.1} parent=1 // pred_region
      _
    $region33: #{tpu_custom_call.1} parent=1 // pred_fallthru
      _
    // Predicated region
    $region34: #{tpu_custom_call.1} parent=1 // pred_check
      _
    $region35: #{tpu_custom_call.1} parent=1 // pred_check_branch
      %53 = sbr.rel (0) target = $region37
    $region36: #{tpu_custom_call.1} parent=1 // pred_region
      %54 = dma.done [#allocation3], 512
    $region37: #{tpu_custom_call.1} parent=1 // pred_fallthru
      _
    // Predicated region
    $region38: #{tpu_custom_call.1} parent=1 // pred_check
      _
    $region39: #{tpu_custom_call.1} parent=1 // pred_check_branch
      %56 = sbr.rel (0) target = $region41
    $region40: #{tpu_custom_call.1} parent=1 // pred_region
      %57 = dma.done [#allocation6], 256
    $region41: #{tpu_custom_call.1} parent=1 // pred_fallthru
      _
    %v59 = vld [vmem:[%s0] sm:$0xff]
    %v60 = vld [vmem:[%s0 + $0x8] sm:$0xff]
    %v61 = vpack.c.bf16 %v60, %v59
    %v62 = vld [vmem:[%s1] sm:$0xf]
    %v63 = vld [vmem:[%s1 + $0x4] sm:$0xf]
    %v64 = vld [vmem:[%s1 + $0x8] sm:$0xf]
    %v65 = vld [vmem:[%s1 + $0xc] sm:$0xf]
    %v66 = vld [vmem:[%s5] sm:$0x1]
    %v67 = vlaneseq
    %v68 = vshrl.u32 %v67, 7
    %v69 = vsub.s32 0, %v68
    %v70 = vrot.slane %v66, %v69
    %v75 = vunpack.c.l.b16 %v62
    %v76 = vunpack.c.l.b16 %v63
    %v77 = vunpack.c.l.b16 %v64
    %v78 = vunpack.c.l.b16 %v65
    %v79 = vpack.c.b16 %v76, %v75
    %v80 = vpack.c.b16 %v78, %v77
    %vm83 = vcmask 261120
    %v85 = vsel %vm83, %v61, 0
    %87 = vmatprep.subr.bf16.mxu0 0
    %88 = vmatpush1.bf16.msra.mxu0 %v79
    %89 = vmatprep.subr.bf16.mxu0 0
    %90 = vmatpush1.bf16.msra.mxu0 %v80
    %91 = vmatprep.subr.bf16.mxu0 0
    %92 = vmatpush1.bf16.msra.mxu0 0
    %93 = vmatprep.subr.bf16.mxu0 0
    %94 = vmatpush1.bf16.msra.mxu0 0
    %95 = vmatprep.subr.bf16.mxu0 0
    %96 = vmatpush1.bf16.msra.mxu0 0
    %97 = vmatprep.subr.bf16.mxu0 0
    %98 = vmatpush1.bf16.msra.mxu0 0
    %99 = vmatprep.subr.bf16.mxu0 0
    %100 = vmatpush1.bf16.msra.mxu0 0
    %101 = vmatprep.subr.bf16.mxu0 0
    %102 = vmatpush1.bf16.msra.mxu0 0
    %103 = vmatprep.subr.bf16.mxu0 0
    %104 = vmatpush1.bf16.msra.mxu0 0
    %105 = vmatprep.subr.bf16.mxu0 0
    %106 = vmatpush1.bf16.msra.mxu0 0
    %107 = vmatprep.subr.bf16.mxu0 0
    %108 = vmatpush1.bf16.msra.mxu0 0
    %109 = vmatprep.subr.bf16.mxu0 0
    %110 = vmatpush1.bf16.msra.mxu0 0
    %111 = vmatprep.subr.bf16.mxu0 0
    %112 = vmatpush1.bf16.msra.mxu0 0
    %113 = vmatprep.subr.bf16.mxu0 0
    %114 = vmatpush1.bf16.msra.mxu0 0
    %115 = vmatprep.subr.bf16.mxu0 0
    %116 = vmatpush1.bf16.msra.mxu0 0
    %117 = vmatprep.subr.bf16.mxu0 0
    %118 = vmatpush1.bf16.msra.mxu0 0
    %119 = vmatprep.mubr.bf16.mxu0 0
    %120 = vmatmul.mubr.bf16.gmra.mrb[0].mxu0 %v85
    %v121 = vpop.f32.mrb[0].mxu0
    %v122 = vadd.f32 %v70, %v121
    %v123 = vpop.f32.mrb[0].mxu0
    %v124 = vpop.f32.mrb[0].mxu0
    %v125 = vadd.f32 %v70, %v124
    %v126 = vpop.f32.mrb[0].mxu0
    %127 = vdwg.mxu0
    %v128 = vmul.f32 %v122, 0.35355338
    %v129 = vmul.f32 %v125, 0.35355338
    %v130 = vpack.c.bf16 %v129, %v128
    %v131 = vpack.c.bf16 %v125, %v122
    %v132 = vld [vmem:[#allocation2] sm:$0xf]
    %v133 = vld [vmem:[#allocation2 + $0x4] sm:$0xf]
    %v134 = vld [vmem:[#allocation2 + $0x8] sm:$0xf]
    %v135 = vld [vmem:[#allocation2 + $0xc] sm:$0xf]
    %137 = vrot.lane.b32.xlu0 %v131, 96
    %v138 = vpop.permute.xlu0 %137
    %vm139 = vcmask 64512
    %v141 = vsel %vm139, %v130, 0
    %v144 = vsel %vm139, %v138, 0
    %146 = vmatprep.subr.bf16.mxu0 0
    %147 = vmatpush1.bf16.xpose.msra.mxu0 %v144
    %148 = vmatprep.subr.bf16.mxu0 0
    %149 = vmatpush1.bf16.xpose.msra.mxu0 0
    %150 = vmatprep.subr.bf16.mxu0 0
    %151 = vmatpush1.bf16.xpose.msra.mxu0 0
    %152 = vmatprep.subr.bf16.mxu0 0
    %153 = vmatpush1.bf16.xpose.msra.mxu0 0
    %154 = vmatprep.subr.bf16.mxu0 0
    %155 = vmatpush1.bf16.xpose.msra.mxu0 0
    %156 = vmatprep.subr.bf16.mxu0 0
    %157 = vmatpush1.bf16.xpose.msra.mxu0 0
    %158 = vmatprep.subr.bf16.mxu0 0
    %159 = vmatpush1.bf16.xpose.msra.mxu0 0
    %160 = vmatprep.subr.bf16.mxu0 0
    %161 = vmatpush1.bf16.xpose.msra.mxu0 0
    %162 = vmatprep.subr.bf16.mxu0 0
    %163 = vmatpush1.bf16.xpose.msra.mxu0 0
    %164 = vmatprep.subr.bf16.mxu0 0
    %165 = vmatpush1.bf16.xpose.msra.mxu0 0
    %166 = vmatprep.subr.bf16.mxu0 0
    %167 = vmatpush1.bf16.xpose.msra.mxu0 0
    %168 = vmatprep.subr.bf16.mxu0 0
    %169 = vmatpush1.bf16.xpose.msra.mxu0 0
    %170 = vmatprep.subr.bf16.mxu0 0
    %171 = vmatpush1.bf16.xpose.msra.mxu0 0
    %172 = vmatprep.subr.bf16.mxu0 0
    %173 = vmatpush1.bf16.xpose.msra.mxu0 0
    %174 = vmatprep.subr.bf16.mxu0 0
    %175 = vmatpush1.bf16.xpose.msra.mxu0 0
    %176 = vmatprep.subr.bf16.mxu0 0
    %177 = vmatpush1.bf16.xpose.msra.mxu0 0
    %178 = vmatprep.mubr.bf16.mxu0 0
    %179 = vmatmul.mubr.bf16.gmra.mrb[0].mxu0 %v141
    %v180 = vpop.f32.mrb[0].mxu0
    %v181 = vadd.f32 0.0, %v180
    %v182 = vpop.f32.mrb[0].mxu0
    %v183 = vpop.f32.mrb[0].mxu0
    %v184 = vpop.f32.mrb[0].mxu0
    %185 = vdwg.mxu0
    %v186 = vsel %vm139, %v181, -inf
    %187 = vmax.xlane.f32.xlu0 %v186
    %v188 = vpop.xlane.xlu0 %187
    %v189 = vsub.f32 %v181, %v188
    %v190 = vmul.f32 %v189, 1.442695
    %v191 = vpow.pop %v190
    %v192 = vsel %vm139, %v191, 0.0
    %193 = vadd.xlane.f32.xlu0 %v192
    %v194 = vpop.xlane.xlu0 %193
    %v195 = vrcp.pop %v194
    %v196 = vmul.f32 %v191, %v195
    %v197 = vpack.c.bf16 %v196, %v196
    %198 = vrot.lane.b32.xlu0 %v131, 64
    %v199 = vpop.permute.xlu0 %198
    %v201 = vsel %vm139, %v197, 0
    %vm203 = vcmask 1043456
    %v205 = vsel %vm203, %v199, 0
    %207 = vmatprep.subr.bf16.mxu0 0
    %208 = vmatpush1.bf16.msra.mxu0 %v205
    %209 = vmatprep.subr.bf16.mxu0 0
    %210 = vmatpush1.bf16.msra.mxu0 0
    %211 = vmatprep.subr.bf16.mxu0 0
    %212 = vmatpush1.bf16.msra.mxu0 0
    %213 = vmatprep.subr.bf16.mxu0 0
    %214 = vmatpush1.bf16.msra.mxu0 0
    %215 = vmatprep.subr.bf16.mxu0 0
    %216 = vmatpush1.bf16.msra.mxu0 0
    %217 = vmatprep.subr.bf16.mxu0 0
    %218 = vmatpush1.bf16.msra.mxu0 0
    %219 = vmatprep.subr.bf16.mxu0 0
    %220 = vmatpush1.bf16.msra.mxu0 0
    %221 = vmatprep.subr.bf16.mxu0 0
    %222 = vmatpush1.bf16.msra.mxu0 0
    %223 = vmatprep.subr.bf16.mxu0 0
    %224 = vmatpush1.bf16.msra.mxu0 0
    %225 = vmatprep.subr.bf16.mxu0 0
    %226 = vmatpush1.bf16.msra.mxu0 0
    %227 = vmatprep.subr.bf16.mxu0 0
    %228 = vmatpush1.bf16.msra.mxu0 0
    %229 = vmatprep.subr.bf16.mxu0 0
    %230 = vmatpush1.bf16.msra.mxu0 0
    %231 = vmatprep.subr.bf16.mxu0 0
    %232 = vmatpush1.bf16.msra.mxu0 0
    %233 = vmatprep.subr.bf16.mxu0 0
    %234 = vmatpush1.bf16.msra.mxu0 0
    %235 = vmatprep.subr.bf16.mxu0 0
    %236 = vmatpush1.bf16.msra.mxu0 0
    %237 = vmatprep.subr.bf16.mxu0 0
    %238 = vmatpush1.bf16.msra.mxu0 0
    %239 = vmatprep.mubr.bf16.mxu0 0
    %240 = vmatmul.mubr.bf16.gmra.mrb[0].mxu0 %v201
    %v241 = vpop.f32.mrb[0].mxu0
    %v242 = vadd.f32 0.0, %v241
    %v243 = vpop.f32.mrb[0].mxu0
    %v244 = vpop.f32.mrb[0].mxu0
    %v245 = vpop.f32.mrb[0].mxu0
    %246 = vdwg.mxu0
    %v247 = vpack.c.bf16 %v242, %v242
    %249 = vrot.lane.b32.xlu0 %v130, 120
    %v250 = vpop.permute.xlu0 %249
    %251 = vrot.lane.b32.xlu0 %v131, 88
    %v252 = vpop.permute.xlu0 %251
    %v254 = vsel %vm139, %v250, 0
    %v257 = vsel %vm139, %v252, 0
    %259 = vmatprep.subr.bf16.mxu0 0
    %260 = vmatpush1.bf16.xpose.msra.mxu0 %v257
    %261 = vmatprep.subr.bf16.mxu0 0
    %262 = vmatpush1.bf16.xpose.msra.mxu0 0
    %263 = vmatprep.subr.bf16.mxu0 0
    %264 = vmatpush1.bf16.xpose.msra.mxu0 0
    %265 = vmatprep.subr.bf16.mxu0 0
    %266 = vmatpush1.bf16.xpose.msra.mxu0 0
    %267 = vmatprep.subr.bf16.mxu0 0
    %268 = vmatpush1.bf16.xpose.msra.mxu0 0
    %269 = vmatprep.subr.bf16.mxu0 0
    %270 = vmatpush1.bf16.xpose.msra.mxu0 0
    %271 = vmatprep.subr.bf16.mxu0 0
    %272 = vmatpush1.bf16.xpose.msra.mxu0 0
    %273 = vmatprep.subr.bf16.mxu0 0
    %274 = vmatpush1.bf16.xpose.msra.mxu0 0
    %275 = vmatprep.subr.bf16.mxu0 0
    %276 = vmatpush1.bf16.xpose.msra.mxu0 0
    %277 = vmatprep.subr.bf16.mxu0 0
    %278 = vmatpush1.bf16.xpose.msra.mxu0 0
    %279 = vmatprep.subr.bf16.mxu0 0
    %280 = vmatpush1.bf16.xpose.msra.mxu0 0
    %281 = vmatprep.subr.bf16.mxu0 0
    %282 = vmatpush1.bf16.xpose.msra.mxu0 0
    %283 = vmatprep.subr.bf16.mxu0 0
    %284 = vmatpush1.bf16.xpose.msra.mxu0 0
    %285 = vmatprep.subr.bf16.mxu0 0
    %286 = vmatpush1.bf16.xpose.msra.mxu0 0
    %287 = vmatprep.subr.bf16.mxu0 0
    %288 = vmatpush1.bf16.xpose.msra.mxu0 0
    %289 = vmatprep.subr.bf16.mxu0 0
    %290 = vmatpush1.bf16.xpose.msra.mxu0 0
    %291 = vmatprep.mubr.bf16.mxu0 0
    %292 = vmatmul.mubr.bf16.gmra.mrb[0].mxu0 %v254
    %v293 = vpop.f32.mrb[0].mxu0
    %v294 = vadd.f32 0.0, %v293
    %v295 = vpop.f32.mrb[0].mxu0
    %v296 = vpop.f32.mrb[0].mxu0
    %v297 = vpop.f32.mrb[0].mxu0
    %298 = vdwg.mxu0
    %v299 = vsel %vm139, %v294, -inf
    %300 = vmax.xlane.f32.xlu0 %v299
    %v301 = vpop.xlane.xlu0 %300
    %v302 = vsub.f32 %v294, %v301
    %v303 = vmul.f32 %v302, 1.442695
    %v304 = vpow.pop %v303
    %v305 = vsel %vm139, %v304, 0.0
    %306 = vadd.xlane.f32.xlu0 %v305
    %v307 = vpop.xlane.xlu0 %306
    %v308 = vrcp.pop %v307
    %v309 = vmul.f32 %v304, %v308
    %v310 = vpack.c.bf16 %v309, %v309
    %311 = vrot.lane.b32.xlu0 %v131, 56
    %v312 = vpop.permute.xlu0 %311
    %v314 = vsel %vm139, %v310, 0
    %v317 = vsel %vm203, %v312, 0
    %319 = vmatprep.subr.bf16.mxu0 0
    %320 = vmatpush1.bf16.msra.mxu0 %v317
    %321 = vmatprep.subr.bf16.mxu0 0
    %322 = vmatpush1.bf16.msra.mxu0 0
    %323 = vmatprep.subr.bf16.mxu0 0
    %324 = vmatpush1.bf16.msra.mxu0 0
    %325 = vmatprep.subr.bf16.mxu0 0
    %326 = vmatpush1.bf16.msra.mxu0 0
    %327 = vmatprep.subr.bf16.mxu0 0
    %328 = vmatpush1.bf16.msra.mxu0 0
    %329 = vmatprep.subr.bf16.mxu0 0
    %330 = vmatpush1.bf16.msra.mxu0 0
    %331 = vmatprep.subr.bf16.mxu0 0
    %332 = vmatpush1.bf16.msra.mxu0 0
    %333 = vmatprep.subr.bf16.mxu0 0
    %334 = vmatpush1.bf16.msra.mxu0 0
    %335 = vmatprep.subr.bf16.mxu0 0
    %336 = vmatpush1.bf16.msra.mxu0 0
    %337 = vmatprep.subr.bf16.mxu0 0
    %338 = vmatpush1.bf16.msra.mxu0 0
    %339 = vmatprep.subr.bf16.mxu0 0
    %340 = vmatpush1.bf16.msra.mxu0 0
    %341 = vmatprep.subr.bf16.mxu0 0
    %342 = vmatpush1.bf16.msra.mxu0 0
    %343 = vmatprep.subr.bf16.mxu0 0
    %344 = vmatpush1.bf16.msra.mxu0 0
    %345 = vmatprep.subr.bf16.mxu0 0
    %346 = vmatpush1.bf16.msra.mxu0 0
    %347 = vmatprep.subr.bf16.mxu0 0
    %348 = vmatpush1.bf16.msra.mxu0 0
    %349 = vmatprep.subr.bf16.mxu0 0
    %350 = vmatpush1.bf16.msra.mxu0 0
    %351 = vmatprep.mubr.bf16.mxu0 0
    %352 = vmatmul.mubr.bf16.gmra.mrb[0].mxu0 %v314
    %v353 = vpop.f32.mrb[0].mxu0
    %v354 = vadd.f32 0.0, %v353
    %v355 = vpop.f32.mrb[0].mxu0
    %v356 = vpop.f32.mrb[0].mxu0
    %v357 = vpop.f32.mrb[0].mxu0
    %358 = vdwg.mxu0
    %v359 = vpack.c.bf16 %v354, %v354
    %v361 = vsel %vm139, %v359, 0
    %v364 = vsel %vm203, %v133, 0
    %366 = vmatprep.subr.bf16.mxu0 0
    %367 = vmatpush1.bf16.msra.mxu0 %v364
    %368 = vmatprep.subr.bf16.mxu0 0
    %369 = vmatpush1.bf16.msra.mxu0 0
    %370 = vmatprep.subr.bf16.mxu0 0
    %371 = vmatpush1.bf16.msra.mxu0 0
    %372 = vmatprep.subr.bf16.mxu0 0
    %373 = vmatpush1.bf16.msra.mxu0 0
    %374 = vmatprep.subr.bf16.mxu0 0
    %375 = vmatpush1.bf16.msra.mxu0 0
    %376 = vmatprep.subr.bf16.mxu0 0
    %377 = vmatpush1.bf16.msra.mxu0 0
    %378 = vmatprep.subr.bf16.mxu0 0
    %379 = vmatpush1.bf16.msra.mxu0 0
    %380 = vmatprep.subr.bf16.mxu0 0
    %381 = vmatpush1.bf16.msra.mxu0 0
    %382 = vmatprep.subr.bf16.mxu0 0
    %383 = vmatpush1.bf16.msra.mxu0 0
    %384 = vmatprep.subr.bf16.mxu0 0
    %385 = vmatpush1.bf16.msra.mxu0 0
    %386 = vmatprep.subr.bf16.mxu0 0
    %387 = vmatpush1.bf16.msra.mxu0 0
    %388 = vmatprep.subr.bf16.mxu0 0
    %389 = vmatpush1.bf16.msra.mxu0 0
    %390 = vmatprep.subr.bf16.mxu0 0
    %391 = vmatpush1.bf16.msra.mxu0 0
    %392 = vmatprep.subr.bf16.mxu0 0
    %393 = vmatpush1.bf16.msra.mxu0 0
    %394 = vmatprep.subr.bf16.mxu0 0
    %395 = vmatpush1.bf16.msra.mxu0 0
    %396 = vmatprep.subr.bf16.mxu0 0
    %397 = vmatpush1.bf16.msra.mxu0 0
    %398 = vmatprep.mubr.bf16.mxu0 0
    %399 = vmatmul.mubr.bf16.gmra.mrb[0].mxu0 %v361
    %v400 = vpop.f32.mrb[0].mxu0
    %v401 = vadd.f32 0.0, %v400
    %v402 = vpop.f32.mrb[0].mxu0
    %v403 = vpop.f32.mrb[0].mxu0
    %v404 = vpop.f32.mrb[0].mxu0
    %405 = vdwg.mxu0
    %v407 = vsel %vm139, %v247, 0
    %v410 = vsel %vm203, %v132, 0
    %412 = vmatprep.subr.bf16.mxu0 0
    %413 = vmatpush1.bf16.msra.mxu0 %v410
    %414 = vmatprep.subr.bf16.mxu0 0
    %415 = vmatpush1.bf16.msra.mxu0 0
    %416 = vmatprep.subr.bf16.mxu0 0
    %417 = vmatpush1.bf16.msra.mxu0 0
    %418 = vmatprep.subr.bf16.mxu0 0
    %419 = vmatpush1.bf16.msra.mxu0 0
    %420 = vmatprep.subr.bf16.mxu0 0
    %421 = vmatpush1.bf16.msra.mxu0 0
    %422 = vmatprep.subr.bf16.mxu0 0
    %423 = vmatpush1.bf16.msra.mxu0 0
    %424 = vmatprep.subr.bf16.mxu0 0
    %425 = vmatpush1.bf16.msra.mxu0 0
    %426 = vmatprep.subr.bf16.mxu0 0
    %427 = vmatpush1.bf16.msra.mxu0 0
    %428 = vmatprep.subr.bf16.mxu0 0
    %429 = vmatpush1.bf16.msra.mxu0 0
    %430 = vmatprep.subr.bf16.mxu0 0
    %431 = vmatpush1.bf16.msra.mxu0 0
    %432 = vmatprep.subr.bf16.mxu0 0
    %433 = vmatpush1.bf16.msra.mxu0 0
    %434 = vmatprep.subr.bf16.mxu0 0
    %435 = vmatpush1.bf16.msra.mxu0 0
    %436 = vmatprep.subr.bf16.mxu0 0
    %437 = vmatpush1.bf16.msra.mxu0 0
    %438 = vmatprep.subr.bf16.mxu0 0
    %439 = vmatpush1.bf16.msra.mxu0 0
    %440 = vmatprep.subr.bf16.mxu0 0
    %441 = vmatpush1.bf16.msra.mxu0 0
    %442 = vmatprep.subr.bf16.mxu0 0
    %443 = vmatpush1.bf16.msra.mxu0 0
    %444 = vmatprep.mubr.bf16.mxu0 0
    %445 = vmatmul.mubr.bf16.gmra.mrb[0].mxu0 %v407
    %v446 = vpop.f32.mrb[0].mxu0
    %v447 = vadd.f32 %v401, %v446
    %v448 = vpop.f32.mrb[0].mxu0
    %v449 = vpop.f32.mrb[0].mxu0
    %v450 = vpop.f32.mrb[0].mxu0
    %451 = vdwg.mxu0
    %452 = vrot.lane.b32.xlu0 %v130, 112
    %v453 = vpop.permute.xlu0 %452
    %454 = vrot.lane.b32.xlu0 %v131, 80
    %v455 = vpop.permute.xlu0 %454
    %v457 = vsel %vm139, %v453, 0
    %v460 = vsel %vm139, %v455, 0
    %462 = vmatprep.subr.bf16.mxu0 0
    %463 = vmatpush1.bf16.xpose.msra.mxu0 %v460
    %464 = vmatprep.subr.bf16.mxu0 0
    %465 = vmatpush1.bf16.xpose.msra.mxu0 0
    %466 = vmatprep.subr.bf16.mxu0 0
    %467 = vmatpush1.bf16.xpose.msra.mxu0 0
    %468 = vmatprep.subr.bf16.mxu0 0
    %469 = vmatpush1.bf16.xpose.msra.mxu0 0
    %470 = vmatprep.subr.bf16.mxu0 0
    %471 = vmatpush1.bf16.xpose.msra.mxu0 0
    %472 = vmatprep.subr.bf16.mxu0 0
    %473 = vmatpush1.bf16.xpose.msra.mxu0 0
    %474 = vmatprep.subr.bf16.mxu0 0
    %475 = vmatpush1.bf16.xpose.msra.mxu0 0
    %476 = vmatprep.subr.bf16.mxu0 0
    %477 = vmatpush1.bf16.xpose.msra.mxu0 0
    %478 = vmatprep.subr.bf16.mxu0 0
    %479 = vmatpush1.bf16.xpose.msra.mxu0 0
    %480 = vmatprep.subr.bf16.mxu0 0
    %481 = vmatpush1.bf16.xpose.msra.mxu0 0
    %482 = vmatprep.subr.bf16.mxu0 0
    %483 = vmatpush1.bf16.xpose.msra.mxu0 0
    %484 = vmatprep.subr.bf16.mxu0 0
    %485 = vmatpush1.bf16.xpose.msra.mxu0 0
    %486 = vmatprep.subr.bf16.mxu0 0
    %487 = vmatpush1.bf16.xpose.msra.mxu0 0
    %488 = vmatprep.subr.bf16.mxu0 0
    %489 = vmatpush1.bf16.xpose.msra.mxu0 0
    %490 = vmatprep.subr.bf16.mxu0 0
    %491 = vmatpush1.bf16.xpose.msra.mxu0 0
    %492 = vmatprep.subr.bf16.mxu0 0
    %493 = vmatpush1.bf16.xpose.msra.mxu0 0
    %494 = vmatprep.mubr.bf16.mxu0 0
    %495 = vmatmul.mubr.bf16.gmra.mrb[0].mxu0 %v457
    %v496 = vpop.f32.mrb[0].mxu0
    %v497 = vadd.f32 0.0, %v496
    %v498 = vpop.f32.mrb[0].mxu0
    %v499 = vpop.f32.mrb[0].mxu0
    %v500 = vpop.f32.mrb[0].mxu0
    %501 = vdwg.mxu0
    %v502 = vsel %vm139, %v497, -inf
    %503 = vmax.xlane.f32.xlu0 %v502
    %v504 = vpop.xlane.xlu0 %503
    %v505 = vsub.f32 %v497, %v504
    %v506 = vmul.f32 %v505, 1.442695
    %v507 = vpow.pop %v506
    %v508 = vsel %vm139, %v507, 0.0
    %509 = vadd.xlane.f32.xlu0 %v508
    %v510 = vpop.xlane.xlu0 %509
    %v511 = vrcp.pop %v510
    %v512 = vmul.f32 %v507, %v511
    %v513 = vpack.c.bf16 %v512, %v512
    %514 = vrot.lane.b32.xlu0 %v131, 48
    %v515 = vpop.permute.xlu0 %514
    %v517 = vsel %vm139, %v513, 0
    %v520 = vsel %vm203, %v515, 0
    %522 = vmatprep.subr.bf16.mxu0 0
    %523 = vmatpush1.bf16.msra.mxu0 %v520
    %524 = vmatprep.subr.bf16.mxu0 0
    %525 = vmatpush1.bf16.msra.mxu0 0
    %526 = vmatprep.subr.bf16.mxu0 0
    %527 = vmatpush1.bf16.msra.mxu0 0
    %528 = vmatprep.subr.bf16.mxu0 0
    %529 = vmatpush1.bf16.msra.mxu0 0
    %530 = vmatprep.subr.bf16.mxu0 0
    %531 = vmatpush1.bf16.msra.mxu0 0
    %532 = vmatprep.subr.bf16.mxu0 0
    %533 = vmatpush1.bf16.msra.mxu0 0
    %534 = vmatprep.subr.bf16.mxu0 0
    %535 = vmatpush1.bf16.msra.mxu0 0
    %536 = vmatprep.subr.bf16.mxu0 0
    %537 = vmatpush1.bf16.msra.mxu0 0
    %538 = vmatprep.subr.bf16.mxu0 0
    %539 = vmatpush1.bf16.msra.mxu0 0
    %540 = vmatprep.subr.bf16.mxu0 0
    %541 = vmatpush1.bf16.msra.mxu0 0
    %542 = vmatprep.subr.bf16.mxu0 0
    %543 = vmatpush1.bf16.msra.mxu0 0
    %544 = vmatprep.subr.bf16.mxu0 0
    %545 = vmatpush1.bf16.msra.mxu0 0
    %546 = vmatprep.subr.bf16.mxu0 0
    %547 = vmatpush1.bf16.msra.mxu0 0
    %548 = vmatprep.subr.bf16.mxu0 0
    %549 = vmatpush1.bf16.msra.mxu0 0
    %550 = vmatprep.subr.bf16.mxu0 0
    %551 = vmatpush1.bf16.msra.mxu0 0
    %552 = vmatprep.subr.bf16.mxu0 0
    %553 = vmatpush1.bf16.msra.mxu0 0
    %554 = vmatprep.mubr.bf16.mxu0 0
    %555 = vmatmul.mubr.bf16.gmra.mrb[0].mxu0 %v517
    %v556 = vpop.f32.mrb[0].mxu0
    %v557 = vadd.f32 0.0, %v556
    %v558 = vpop.f32.mrb[0].mxu0
    %v559 = vpop.f32.mrb[0].mxu0
    %v560 = vpop.f32.mrb[0].mxu0
    %561 = vdwg.mxu0
    %v562 = vpack.c.bf16 %v557, %v557
    %v564 = vsel %vm139, %v562, 0
    %v567 = vsel %vm203, %v134, 0
    %569 = vmatprep.subr.bf16.mxu0 0
    %570 = vmatpush1.bf16.msra.mxu0 %v567
    %571 = vmatprep.subr.bf16.mxu0 0
    %572 = vmatpush1.bf16.msra.mxu0 0
    %573 = vmatprep.subr.bf16.mxu0 0
    %574 = vmatpush1.bf16.msra.mxu0 0
    %575 = vmatprep.subr.bf16.mxu0 0
    %576 = vmatpush1.bf16.msra.mxu0 0
    %577 = vmatprep.subr.bf16.mxu0 0
    %578 = vmatpush1.bf16.msra.mxu0 0
    %579 = vmatprep.subr.bf16.mxu0 0
    %580 = vmatpush1.bf16.msra.mxu0 0
    %581 = vmatprep.subr.bf16.mxu0 0
    %582 = vmatpush1.bf16.msra.mxu0 0
    %583 = vmatprep.subr.bf16.mxu0 0
    %584 = vmatpush1.bf16.msra.mxu0 0
    %585 = vmatprep.subr.bf16.mxu0 0
    %586 = vmatpush1.bf16.msra.mxu0 0
    %587 = vmatprep.subr.bf16.mxu0 0
    %588 = vmatpush1.bf16.msra.mxu0 0
    %589 = vmatprep.subr.bf16.mxu0 0
    %590 = vmatpush1.bf16.msra.mxu0 0
    %591 = vmatprep.subr.bf16.mxu0 0
    %592 = vmatpush1.bf16.msra.mxu0 0
    %593 = vmatprep.subr.bf16.mxu0 0
    %594 = vmatpush1.bf16.msra.mxu0 0
    %595 = vmatprep.subr.bf16.mxu0 0
    %596 = vmatpush1.bf16.msra.mxu0 0
    %597 = vmatprep.subr.bf16.mxu0 0
    %598 = vmatpush1.bf16.msra.mxu0 0
    %599 = vmatprep.subr.bf16.mxu0 0
    %600 = vmatpush1.bf16.msra.mxu0 0
    %601 = vmatprep.mubr.bf16.mxu0 0
    %602 = vmatmul.mubr.bf16.gmra.mrb[0].mxu0 %v564
    %v603 = vpop.f32.mrb[0].mxu0
    %v604 = vadd.f32 0.0, %v603
    %v605 = vpop.f32.mrb[0].mxu0
    %v606 = vpop.f32.mrb[0].mxu0
    %v607 = vpop.f32.mrb[0].mxu0
    %608 = vdwg.mxu0
    %v609 = vadd.f32 %v447, %v604
    %610 = vrot.lane.b32.xlu0 %v130, 104
    %v611 = vpop.permute.xlu0 %610
    %612 = vrot.lane.b32.xlu0 %v131, 72
    %v613 = vpop.permute.xlu0 %612
    %v615 = vsel %vm139, %v611, 0
    %v618 = vsel %vm139, %v613, 0
    %620 = vmatprep.subr.bf16.mxu0 0
    %621 = vmatpush1.bf16.xpose.msra.mxu0 %v618
    %622 = vmatprep.subr.bf16.mxu0 0
    %623 = vmatpush1.bf16.xpose.msra.mxu0 0
    %624 = vmatprep.subr.bf16.mxu0 0
    %625 = vmatpush1.bf16.xpose.msra.mxu0 0
    %626 = vmatprep.subr.bf16.mxu0 0
    %627 = vmatpush1.bf16.xpose.msra.mxu0 0
    %628 = vmatprep.subr.bf16.mxu0 0
    %629 = vmatpush1.bf16.xpose.msra.mxu0 0
    %630 = vmatprep.subr.bf16.mxu0 0
    %631 = vmatpush1.bf16.xpose.msra.mxu0 0
    %632 = vmatprep.subr.bf16.mxu0 0
    %633 = vmatpush1.bf16.xpose.msra.mxu0 0
    %634 = vmatprep.subr.bf16.mxu0 0
    %635 = vmatpush1.bf16.xpose.msra.mxu0 0
    %636 = vmatprep.subr.bf16.mxu0 0
    %637 = vmatpush1.bf16.xpose.msra.mxu0 0
    %638 = vmatprep.subr.bf16.mxu0 0
    %639 = vmatpush1.bf16.xpose.msra.mxu0 0
    %640 = vmatprep.subr.bf16.mxu0 0
    %641 = vmatpush1.bf16.xpose.msra.mxu0 0
    %642 = vmatprep.subr.bf16.mxu0 0
    %643 = vmatpush1.bf16.xpose.msra.mxu0 0
    %644 = vmatprep.subr.bf16.mxu0 0
    %645 = vmatpush1.bf16.xpose.msra.mxu0 0
    %646 = vmatprep.subr.bf16.mxu0 0
    %647 = vmatpush1.bf16.xpose.msra.mxu0 0
    %648 = vmatprep.subr.bf16.mxu0 0
    %649 = vmatpush1.bf16.xpose.msra.mxu0 0
    %650 = vmatprep.subr.bf16.mxu0 0
    %651 = vmatpush1.bf16.xpose.msra.mxu0 0
    %652 = vmatprep.mubr.bf16.mxu0 0
    %653 = vmatmul.mubr.bf16.gmra.mrb[0].mxu0 %v615
    %v654 = vpop.f32.mrb[0].mxu0
    %v655 = vadd.f32 0.0, %v654
    %v656 = vpop.f32.mrb[0].mxu0
    %v657 = vpop.f32.mrb[0].mxu0
    %v658 = vpop.f32.mrb[0].mxu0
    %659 = vdwg.mxu0
    %v660 = vsel %vm139, %v655, -inf
    %661 = vmax.xlane.f32.xlu0 %v660
    %v662 = vpop.xlane.xlu0 %661
    %v663 = vsub.f32 %v655, %v662
    %v664 = vmul.f32 %v663, 1.442695
    %v665 = vpow.pop %v664
    %v666 = vsel %vm139, %v665, 0.0
    %667 = vadd.xlane.f32.xlu0 %v666
    %v668 = vpop.xlane.xlu0 %667
    %v669 = vrcp.pop %v668
    %v670 = vmul.f32 %v665, %v669
    %v671 = vpack.c.bf16 %v670, %v670
    %672 = vrot.lane.b32.xlu0 %v131, 40
    %v673 = vpop.permute.xlu0 %672
    %v675 = vsel %vm139, %v671, 0
    %v678 = vsel %vm203, %v673, 0
    %680 = vmatprep.subr.bf16.mxu0 0
    %681 = vmatpush1.bf16.msra.mxu0 %v678
    %682 = vmatprep.subr.bf16.mxu0 0
    %683 = vmatpush1.bf16.msra.mxu0 0
    %684 = vmatprep.subr.bf16.mxu0 0
    %685 = vmatpush1.bf16.msra.mxu0 0
    %686 = vmatprep.subr.bf16.mxu0 0
    %687 = vmatpush1.bf16.msra.mxu0 0
    %688 = vmatprep.subr.bf16.mxu0 0
    %689 = vmatpush1.bf16.msra.mxu0 0
    %690 = vmatprep.subr.bf16.mxu0 0
    %691 = vmatpush1.bf16.msra.mxu0 0
    %692 = vmatprep.subr.bf16.mxu0 0
    %693 = vmatpush1.bf16.msra.mxu0 0
    %694 = vmatprep.subr.bf16.mxu0 0
    %695 = vmatpush1.bf16.msra.mxu0 0
    %696 = vmatprep.subr.bf16.mxu0 0
    %697 = vmatpush1.bf16.msra.mxu0 0
    %698 = vmatprep.subr.bf16.mxu0 0
    %699 = vmatpush1.bf16.msra.mxu0 0
    %700 = vmatprep.subr.bf16.mxu0 0
    %701 = vmatpush1.bf16.msra.mxu0 0
    %702 = vmatprep.subr.bf16.mxu0 0
    %703 = vmatpush1.bf16.msra.mxu0 0
    %704 = vmatprep.subr.bf16.mxu0 0
    %705 = vmatpush1.bf16.msra.mxu0 0
    %706 = vmatprep.subr.bf16.mxu0 0
    %707 = vmatpush1.bf16.msra.mxu0 0
    %708 = vmatprep.subr.bf16.mxu0 0
    %709 = vmatpush1.bf16.msra.mxu0 0
    %710 = vmatprep.subr.bf16.mxu0 0
    %711 = vmatpush1.bf16.msra.mxu0 0
    %712 = vmatprep.mubr.bf16.mxu0 0
    %713 = vmatmul.mubr.bf16.gmra.mrb[0].mxu0 %v675
    %v714 = vpop.f32.mrb[0].mxu0
    %v715 = vadd.f32 0.0, %v714
    %v716 = vpop.f32.mrb[0].mxu0
    %v717 = vpop.f32.mrb[0].mxu0
    %v718 = vpop.f32.mrb[0].mxu0
    %719 = vdwg.mxu0
    %v720 = vpack.c.bf16 %v715, %v715
    %v722 = vsel %vm139, %v720, 0
    %v725 = vsel %vm203, %v135, 0
    %727 = vmatprep.subr.bf16.mxu0 0
    %728 = vmatpush1.bf16.msra.mxu0 %v725
    %729 = vmatprep.subr.bf16.mxu0 0
    %730 = vmatpush1.bf16.msra.mxu0 0
    %731 = vmatprep.subr.bf16.mxu0 0
    %732 = vmatpush1.bf16.msra.mxu0 0
    %733 = vmatprep.subr.bf16.mxu0 0
    %734 = vmatpush1.bf16.msra.mxu0 0
    %735 = vmatprep.subr.bf16.mxu0 0
    %736 = vmatpush1.bf16.msra.mxu0 0
    %737 = vmatprep.subr.bf16.mxu0 0
    %738 = vmatpush1.bf16.msra.mxu0 0
    %739 = vmatprep.subr.bf16.mxu0 0
    %740 = vmatpush1.bf16.msra.mxu0 0
    %741 = vmatprep.subr.bf16.mxu0 0
    %742 = vmatpush1.bf16.msra.mxu0 0
    %743 = vmatprep.subr.bf16.mxu0 0
    %744 = vmatpush1.bf16.msra.mxu0 0
    %745 = vmatprep.subr.bf16.mxu0 0
    %746 = vmatpush1.bf16.msra.mxu0 0
    %747 = vmatprep.subr.bf16.mxu0 0
    %748 = vmatpush1.bf16.msra.mxu0 0
    %749 = vmatprep.subr.bf16.mxu0 0
    %750 = vmatpush1.bf16.msra.mxu0 0
    %751 = vmatprep.subr.bf16.mxu0 0
    %752 = vmatpush1.bf16.msra.mxu0 0
    %753 = vmatprep.subr.bf16.mxu0 0
    %754 = vmatpush1.bf16.msra.mxu0 0
    %755 = vmatprep.subr.bf16.mxu0 0
    %756 = vmatpush1.bf16.msra.mxu0 0
    %757 = vmatprep.subr.bf16.mxu0 0
    %758 = vmatpush1.bf16.msra.mxu0 0
    %759 = vmatprep.mubr.bf16.mxu0 0
    %760 = vmatmul.mubr.bf16.gmra.mrb[0].mxu0 %v722
    %v761 = vpop.f32.mrb[0].mxu0
    %v762 = vadd.f32 0.0, %v761
    %v763 = vpop.f32.mrb[0].mxu0
    %v764 = vpop.f32.mrb[0].mxu0
    %v765 = vpop.f32.mrb[0].mxu0
    %766 = vdwg.mxu0
    %v767 = vadd.f32 %v609, %v762
    %v768 = vrot.slane %v130, 4
    %v769 = vrot.slane %v131, 4
    %770 = vrot.lane.b32.xlu0 %v769, 96
    %v771 = vpop.permute.xlu0 %770
    %v773 = vsel %vm139, %v768, 0
    %v776 = vsel %vm139, %v771, 0
    %778 = vmatprep.subr.bf16.mxu0 0
    %779 = vmatpush1.bf16.xpose.msra.mxu0 %v776
    %780 = vmatprep.subr.bf16.mxu0 0
    %781 = vmatpush1.bf16.xpose.msra.mxu0 0
    %782 = vmatprep.subr.bf16.mxu0 0
    %783 = vmatpush1.bf16.xpose.msra.mxu0 0
    %784 = vmatprep.subr.bf16.mxu0 0
    %785 = vmatpush1.bf16.xpose.msra.mxu0 0
    %786 = vmatprep.subr.bf16.mxu0 0
    %787 = vmatpush1.bf16.xpose.msra.mxu0 0
    %788 = vmatprep.subr.bf16.mxu0 0
    %789 = vmatpush1.bf16.xpose.msra.mxu0 0
    %790 = vmatprep.subr.bf16.mxu0 0
    %791 = vmatpush1.bf16.xpose.msra.mxu0 0
    %792 = vmatprep.subr.bf16.mxu0 0
    %793 = vmatpush1.bf16.xpose.msra.mxu0 0
    %794 = vmatprep.subr.bf16.mxu0 0
    %795 = vmatpush1.bf16.xpose.msra.mxu0 0
    %796 = vmatprep.subr.bf16.mxu0 0
    %797 = vmatpush1.bf16.xpose.msra.mxu0 0
    %798 = vmatprep.subr.bf16.mxu0 0
    %799 = vmatpush1.bf16.xpose.msra.mxu0 0
    %800 = vmatprep.subr.bf16.mxu0 0
    %801 = vmatpush1.bf16.xpose.msra.mxu0 0
    %802 = vmatprep.subr.bf16.mxu0 0
    %803 = vmatpush1.bf16.xpose.msra.mxu0 0
    %804 = vmatprep.subr.bf16.mxu0 0
    %805 = vmatpush1.bf16.xpose.msra.mxu0 0
    %806 = vmatprep.subr.bf16.mxu0 0
    %807 = vmatpush1.bf16.xpose.msra.mxu0 0
    %808 = vmatprep.subr.bf16.mxu0 0
    %809 = vmatpush1.bf16.xpose.msra.mxu0 0
    %810 = vmatprep.mubr.bf16.mxu0 0
    %811 = vmatmul.mubr.bf16.gmra.mrb[0].mxu0 %v773
    %v812 = vpop.f32.mrb[0].mxu0
    %v813 = vadd.f32 0.0, %v812
    %v814 = vpop.f32.mrb[0].mxu0
    %v815 = vpop.f32.mrb[0].mxu0
    %v816 = vpop.f32.mrb[0].mxu0
    %817 = vdwg.mxu0
    %v818 = vsel %vm139, %v813, -inf
    %819 = vmax.xlane.f32.xlu0 %v818
    %v820 = vpop.xlane.xlu0 %819
    %v821 = vsub.f32 %v813, %v820
    %v822 = vmul.f32 %v821, 1.442695
    %v823 = vpow.pop %v822
    %v824 = vsel %vm139, %v823, 0.0
    %825 = vadd.xlane.f32.xlu0 %v824
    %v826 = vpop.xlane.xlu0 %825
    %v827 = vrcp.pop %v826
    %v828 = vmul.f32 %v823, %v827
    %v829 = vpack.c.bf16 %v828, %v828
    %830 = vrot.lane.b32.xlu0 %v769, 64
    %v831 = vpop.permute.xlu0 %830
    %v833 = vsel %vm139, %v829, 0
    %v836 = vsel %vm203, %v831, 0
    %838 = vmatprep.subr.bf16.mxu0 0
    %839 = vmatpush1.bf16.msra.mxu0 %v836
    %840 = vmatprep.subr.bf16.mxu0 0
    %841 = vmatpush1.bf16.msra.mxu0 0
    %842 = vmatprep.subr.bf16.mxu0 0
    %843 = vmatpush1.bf16.msra.mxu0 0
    %844 = vmatprep.subr.bf16.mxu0 0
    %845 = vmatpush1.bf16.msra.mxu0 0
    %846 = vmatprep.subr.bf16.mxu0 0
    %847 = vmatpush1.bf16.msra.mxu0 0
    %848 = vmatprep.subr.bf16.mxu0 0
    %849 = vmatpush1.bf16.msra.mxu0 0
    %850 = vmatprep.subr.bf16.mxu0 0
    %851 = vmatpush1.bf16.msra.mxu0 0
    %852 = vmatprep.subr.bf16.mxu0 0
    %853 = vmatpush1.bf16.msra.mxu0 0
    %854 = vmatprep.subr.bf16.mxu0 0
    %855 = vmatpush1.bf16.msra.mxu0 0
    %856 = vmatprep.subr.bf16.mxu0 0
    %857 = vmatpush1.bf16.msra.mxu0 0
    %858 = vmatprep.subr.bf16.mxu0 0
    %859 = vmatpush1.bf16.msra.mxu0 0
    %860 = vmatprep.subr.bf16.mxu0 0
    %861 = vmatpush1.bf16.msra.mxu0 0
    %862 = vmatprep.subr.bf16.mxu0 0
    %863 = vmatpush1.bf16.msra.mxu0 0
    %864 = vmatprep.subr.bf16.mxu0 0
    %865 = vmatpush1.bf16.msra.mxu0 0
    %866 = vmatprep.subr.bf16.mxu0 0
    %867 = vmatpush1.bf16.msra.mxu0 0
    %868 = vmatprep.subr.bf16.mxu0 0
    %869 = vmatpush1.bf16.msra.mxu0 0
    %870 = vmatprep.mubr.bf16.mxu0 0
    %871 = vmatmul.mubr.bf16.gmra.mrb[0].mxu0 %v833
    %v872 = vpop.f32.mrb[0].mxu0
    %v873 = vadd.f32 0.0, %v872
    %v874 = vpop.f32.mrb[0].mxu0
    %v875 = vpop.f32.mrb[0].mxu0
    %v876 = vpop.f32.mrb[0].mxu0
    %877 = vdwg.mxu0
    %v878 = vpack.c.bf16 %v873, %v873
    %879 = vrot.lane.b32.xlu0 %v768, 120
    %v880 = vpop.permute.xlu0 %879
    %881 = vrot.lane.b32.xlu0 %v769, 88
    %v882 = vpop.permute.xlu0 %881
    %v884 = vsel %vm139, %v880, 0
    %v887 = vsel %vm139, %v882, 0
    %889 = vmatprep.subr.bf16.mxu0 0
    %890 = vmatpush1.bf16.xpose.msra.mxu0 %v887
    %891 = vmatprep.subr.bf16.mxu0 0
    %892 = vmatpush1.bf16.xpose.msra.mxu0 0
    %893 = vmatprep.subr.bf16.mxu0 0
    %894 = vmatpush1.bf16.xpose.msra.mxu0 0
    %895 = vmatprep.subr.bf16.mxu0 0
    %896 = vmatpush1.bf16.xpose.msra.mxu0 0
    %897 = vmatprep.subr.bf16.mxu0 0
    %898 = vmatpush1.bf16.xpose.msra.mxu0 0
    %899 = vmatprep.subr.bf16.mxu0 0
    %900 = vmatpush1.bf16.xpose.msra.mxu0 0
    %901 = vmatprep.subr.bf16.mxu0 0
    %902 = vmatpush1.bf16.xpose.msra.mxu0 0
    %903 = vmatprep.subr.bf16.mxu0 0
    %904 = vmatpush1.bf16.xpose.msra.mxu0 0
    %905 = vmatprep.subr.bf16.mxu0 0
    %906 = vmatpush1.bf16.xpose.msra.mxu0 0
    %907 = vmatprep.subr.bf16.mxu0 0
    %908 = vmatpush1.bf16.xpose.msra.mxu0 0
    %909 = vmatprep.subr.bf16.mxu0 0
    %910 = vmatpush1.bf16.xpose.msra.mxu0 0
    %911 = vmatprep.subr.bf16.mxu0 0
    %912 = vmatpush1.bf16.xpose.msra.mxu0 0
    %913 = vmatprep.subr.bf16.mxu0 0
    %914 = vmatpush1.bf16.xpose.msra.mxu0 0
    %915 = vmatprep.subr.bf16.mxu0 0
    %916 = vmatpush1.bf16.xpose.msra.mxu0 0
    %917 = vmatprep.subr.bf16.mxu0 0
    %918 = vmatpush1.bf16.xpose.msra.mxu0 0
    %919 = vmatprep.subr.bf16.mxu0 0
    %920 = vmatpush1.bf16.xpose.msra.mxu0 0
    %921 = vmatprep.mubr.bf16.mxu0 0
    %922 = vmatmul.mubr.bf16.gmra.mrb[0].mxu0 %v884
    %v923 = vpop.f32.mrb[0].mxu0
    %v924 = vadd.f32 0.0, %v923
    %v925 = vpop.f32.mrb[0].mxu0
    %v926 = vpop.f32.mrb[0].mxu0
    %v927 = vpop.f32.mrb[0].mxu0
    %928 = vdwg.mxu0
    %v929 = vsel %vm139, %v924, -inf
    %930 = vmax.xlane.f32.xlu0 %v929
    %v931 = vpop.xlane.xlu0 %930
    %v932 = vsub.f32 %v924, %v931
    %v933 = vmul.f32 %v932, 1.442695
    %v934 = vpow.pop %v933
    %v935 = vsel %vm139, %v934, 0.0
    %936 = vadd.xlane.f32.xlu0 %v935
    %v937 = vpop.xlane.xlu0 %936
    %v938 = vrcp.pop %v937
    %v939 = vmul.f32 %v934, %v938
    %v940 = vpack.c.bf16 %v939, %v939
    %941 = vrot.lane.b32.xlu0 %v769, 56
    %v942 = vpop.permute.xlu0 %941
    %v944 = vsel %vm139, %v940, 0
    %v947 = vsel %vm203, %v942, 0
    %949 = vmatprep.subr.bf16.mxu0 0
    %950 = vmatpush1.bf16.msra.mxu0 %v947
    %951 = vmatprep.subr.bf16.mxu0 0
    %952 = vmatpush1.bf16.msra.mxu0 0
    %953 = vmatprep.subr.bf16.mxu0 0
    %954 = vmatpush1.bf16.msra.mxu0 0
    %955 = vmatprep.subr.bf16.mxu0 0
    %956 = vmatpush1.bf16.msra.mxu0 0
    %957 = vmatprep.subr.bf16.mxu0 0
    %958 = vmatpush1.bf16.msra.mxu0 0
    %959 = vmatprep.subr.bf16.mxu0 0
    %960 = vmatpush1.bf16.msra.mxu0 0
    %961 = vmatprep.subr.bf16.mxu0 0
    %962 = vmatpush1.bf16.msra.mxu0 0
    %963 = vmatprep.subr.bf16.mxu0 0
    %964 = vmatpush1.bf16.msra.mxu0 0
    %965 = vmatprep.subr.bf16.mxu0 0
    %966 = vmatpush1.bf16.msra.mxu0 0
    %967 = vmatprep.subr.bf16.mxu0 0
    %968 = vmatpush1.bf16.msra.mxu0 0
    %969 = vmatprep.subr.bf16.mxu0 0
    %970 = vmatpush1.bf16.msra.mxu0 0
    %971 = vmatprep.subr.bf16.mxu0 0
    %972 = vmatpush1.bf16.msra.mxu0 0
    %973 = vmatprep.subr.bf16.mxu0 0
    %974 = vmatpush1.bf16.msra.mxu0 0
    %975 = vmatprep.subr.bf16.mxu0 0
    %976 = vmatpush1.bf16.msra.mxu0 0
    %977 = vmatprep.subr.bf16.mxu0 0
    %978 = vmatpush1.bf16.msra.mxu0 0
    %979 = vmatprep.subr.bf16.mxu0 0
    %980 = vmatpush1.bf16.msra.mxu0 0
    %981 = vmatprep.mubr.bf16.mxu0 0
    %982 = vmatmul.mubr.bf16.gmra.mrb[0].mxu0 %v944
    %v983 = vpop.f32.mrb[0].mxu0
    %v984 = vadd.f32 0.0, %v983
    %v985 = vpop.f32.mrb[0].mxu0
    %v986 = vpop.f32.mrb[0].mxu0
    %v987 = vpop.f32.mrb[0].mxu0
    %988 = vdwg.mxu0
    %v989 = vpack.c.bf16 %v984, %v984
    %v991 = vsel %vm139, %v989, 0
    %993 = vmatprep.subr.bf16.mxu0 0
    %994 = vmatpush1.bf16.msra.mxu0 %v364
    %995 = vmatprep.subr.bf16.mxu0 0
    %996 = vmatpush1.bf16.msra.mxu0 0
    %997 = vmatprep.subr.bf16.mxu0 0
    %998 = vmatpush1.bf16.msra.mxu0 0
    %999 = vmatprep.subr.bf16.mxu0 0
    %1000 = vmatpush1.bf16.msra.mxu0 0
    %1001 = vmatprep.subr.bf16.mxu0 0
    %1002 = vmatpush1.bf16.msra.mxu0 0
    %1003 = vmatprep.subr.bf16.mxu0 0
    %1004 = vmatpush1.bf16.msra.mxu0 0
    %1005 = vmatprep.subr.bf16.mxu0 0
    %1006 = vmatpush1.bf16.msra.mxu0 0
    %1007 = vmatprep.subr.bf16.mxu0 0
    %1008 = vmatpush1.bf16.msra.mxu0 0
    %1009 = vmatprep.subr.bf16.mxu0 0
    %1010 = vmatpush1.bf16.msra.mxu0 0
    %1011 = vmatprep.subr.bf16.mxu0 0
    %1012 = vmatpush1.bf16.msra.mxu0 0
    %1013 = vmatprep.subr.bf16.mxu0 0
    %1014 = vmatpush1.bf16.msra.mxu0 0
    %1015 = vmatprep.subr.bf16.mxu0 0
    %1016 = vmatpush1.bf16.msra.mxu0 0
    %1017 = vmatprep.subr.bf16.mxu0 0
    %1018 = vmatpush1.bf16.msra.mxu0 0
    %1019 = vmatprep.subr.bf16.mxu0 0
    %1020 = vmatpush1.bf16.msra.mxu0 0
    %1021 = vmatprep.subr.bf16.mxu0 0
    %1022 = vmatpush1.bf16.msra.mxu0 0
    %1023 = vmatprep.subr.bf16.mxu0 0
    %1024 = vmatpush1.bf16.msra.mxu0 0
    %1025 = vmatprep.mubr.bf16.mxu0 0
    %1026 = vmatmul.mubr.bf16.gmra.mrb[0].mxu0 %v991
    %v1027 = vpop.f32.mrb[0].mxu0
    %v1028 = vadd.f32 0.0, %v1027
    %v1029 = vpop.f32.mrb[0].mxu0
    %v1030 = vpop.f32.mrb[0].mxu0
    %v1031 = vpop.f32.mrb[0].mxu0
    %1032 = vdwg.mxu0
    %v1034 = vsel %vm139, %v878, 0
    %1036 = vmatprep.subr.bf16.mxu0 0
    %1037 = vmatpush1.bf16.msra.mxu0 %v410
    %1038 = vmatprep.subr.bf16.mxu0 0
    %1039 = vmatpush1.bf16.msra.mxu0 0
    %1040 = vmatprep.subr.bf16.mxu0 0
    %1041 = vmatpush1.bf16.msra.mxu0 0
    %1042 = vmatprep.subr.bf16.mxu0 0
    %1043 = vmatpush1.bf16.msra.mxu0 0
    %1044 = vmatprep.subr.bf16.mxu0 0
    %1045 = vmatpush1.bf16.msra.mxu0 0
    %1046 = vmatprep.subr.bf16.mxu0 0
    %1047 = vmatpush1.bf16.msra.mxu0 0
    %1048 = vmatprep.subr.bf16.mxu0 0
    %1049 = vmatpush1.bf16.msra.mxu0 0
    %1050 = vmatprep.subr.bf16.mxu0 0
    %1051 = vmatpush1.bf16.msra.mxu0 0
    %1052 = vmatprep.subr.bf16.mxu0 0
    %1053 = vmatpush1.bf16.msra.mxu0 0
    %1054 = vmatprep.subr.bf16.mxu0 0
    %1055 = vmatpush1.bf16.msra.mxu0 0
    %1056 = vmatprep.subr.bf16.mxu0 0
    %1057 = vmatpush1.bf16.msra.mxu0 0
    %1058 = vmatprep.subr.bf16.mxu0 0
    %1059 = vmatpush1.bf16.msra.mxu0 0
    %1060 = vmatprep.subr.bf16.mxu0 0
    %1061 = vmatpush1.bf16.msra.mxu0 0
    %1062 = vmatprep.subr.bf16.mxu0 0
    %1063 = vmatpush1.bf16.msra.mxu0 0
    %1064 = vmatprep.subr.bf16.mxu0 0
    %1065 = vmatpush1.bf16.msra.mxu0 0
    %1066 = vmatprep.subr.bf16.mxu0 0
    %1067 = vmatpush1.bf16.msra.mxu0 0
    %1068 = vmatprep.mubr.bf16.mxu0 0
    %1069 = vmatmul.mubr.bf16.gmra.mrb[0].mxu0 %v1034
    %v1070 = vpop.f32.mrb[0].mxu0
    %v1071 = vadd.f32 %v1028, %v1070
    %v1072 = vpop.f32.mrb[0].mxu0
    %v1073 = vpop.f32.mrb[0].mxu0
    %v1074 = vpop.f32.mrb[0].mxu0
    %1075 = vdwg.mxu0
    %1076 = vrot.lane.b32.xlu0 %v768, 112
    %v1077 = vpop.permute.xlu0 %1076
    %1078 = vrot.lane.b32.xlu0 %v769, 80
    %v1079 = vpop.permute.xlu0 %1078
    %v1081 = vsel %vm139, %v1077, 0
    %v1084 = vsel %vm139, %v1079, 0
    %1086 = vmatprep.subr.bf16.mxu0 0
    %1087 = vmatpush1.bf16.xpose.msra.mxu0 %v1084
    %1088 = vmatprep.subr.bf16.mxu0 0
    %1089 = vmatpush1.bf16.xpose.msra.mxu0 0
    %1090 = vmatprep.subr.bf16.mxu0 0
    %1091 = vmatpush1.bf16.xpose.msra.mxu0 0
    %1092 = vmatprep.subr.bf16.mxu0 0
    %1093 = vmatpush1.bf16.xpose.msra.mxu0 0
    %1094 = vmatprep.subr.bf16.mxu0 0
    %1095 = vmatpush1.bf16.xpose.msra.mxu0 0
    %1096 = vmatprep.subr.bf16.mxu0 0
    %1097 = vmatpush1.bf16.xpose.msra.mxu0 0
    %1098 = vmatprep.subr.bf16.mxu0 0
    %1099 = vmatpush1.bf16.xpose.msra.mxu0 0
    %1100 = vmatprep.subr.bf16.mxu0 0
    %1101 = vmatpush1.bf16.xpose.msra.mxu0 0
    %1102 = vmatprep.subr.bf16.mxu0 0
    %1103 = vmatpush1.bf16.xpose.msra.mxu0 0
    %1104 = vmatprep.subr.bf16.mxu0 0
    %1105 = vmatpush1.bf16.xpose.msra.mxu0 0
    %1106 = vmatprep.subr.bf16.mxu0 0
    %1107 = vmatpush1.bf16.xpose.msra.mxu0 0
    %1108 = vmatprep.subr.bf16.mxu0 0
    %1109 = vmatpush1.bf16.xpose.msra.mxu0 0
    %1110 = vmatprep.subr.bf16.mxu0 0
    %1111 = vmatpush1.bf16.xpose.msra.mxu0 0
    %1112 = vmatprep.subr.bf16.mxu0 0
    %1113 = vmatpush1.bf16.xpose.msra.mxu0 0
    %1114 = vmatprep.subr.bf16.mxu0 0
    %1115 = vmatpush1.bf16.xpose.msra.mxu0 0
    %1116 = vmatprep.subr.bf16.mxu0 0
    %1117 = vmatpush1.bf16.xpose.msra.mxu0 0
    %1118 = vmatprep.mubr.bf16.mxu0 0
    %1119 = vmatmul.mubr.bf16.gmra.mrb[0].mxu0 %v1081
    %v1120 = vpop.f32.mrb[0].mxu0
    %v1121 = vadd.f32 0.0, %v1120
    %v1122 = vpop.f32.mrb[0].mxu0
    %v1123 = vpop.f32.mrb[0].mxu0
    %v1124 = vpop.f32.mrb[0].mxu0
    %1125 = vdwg.mxu0
    %v1126 = vsel %vm139, %v1121, -inf
    %1127 = vmax.xlane.f32.xlu0 %v1126
    %v1128 = vpop.xlane.xlu0 %1127
    %v1129 = vsub.f32 %v1121, %v1128
    %v1130 = vmul.f32 %v1129, 1.442695
    %v1131 = vpow.pop %v1130
    %v1132 = vsel %vm139, %v1131, 0.0
    %1133 = vadd.xlane.f32.xlu0 %v1132
    %v1134 = vpop.xlane.xlu0 %1133
    %v1135 = vrcp.pop %v1134
    %v1136 = vmul.f32 %v1131, %v1135
    %v1137 = vpack.c.bf16 %v1136, %v1136
    %1138 = vrot.lane.b32.xlu0 %v769, 48
    %v1139 = vpop.permute.xlu0 %1138
    %v1141 = vsel %vm139, %v1137, 0
    %v1144 = vsel %vm203, %v1139, 0
    %1146 = vmatprep.subr.bf16.mxu0 0
    %1147 = vmatpush1.bf16.msra.mxu0 %v1144
    %1148 = vmatprep.subr.bf16.mxu0 0
    %1149 = vmatpush1.bf16.msra.mxu0 0
    %1150 = vmatprep.subr.bf16.mxu0 0
    %1151 = vmatpush1.bf16.msra.mxu0 0
    %1152 = vmatprep.subr.bf16.mxu0 0
    %1153 = vmatpush1.bf16.msra.mxu0 0
    %1154 = vmatprep.subr.bf16.mxu0 0
    %1155 = vmatpush1.bf16.msra.mxu0 0
    %1156 = vmatprep.subr.bf16.mxu0 0
    %1157 = vmatpush1.bf16.msra.mxu0 0
    %1158 = vmatprep.subr.bf16.mxu0 0
    %1159 = vmatpush1.bf16.msra.mxu0 0
    %1160 = vmatprep.subr.bf16.mxu0 0
    %1161 = vmatpush1.bf16.msra.mxu0 0
    %1162 = vmatprep.subr.bf16.mxu0 0
    %1163 = vmatpush1.bf16.msra.mxu0 0
    %1164 = vmatprep.subr.bf16.mxu0 0
    %1165 = vmatpush1.bf16.msra.mxu0 0
    %1166 = vmatprep.subr.bf16.mxu0 0
    %1167 = vmatpush1.bf16.msra.mxu0 0
    %1168 = vmatprep.subr.bf16.mxu0 0
    %1169 = vmatpush1.bf16.msra.mxu0 0
    %1170 = vmatprep.subr.bf16.mxu0 0
    %1171 = vmatpush1.bf16.msra.mxu0 0
    %1172 = vmatprep.subr.bf16.mxu0 0
    %1173 = vmatpush1.bf16.msra.mxu0 0
    %1174 = vmatprep.subr.bf16.mxu0 0
    %1175 = vmatpush1.bf16.msra.mxu0 0
    %1176 = vmatprep.subr.bf16.mxu0 0
    %1177 = vmatpush1.bf16.msra.mxu0 0
    %1178 = vmatprep.mubr.bf16.mxu0 0
    %1179 = vmatmul.mubr.bf16.gmra.mrb[0].mxu0 %v1141
    %v1180 = vpop.f32.mrb[0].mxu0
    %v1181 = vadd.f32 0.0, %v1180
    %v1182 = vpop.f32.mrb[0].mxu0
    %v1183 = vpop.f32.mrb[0].mxu0
    %v1184 = vpop.f32.mrb[0].mxu0
    %1185 = vdwg.mxu0
    %v1186 = vpack.c.bf16 %v1181, %v1181
    %v1188 = vsel %vm139, %v1186, 0
    %1190 = vmatprep.subr.bf16.mxu0 0
    %1191 = vmatpush1.bf16.msra.mxu0 %v567
    %1192 = vmatprep.subr.bf16.mxu0 0
    %1193 = vmatpush1.bf16.msra.mxu0 0
    %1194 = vmatprep.subr.bf16.mxu0 0
    %1195 = vmatpush1.bf16.msra.mxu0 0
    %1196 = vmatprep.subr.bf16.mxu0 0
    %1197 = vmatpush1.bf16.msra.mxu0 0
    %1198 = vmatprep.subr.bf16.mxu0 0
    %1199 = vmatpush1.bf16.msra.mxu0 0
    %1200 = vmatprep.subr.bf16.mxu0 0
    %1201 = vmatpush1.bf16.msra.mxu0 0
    %1202 = vmatprep.subr.bf16.mxu0 0
    %1203 = vmatpush1.bf16.msra.mxu0 0
    %1204 = vmatprep.subr.bf16.mxu0 0
    %1205 = vmatpush1.bf16.msra.mxu0 0
    %1206 = vmatprep.subr.bf16.mxu0 0
    %1207 = vmatpush1.bf16.msra.mxu0 0
    %1208 = vmatprep.subr.bf16.mxu0 0
    %1209 = vmatpush1.bf16.msra.mxu0 0
    %1210 = vmatprep.subr.bf16.mxu0 0
    %1211 = vmatpush1.bf16.msra.mxu0 0
    %1212 = vmatprep.subr.bf16.mxu0 0
    %1213 = vmatpush1.bf16.msra.mxu0 0
    %1214 = vmatprep.subr.bf16.mxu0 0
    %1215 = vmatpush1.bf16.msra.mxu0 0
    %1216 = vmatprep.subr.bf16.mxu0 0
    %1217 = vmatpush1.bf16.msra.mxu0 0
    %1218 = vmatprep.subr.bf16.mxu0 0
    %1219 = vmatpush1.bf16.msra.mxu0 0
    %1220 = vmatprep.subr.bf16.mxu0 0
    %1221 = vmatpush1.bf16.msra.mxu0 0
    %1222 = vmatprep.mubr.bf16.mxu0 0
    %1223 = vmatmul.mubr.bf16.gmra.mrb[0].mxu0 %v1188
    %v1224 = vpop.f32.mrb[0].mxu0
    %v1225 = vadd.f32 0.0, %v1224
    %v1226 = vpop.f32.mrb[0].mxu0
    %v1227 = vpop.f32.mrb[0].mxu0
    %v1228 = vpop.f32.mrb[0].mxu0
    %1229 = vdwg.mxu0
    %v1230 = vadd.f32 %v1071, %v1225
    %1231 = vrot.lane.b32.xlu0 %v768, 104
    %v1232 = vpop.permute.xlu0 %1231
    %1233 = vrot.lane.b32.xlu0 %v769, 72
    %v1234 = vpop.permute.xlu0 %1233
    %v1236 = vsel %vm139, %v1232, 0
    %v1239 = vsel %vm139, %v1234, 0
    %1241 = vmatprep.subr.bf16.mxu0 0
    %1242 = vmatpush1.bf16.xpose.msra.mxu0 %v1239
    %1243 = vmatprep.subr.bf16.mxu0 0
    %1244 = vmatpush1.bf16.xpose.msra.mxu0 0
    %1245 = vmatprep.subr.bf16.mxu0 0
    %1246 = vmatpush1.bf16.xpose.msra.mxu0 0
    %1247 = vmatprep.subr.bf16.mxu0 0
    %1248 = vmatpush1.bf16.xpose.msra.mxu0 0
    %1249 = vmatprep.subr.bf16.mxu0 0
    %1250 = vmatpush1.bf16.xpose.msra.mxu0 0
    %1251 = vmatprep.subr.bf16.mxu0 0
    %1252 = vmatpush1.bf16.xpose.msra.mxu0 0
    %1253 = vmatprep.subr.bf16.mxu0 0
    %1254 = vmatpush1.bf16.xpose.msra.mxu0 0
    %1255 = vmatprep.subr.bf16.mxu0 0
    %1256 = vmatpush1.bf16.xpose.msra.mxu0 0
    %1257 = vmatprep.subr.bf16.mxu0 0
    %1258 = vmatpush1.bf16.xpose.msra.mxu0 0
    %1259 = vmatprep.subr.bf16.mxu0 0
    %1260 = vmatpush1.bf16.xpose.msra.mxu0 0
    %1261 = vmatprep.subr.bf16.mxu0 0
    %1262 = vmatpush1.bf16.xpose.msra.mxu0 0
    %1263 = vmatprep.subr.bf16.mxu0 0
    %1264 = vmatpush1.bf16.xpose.msra.mxu0 0
    %1265 = vmatprep.subr.bf16.mxu0 0
    %1266 = vmatpush1.bf16.xpose.msra.mxu0 0
    %1267 = vmatprep.subr.bf16.mxu0 0
    %1268 = vmatpush1.bf16.xpose.msra.mxu0 0
    %1269 = vmatprep.subr.bf16.mxu0 0
    %1270 = vmatpush1.bf16.xpose.msra.mxu0 0
    %1271 = vmatprep.subr.bf16.mxu0 0
    %1272 = vmatpush1.bf16.xpose.msra.mxu0 0
    %1273 = vmatprep.mubr.bf16.mxu0 0
    %1274 = vmatmul.mubr.bf16.gmra.mrb[0].mxu0 %v1236
    %v1275 = vpop.f32.mrb[0].mxu0
    %v1276 = vadd.f32 0.0, %v1275
    %v1277 = vpop.f32.mrb[0].mxu0
    %v1278 = vpop.f32.mrb[0].mxu0
    %v1279 = vpop.f32.mrb[0].mxu0
    %1280 = vdwg.mxu0
    %v1281 = vsel %vm139, %v1276, -inf
    %1282 = vmax.xlane.f32.xlu0 %v1281
    %v1283 = vpop.xlane.xlu0 %1282
    %v1284 = vsub.f32 %v1276, %v1283
    %v1285 = vmul.f32 %v1284, 1.442695
    %v1286 = vpow.pop %v1285
    %v1287 = vsel %vm139, %v1286, 0.0
    %1288 = vadd.xlane.f32.xlu0 %v1287
    %v1289 = vpop.xlane.xlu0 %1288
    %v1290 = vrcp.pop %v1289
    %v1291 = vmul.f32 %v1286, %v1290
    %v1292 = vpack.c.bf16 %v1291, %v1291
    %1293 = vrot.lane.b32.xlu0 %v769, 40
    %v1294 = vpop.permute.xlu0 %1293
    %v1296 = vsel %vm139, %v1292, 0
    %v1299 = vsel %vm203, %v1294, 0
    %1301 = vmatprep.subr.bf16.mxu0 0
    %1302 = vmatpush1.bf16.msra.mxu0 %v1299
    %1303 = vmatprep.subr.bf16.mxu0 0
    %1304 = vmatpush1.bf16.msra.mxu0 0
    %1305 = vmatprep.subr.bf16.mxu0 0
    %1306 = vmatpush1.bf16.msra.mxu0 0
    %1307 = vmatprep.subr.bf16.mxu0 0
    %1308 = vmatpush1.bf16.msra.mxu0 0
    %1309 = vmatprep.subr.bf16.mxu0 0
    %1310 = vmatpush1.bf16.msra.mxu0 0
    %1311 = vmatprep.subr.bf16.mxu0 0
    %1312 = vmatpush1.bf16.msra.mxu0 0
    %1313 = vmatprep.subr.bf16.mxu0 0
    %1314 = vmatpush1.bf16.msra.mxu0 0
    %1315 = vmatprep.subr.bf16.mxu0 0
    %1316 = vmatpush1.bf16.msra.mxu0 0
    %1317 = vmatprep.subr.bf16.mxu0 0
    %1318 = vmatpush1.bf16.msra.mxu0 0
    %1319 = vmatprep.subr.bf16.mxu0 0
    %1320 = vmatpush1.bf16.msra.mxu0 0
    %1321 = vmatprep.subr.bf16.mxu0 0
    %1322 = vmatpush1.bf16.msra.mxu0 0
    %1323 = vmatprep.subr.bf16.mxu0 0
    %1324 = vmatpush1.bf16.msra.mxu0 0
    %1325 = vmatprep.subr.bf16.mxu0 0
    %1326 = vmatpush1.bf16.msra.mxu0 0
    %1327 = vmatprep.subr.bf16.mxu0 0
    %1328 = vmatpush1.bf16.msra.mxu0 0
    %1329 = vmatprep.subr.bf16.mxu0 0
    %1330 = vmatpush1.bf16.msra.mxu0 0
    %1331 = vmatprep.subr.bf16.mxu0 0
    %1332 = vmatpush1.bf16.msra.mxu0 0
    %1333 = vmatprep.mubr.bf16.mxu0 0
    %1334 = vmatmul.mubr.bf16.gmra.mrb[0].mxu0 %v1296
    %v1335 = vpop.f32.mrb[0].mxu0
    %v1336 = vadd.f32 0.0, %v1335
    %v1337 = vpop.f32.mrb[0].mxu0
    %v1338 = vpop.f32.mrb[0].mxu0
    %v1339 = vpop.f32.mrb[0].mxu0
    %1340 = vdwg.mxu0
    %v1341 = vpack.c.bf16 %v1336, %v1336
    %v1343 = vsel %vm139, %v1341, 0
    %1345 = vmatprep.subr.bf16.mxu0 0
    %1346 = vmatpush1.bf16.msra.mxu0 %v725
    %1347 = vmatprep.subr.bf16.mxu0 0
    %1348 = vmatpush1.bf16.msra.mxu0 0
    %1349 = vmatprep.subr.bf16.mxu0 0
    %1350 = vmatpush1.bf16.msra.mxu0 0
    %1351 = vmatprep.subr.bf16.mxu0 0
    %1352 = vmatpush1.bf16.msra.mxu0 0
    %1353 = vmatprep.subr.bf16.mxu0 0
    %1354 = vmatpush1.bf16.msra.mxu0 0
    %1355 = vmatprep.subr.bf16.mxu0 0
    %1356 = vmatpush1.bf16.msra.mxu0 0
    %1357 = vmatprep.subr.bf16.mxu0 0
    %1358 = vmatpush1.bf16.msra.mxu0 0
    %1359 = vmatprep.subr.bf16.mxu0 0
    %1360 = vmatpush1.bf16.msra.mxu0 0
    %1361 = vmatprep.subr.bf16.mxu0 0
    %1362 = vmatpush1.bf16.msra.mxu0 0
    %1363 = vmatprep.subr.bf16.mxu0 0
    %1364 = vmatpush1.bf16.msra.mxu0 0
    %1365 = vmatprep.subr.bf16.mxu0 0
    %1366 = vmatpush1.bf16.msra.mxu0 0
    %1367 = vmatprep.subr.bf16.mxu0 0
    %1368 = vmatpush1.bf16.msra.mxu0 0
    %1369 = vmatprep.subr.bf16.mxu0 0
    %1370 = vmatpush1.bf16.msra.mxu0 0
    %1371 = vmatprep.subr.bf16.mxu0 0
    %1372 = vmatpush1.bf16.msra.mxu0 0
    %1373 = vmatprep.subr.bf16.mxu0 0
    %1374 = vmatpush1.bf16.msra.mxu0 0
    %1375 = vmatprep.subr.bf16.mxu0 0
    %1376 = vmatpush1.bf16.msra.mxu0 0
    %1377 = vmatprep.mubr.bf16.mxu0 0
    %1378 = vmatmul.mubr.bf16.gmra.mrb[0].mxu0 %v1343
    %v1379 = vpop.f32.mrb[0].mxu0
    %v1380 = vadd.f32 0.0, %v1379
    %v1381 = vpop.f32.mrb[0].mxu0
    %v1382 = vpop.f32.mrb[0].mxu0
    %v1383 = vpop.f32.mrb[0].mxu0
    %1384 = vdwg.mxu0
    %v1385 = vadd.f32 %v1230, %v1380
    %v1386 = vld [vmem:[%s6] sm:$0x1]
    %v1387 = vlaneseq
    %v1388 = vshrl.u32 %v1387, 7
    %v1389 = vsub.s32 0, %v1388
    %v1390 = vrot.slane %v1386, %v1389
    %v1391 = vadd.f32 %v767, %v1390
    %v1392 = vadd.f32 %v1385, %v1390
    %v1393 = vadd.f32 %v59, %v1391
    %v1394 = vadd.f32 %v60, %v1392
    %v1395 = vld [vmem:[%s6 + $0x3] sm:$0x1]
    %v1396 = vld [vmem:[%s6 + $0x4] sm:$0x1]
    %v1397 = vsel %vm83, %v1393, 0.0
    %1398 = vadd.xlane.f32.xlu0 %v1397
    %v1399 = vpop.xlane.xlu0 %1398
    %v1400 = vsel %vm83, %v1394, 0.0
    %1401 = vadd.xlane.f32.xlu0 %v1400
    %v1402 = vpop.xlane.xlu0 %1401
    %v1403 = vrcp.pop 32.0
    %v1404 = vmul.f32 %v1399, %v1403
    %v1405 = vmul.f32 %v1402, %v1403
    %v1406 = vsub.f32 %v1393, %v1404
    %v1407 = vsub.f32 %v1394, %v1405
    %v1408 = vmul.f32 %v1406, %v1406
    %v1409 = vmul.f32 %v1407, %v1407
    %v1410 = vsel %vm83, %v1408, 0.0
    %1411 = vadd.xlane.f32.xlu0 %v1410
    %v1412 = vpop.xlane.xlu0 %1411
    %v1413 = vsel %vm83, %v1409, 0.0
    %1414 = vadd.xlane.f32.xlu0 %v1413
    %v1415 = vpop.xlane.xlu0 %1414
    %v1416 = vmul.f32 %v1412, %v1403
    %v1417 = vmul.f32 %v1415, %v1403
    %v1418 = vadd.f32 %v1416, 1e-05
    %v1419 = vadd.f32 %v1417, 1e-05
    %v1420 = vrsqrt.pop %v1418
    %v1421 = vrsqrt.pop %v1419
    %v1422 = vmul.f32 %v1406, %v1420
    %v1423 = vmul.f32 %v1407, %v1421
    %v1424 = vlaneseq
    %v1425 = vshrl.u32 %v1424, 7
    %v1426 = vsub.s32 0, %v1425
    %v1427 = vrot.slane %v1395, %v1426
    %v1428 = vmul.f32 %v1422, %v1427
    %v1429 = vmul.f32 %v1423, %v1427
    %v1430 = vlaneseq
    %v1431 = vshrl.u32 %v1430, 7
    %v1432 = vsub.s32 0, %v1431
    %v1433 = vrot.slane %v1396, %v1432
    %v1434 = vadd.f32 %v1428, %v1433
    %v1435 = vadd.f32 %v1429, %v1433
    %v1436 = vpack.c.bf16 %v1435, %v1434
    %s1437 = scalar_lea.vmem %s1, 16
    %v1438 = vld [vmem:[%s1437] sm:$0xf]
    %v1439 = vld [vmem:[%s1437 + $0x4] sm:$0xf]
    %v1440 = vld [vmem:[%s1437 + $0x8] sm:$0xf]
    %v1441 = vld [vmem:[%s1437 + $0xc] sm:$0xf]
    %v1442 = vld [vmem:[%s5 + $0x1] sm:$0x1]
    %v1443 = vlaneseq
    %v1444 = vshrl.u32 %v1443, 7
    %v1445 = vsub.s32 0, %v1444
    %v1446 = vrot.slane %v1442, %v1445
    %v1451 = vunpack.c.l.b16 %v1438
    %v1452 = vunpack.c.l.b16 %v1439
    %v1453 = vunpack.c.l.b16 %v1440
    %v1454 = vunpack.c.l.b16 %v1441
    %v1455 = vpack.c.b16 %v1452, %v1451
    %v1456 = vpack.c.b16 %v1454, %v1453
    %v1460 = vsel %vm83, %v1436, 0
    %1462 = vmatprep.subr.bf16.mxu0 0
    %1463 = vmatpush1.bf16.msra.mxu0 %v1455
    %1464 = vmatprep.subr.bf16.mxu0 0
    %1465 = vmatpush1.bf16.msra.mxu0 %v1456
    %1466 = vmatprep.subr.bf16.mxu0 0
    %1467 = vmatpush1.bf16.msra.mxu0 0
    %1468 = vmatprep.subr.bf16.mxu0 0
    %1469 = vmatpush1.bf16.msra.mxu0 0
    %1470 = vmatprep.subr.bf16.mxu0 0
    %1471 = vmatpush1.bf16.msra.mxu0 0
    %1472 = vmatprep.subr.bf16.mxu0 0
    %1473 = vmatpush1.bf16.msra.mxu0 0
    %1474 = vmatprep.subr.bf16.mxu0 0
    %1475 = vmatpush1.bf16.msra.mxu0 0
    %1476 = vmatprep.subr.bf16.mxu0 0
    %1477 = vmatpush1.bf16.msra.mxu0 0
    %1478 = vmatprep.subr.bf16.mxu0 0
    %1479 = vmatpush1.bf16.msra.mxu0 0
    %1480 = vmatprep.subr.bf16.mxu0 0
    %1481 = vmatpush1.bf16.msra.mxu0 0
    %1482 = vmatprep.subr.bf16.mxu0 0
    %1483 = vmatpush1.bf16.msra.mxu0 0
    %1484 = vmatprep.subr.bf16.mxu0 0
    %1485 = vmatpush1.bf16.msra.mxu0 0
    %1486 = vmatprep.subr.bf16.mxu0 0
    %1487 = vmatpush1.bf16.msra.mxu0 0
    %1488 = vmatprep.subr.bf16.mxu0 0
    %1489 = vmatpush1.bf16.msra.mxu0 0
    %1490 = vmatprep.subr.bf16.mxu0 0
    %1491 = vmatpush1.bf16.msra.mxu0 0
    %1492 = vmatprep.subr.bf16.mxu0 0
    %1493 = vmatpush1.bf16.msra.mxu0 0
    %1494 = vmatprep.mubr.bf16.mxu0 0
    %1495 = vmatmul.mubr.bf16.gmra.mrb[0].mxu0 %v1460
    %v1496 = vpop.f32.mrb[0].mxu0
    %v1497 = vadd.f32 %v1446, %v1496
    %v1498 = vpop.f32.mrb[0].mxu0
    %v1499 = vpop.f32.mrb[0].mxu0
    %v1500 = vadd.f32 %v1446, %v1499
    %v1501 = vpop.f32.mrb[0].mxu0
    %1502 = vdwg.mxu0
    %v1503 = vsel %vm83, %v1497, -inf
    %1504 = vmax.xlane.f32.xlu0 %v1503
    %v1505 = vpop.xlane.xlu0 %1504
    %v1506 = vsel %vm83, %v1500, -inf
    %1507 = vmax.xlane.f32.xlu0 %v1506
    %v1508 = vpop.xlane.xlu0 %1507
    %v1509 = vsub.f32 %v1497, %v1505
    %v1510 = vsub.f32 %v1500, %v1508
    %v1511 = vmul.f32 %v1509, 1.442695
    %v1512 = vpow.pop %v1511
    %v1513 = vmul.f32 %v1510, 1.442695
    %v1514 = vpow.pop %v1513
    %v1515 = vsel %vm83, %v1512, 0.0
    %1516 = vadd.xlane.f32.xlu0 %v1515
    %v1517 = vpop.xlane.xlu0 %1516
    %v1518 = vsel %vm83, %v1514, 0.0
    %1519 = vadd.xlane.f32.xlu0 %v1518
    %v1520 = vpop.xlane.xlu0 %1519
    %v1521 = vrcp.pop %v1517
    %v1522 = vrcp.pop %v1520
    %v1523 = vmul.f32 %v1512, %v1521
    %v1524 = vmul.f32 %v1514, %v1522
    %vm1525 = vcmask 523520
    %v1526 = vsel %vm1525, %v1497, -inf
    %v1527 = vrot.slane %v1526, 4
    %v1528 = vmax.f32 %v1526, %v1527
    %v1529 = vrot.slane %v1528, 2
    %v1530 = vmax.f32 %v1528, %v1529
    %v1531 = vrot.slane %v1530, 1
    %v1532 = vmax.f32 %v1530, %v1531
    %v1533 = vsub.f32 %v1497, %v1532
    %v1534 = vmul.f32 %v1533, 1.442695
    %v1535 = vpow.pop %v1534
    %v1536 = vsel %vm1525, %v1535, 0.0
    %v1537 = vrot.slane %v1536, 4
    %v1538 = vadd.f32 %v1536, %v1537
    %v1539 = vrot.slane %v1538, 2
    %v1540 = vadd.f32 %v1538, %v1539
    %v1541 = vrot.slane %v1540, 1
    %v1542 = vadd.f32 %v1540, %v1541
    %v1543 = vrcp.pop %v1542
    %v1544 = vmul.f32 %v1535, %v1543
    %v1545 = vpack.c.bf16 %v1544, %v1544
    %v1546 = vpack.c.bf16 %v1497, %v1497
    %1548 = vrot.lane.b32.xlu0 %v1545, 96
    %v1549 = vpop.permute.xlu0 %1548
    %1551 = vxpose.xlu0.c.b16.start [1/8] %v1549, 128
    %1552 = vxpose.xlu0.c.b16.cont [2/8] 0, 128
    %1553 = vxpose.xlu0.c.b16.cont [3/8] 0, 128
    %1554 = vxpose.xlu0.c.b16.cont [4/8] 0, 128
    %1555 = vxpose.xlu0.c.b16.cont [5/8] 0, 128
    %1556 = vxpose.xlu0.c.b16.cont [6/8] 0, 128
    %1557 = vxpose.xlu0.c.b16.cont [7/8] 0, 128
    %1558 = vxpose.xlu0.c.b16.end [8/8] 0, 128
    %v1559 = vpop.trf.xlu0
    %v1560 = vpop.trf.xlu0
    %v1561 = vpop.trf.xlu0
    %v1562 = vpop.trf.xlu0
    %v1563 = vpop.trf.xlu0
    %v1564 = vpop.trf.xlu0
    %v1565 = vpop.trf.xlu0
    %v1566 = vpop.trf.xlu0
    %1568 = vrot.lane.b32.xlu0 %v1546, 64
    %v1569 = vpop.permute.xlu0 %1568
    %v1571 = vsel %vm139, %v1559, 0
    %v1574 = vsel %vm139, %v1560, 0
    %v1577 = vsel %vm203, %v1569, 0
    %1579 = vmatprep.subr.bf16.mxu0 0
    %1580 = vmatpush1.bf16.msra.mxu0 %v1577
    %1581 = vmatprep.subr.bf16.mxu0 0
    %1582 = vmatpush1.bf16.msra.mxu0 0
    %1583 = vmatprep.subr.bf16.mxu0 0
    %1584 = vmatpush1.bf16.msra.mxu0 0
    %1585 = vmatprep.subr.bf16.mxu0 0
    %1586 = vmatpush1.bf16.msra.mxu0 0
    %1587 = vmatprep.subr.bf16.mxu0 0
    %1588 = vmatpush1.bf16.msra.mxu0 0
    %1589 = vmatprep.subr.bf16.mxu0 0
    %1590 = vmatpush1.bf16.msra.mxu0 0
    %1591 = vmatprep.subr.bf16.mxu0 0
    %1592 = vmatpush1.bf16.msra.mxu0 0
    %1593 = vmatprep.subr.bf16.mxu0 0
    %1594 = vmatpush1.bf16.msra.mxu0 0
    %1595 = vmatprep.subr.bf16.mxu0 0
    %1596 = vmatpush1.bf16.msra.mxu0 0
    %1597 = vmatprep.subr.bf16.mxu0 0
    %1598 = vmatpush1.bf16.msra.mxu0 0
    %1599 = vmatprep.subr.bf16.mxu0 0
    %1600 = vmatpush1.bf16.msra.mxu0 0
    %1601 = vmatprep.subr.bf16.mxu0 0
    %1602 = vmatpush1.bf16.msra.mxu0 0
    %1603 = vmatprep.subr.bf16.mxu0 0
    %1604 = vmatpush1.bf16.msra.mxu0 0
    %1605 = vmatprep.subr.bf16.mxu0 0
    %1606 = vmatpush1.bf16.msra.mxu0 0
    %1607 = vmatprep.subr.bf16.mxu0 0
    %1608 = vmatpush1.bf16.msra.mxu0 0
    %1609 = vmatprep.subr.bf16.mxu0 0
    %1610 = vmatpush1.bf16.msra.mxu0 0
    %1611 = vmatprep.mubr.bf16.mxu0 0
    %1612 = vmatmul.mubr.bf16.gmra.mrb[0].mxu0 %v1571
    %v1613 = vpop.f32.mrb[0].mxu0
    %v1614 = vadd.f32 0.0, %v1613
    %v1615 = vpop.f32.mrb[0].mxu0
    %v1616 = vpop.f32.mrb[0].mxu0
    %v1617 = vadd.f32 0.0, %v1616
    %v1618 = vpop.f32.mrb[0].mxu0
    %1619 = vmatprep.mubr.bf16.mxu0 0
    %1620 = vmatmul.mubr.bf16.gmra.mrb[0].mxu0 %v1574
    %v1621 = vpop.f32.mrb[0].mxu0
    %v1622 = vadd.f32 0.0, %v1621
    %v1623 = vpop.f32.mrb[0].mxu0
    %v1624 = vpop.f32.mrb[0].mxu0
    %v1625 = vadd.f32 0.0, %v1624
    %v1626 = vpop.f32.mrb[0].mxu0
    %1627 = vdwg.mxu0
    %v1628 = vpack.c.bf16 %v1523, %v1523
    %v1629 = vpack.c.bf16 %v1617, %v1614
    %v1630 = vpack.c.bf16 %v1625, %v1622
    %v1632 = vsel %vm83, %v1628, 0
    %1634 = vmatprep.subr.bf16.mxu0 0
    %1635 = vmatpush1.bf16.msra.mxu0 %v1629
    %1636 = vmatprep.subr.bf16.mxu0 0
    %1637 = vmatpush1.bf16.msra.mxu0 %v1630
    %1638 = vmatprep.subr.bf16.mxu0 0
    %1639 = vmatpush1.bf16.msra.mxu0 0
    %1640 = vmatprep.subr.bf16.mxu0 0
    %1641 = vmatpush1.bf16.msra.mxu0 0
    %1642 = vmatprep.subr.bf16.mxu0 0
    %1643 = vmatpush1.bf16.msra.mxu0 0
    %1644 = vmatprep.subr.bf16.mxu0 0
    %1645 = vmatpush1.bf16.msra.mxu0 0
    %1646 = vmatprep.subr.bf16.mxu0 0
    %1647 = vmatpush1.bf16.msra.mxu0 0
    %1648 = vmatprep.subr.bf16.mxu0 0
    %1649 = vmatpush1.bf16.msra.mxu0 0
    %1650 = vmatprep.subr.bf16.mxu0 0
    %1651 = vmatpush1.bf16.msra.mxu0 0
    %1652 = vmatprep.subr.bf16.mxu0 0
    %1653 = vmatpush1.bf16.msra.mxu0 0
    %1654 = vmatprep.subr.bf16.mxu0 0
    %1655 = vmatpush1.bf16.msra.mxu0 0
    %1656 = vmatprep.subr.bf16.mxu0 0
    %1657 = vmatpush1.bf16.msra.mxu0 0
    %1658 = vmatprep.subr.bf16.mxu0 0
    %1659 = vmatpush1.bf16.msra.mxu0 0
    %1660 = vmatprep.subr.bf16.mxu0 0
    %1661 = vmatpush1.bf16.msra.mxu0 0
    %1662 = vmatprep.subr.bf16.mxu0 0
    %1663 = vmatpush1.bf16.msra.mxu0 0
    %1664 = vmatprep.subr.bf16.mxu0 0
    %1665 = vmatpush1.bf16.msra.mxu0 0
    %1666 = vmatprep.mubr.bf16.mxu0 0
    %1667 = vmatmul.mubr.bf16.gmra.mrb[0].mxu0 %v1632
    %v1668 = vpop.f32.mrb[0].mxu0
    %v1669 = vadd.f32 0.0, %v1668
    %v1670 = vpop.f32.mrb[0].mxu0
    %v1671 = vpop.f32.mrb[0].mxu0
    %v1672 = vpop.f32.mrb[0].mxu0
    %1673 = vdwg.mxu0
    %v1674 = vsel %vm1525, %v1500, -inf
    %v1675 = vrot.slane %v1674, 4
    %v1676 = vmax.f32 %v1674, %v1675
    %v1677 = vrot.slane %v1676, 2
    %v1678 = vmax.f32 %v1676, %v1677
    %v1679 = vrot.slane %v1678, 1
    %v1680 = vmax.f32 %v1678, %v1679
    %v1681 = vsub.f32 %v1500, %v1680
    %v1682 = vmul.f32 %v1681, 1.442695
    %v1683 = vpow.pop %v1682
    %v1684 = vsel %vm1525, %v1683, 0.0
    %v1685 = vrot.slane %v1684, 4
    %v1686 = vadd.f32 %v1684, %v1685
    %v1687 = vrot.slane %v1686, 2
    %v1688 = vadd.f32 %v1686, %v1687
    %v1689 = vrot.slane %v1688, 1
    %v1690 = vadd.f32 %v1688, %v1689
    %v1691 = vrcp.pop %v1690
    %v1692 = vmul.f32 %v1683, %v1691
    %v1693 = vpack.c.bf16 %v1692, %v1692
    %v1694 = vpack.c.bf16 %v1500, %v1500
    %1696 = vrot.lane.b32.xlu0 %v1693, 96
    %v1697 = vpop.permute.xlu0 %1696
    %1699 = vxpose.xlu0.c.b16.start [1/8] %v1697, 128
    %1700 = vxpose.xlu0.c.b16.cont [2/8] 0, 128
    %1701 = vxpose.xlu0.c.b16.cont [3/8] 0, 128
    %1702 = vxpose.xlu0.c.b16.cont [4/8] 0, 128
    %1703 = vxpose.xlu0.c.b16.cont [5/8] 0, 128
    %1704 = vxpose.xlu0.c.b16.cont [6/8] 0, 128
    %1705 = vxpose.xlu0.c.b16.cont [7/8] 0, 128
    %1706 = vxpose.xlu0.c.b16.end [8/8] 0, 128
    %v1707 = vpop.trf.xlu0
    %v1708 = vpop.trf.xlu0
    %v1709 = vpop.trf.xlu0
    %v1710 = vpop.trf.xlu0
    %v1711 = vpop.trf.xlu0
    %v1712 = vpop.trf.xlu0
    %v1713 = vpop.trf.xlu0
    %v1714 = vpop.trf.xlu0
    %1716 = vrot.lane.b32.xlu0 %v1694, 64
    %v1717 = vpop.permute.xlu0 %1716
    %v1719 = vsel %vm139, %v1707, 0
    %v1722 = vsel %vm139, %v1708, 0
    %v1725 = vsel %vm203, %v1717, 0
    %1727 = vmatprep.subr.bf16.mxu0 0
    %1728 = vmatpush1.bf16.msra.mxu0 %v1725
    %1729 = vmatprep.subr.bf16.mxu0 0
    %1730 = vmatpush1.bf16.msra.mxu0 0
    %1731 = vmatprep.subr.bf16.mxu0 0
    %1732 = vmatpush1.bf16.msra.mxu0 0
    %1733 = vmatprep.subr.bf16.mxu0 0
    %1734 = vmatpush1.bf16.msra.mxu0 0
    %1735 = vmatprep.subr.bf16.mxu0 0
    %1736 = vmatpush1.bf16.msra.mxu0 0
    %1737 = vmatprep.subr.bf16.mxu0 0
    %1738 = vmatpush1.bf16.msra.mxu0 0
    %1739 = vmatprep.subr.bf16.mxu0 0
    %1740 = vmatpush1.bf16.msra.mxu0 0
    %1741 = vmatprep.subr.bf16.mxu0 0
    %1742 = vmatpush1.bf16.msra.mxu0 0
    %1743 = vmatprep.subr.bf16.mxu0 0
    %1744 = vmatpush1.bf16.msra.mxu0 0
    %1745 = vmatprep.subr.bf16.mxu0 0
    %1746 = vmatpush1.bf16.msra.mxu0 0
    %1747 = vmatprep.subr.bf16.mxu0 0
    %1748 = vmatpush1.bf16.msra.mxu0 0
    %1749 = vmatprep.subr.bf16.mxu0 0
    %1750 = vmatpush1.bf16.msra.mxu0 0
    %1751 = vmatprep.subr.bf16.mxu0 0
    %1752 = vmatpush1.bf16.msra.mxu0 0
    %1753 = vmatprep.subr.bf16.mxu0 0
    %1754 = vmatpush1.bf16.msra.mxu0 0
    %1755 = vmatprep.subr.bf16.mxu0 0
    %1756 = vmatpush1.bf16.msra.mxu0 0
    %1757 = vmatprep.subr.bf16.mxu0 0
    %1758 = vmatpush1.bf16.msra.mxu0 0
    %1759 = vmatprep.mubr.bf16.mxu0 0
    %1760 = vmatmul.mubr.bf16.gmra.mrb[0].mxu0 %v1719
    %v1761 = vpop.f32.mrb[0].mxu0
    %v1762 = vadd.f32 0.0, %v1761
    %v1763 = vpop.f32.mrb[0].mxu0
    %v1764 = vpop.f32.mrb[0].mxu0
    %v1765 = vadd.f32 0.0, %v1764
    %v1766 = vpop.f32.mrb[0].mxu0
    %1767 = vmatprep.mubr.bf16.mxu0 0
    %1768 = vmatmul.mubr.bf16.gmra.mrb[0].mxu0 %v1722
    %v1769 = vpop.f32.mrb[0].mxu0
    %v1770 = vadd.f32 0.0, %v1769
    %v1771 = vpop.f32.mrb[0].mxu0
    %v1772 = vpop.f32.mrb[0].mxu0
    %v1773 = vadd.f32 0.0, %v1772
    %v1774 = vpop.f32.mrb[0].mxu0
    %1775 = vdwg.mxu0
    %v1776 = vpack.c.bf16 %v1524, %v1524
    %v1777 = vpack.c.bf16 %v1765, %v1762
    %v1778 = vpack.c.bf16 %v1773, %v1770
    %v1780 = vsel %vm83, %v1776, 0
    %1782 = vmatprep.subr.bf16.mxu0 0
    %1783 = vmatpush1.bf16.msra.mxu0 %v1777
    %1784 = vmatprep.subr.bf16.mxu0 0
    %1785 = vmatpush1.bf16.msra.mxu0 %v1778
    %1786 = vmatprep.subr.bf16.mxu0 0
    %1787 = vmatpush1.bf16.msra.mxu0 0
    %1788 = vmatprep.subr.bf16.mxu0 0
    %1789 = vmatpush1.bf16.msra.mxu0 0
    %1790 = vmatprep.subr.bf16.mxu0 0
    %1791 = vmatpush1.bf16.msra.mxu0 0
    %1792 = vmatprep.subr.bf16.mxu0 0
    %1793 = vmatpush1.bf16.msra.mxu0 0
    %1794 = vmatprep.subr.bf16.mxu0 0
    %1795 = vmatpush1.bf16.msra.mxu0 0
    %1796 = vmatprep.subr.bf16.mxu0 0
    %1797 = vmatpush1.bf16.msra.mxu0 0
    %1798 = vmatprep.subr.bf16.mxu0 0
    %1799 = vmatpush1.bf16.msra.mxu0 0
    %1800 = vmatprep.subr.bf16.mxu0 0
    %1801 = vmatpush1.bf16.msra.mxu0 0
    %1802 = vmatprep.subr.bf16.mxu0 0
    %1803 = vmatpush1.bf16.msra.mxu0 0
    %1804 = vmatprep.subr.bf16.mxu0 0
    %1805 = vmatpush1.bf16.msra.mxu0 0
    %1806 = vmatprep.subr.bf16.mxu0 0
    %1807 = vmatpush1.bf16.msra.mxu0 0
    %1808 = vmatprep.subr.bf16.mxu0 0
    %1809 = vmatpush1.bf16.msra.mxu0 0
    %1810 = vmatprep.subr.bf16.mxu0 0
    %1811 = vmatpush1.bf16.msra.mxu0 0
    %1812 = vmatprep.subr.bf16.mxu0 0
    %1813 = vmatpush1.bf16.msra.mxu0 0
    %1814 = vmatprep.mubr.bf16.mxu0 0
    %1815 = vmatmul.mubr.bf16.gmra.mrb[0].mxu0 %v1780
    %v1816 = vpop.f32.mrb[0].mxu0
    %v1817 = vadd.f32 0.0, %v1816
    %v1818 = vpop.f32.mrb[0].mxu0
    %v1819 = vpop.f32.mrb[0].mxu0
    %v1820 = vpop.f32.mrb[0].mxu0
    %1821 = vdwg.mxu0
    %v1822 = vpack.c.bf16 %v1817, %v1669
    %s1823 = scalar_lea.vmem [#allocation2], 16
    %v1824 = vld [vmem:[%s1823] sm:$0xf]
    %v1825 = vld [vmem:[%s1823 + $0x4] sm:$0xf]
    %v1826 = vld [vmem:[%s1823 + $0x8] sm:$0xf]
    %v1827 = vld [vmem:[%s1823 + $0xc] sm:$0xf]
    %v1828 = vld [vmem:[%s6 + $0x1] sm:$0x1]
    %v1829 = vlaneseq
    %v1830 = vshrl.u32 %v1829, 7
    %v1831 = vsub.s32 0, %v1830
    %v1832 = vrot.slane %v1828, %v1831
    %v1837 = vunpack.c.l.b16 %v1824
    %v1838 = vunpack.c.l.b16 %v1825
    %v1839 = vunpack.c.l.b16 %v1826
    %v1840 = vunpack.c.l.b16 %v1827
    %v1841 = vpack.c.b16 %v1838, %v1837
    %v1842 = vpack.c.b16 %v1840, %v1839
    %v1846 = vsel %vm83, %v1822, 0
    %1848 = vmatprep.subr.bf16.mxu0 0
    %1849 = vmatpush1.bf16.msra.mxu0 %v1841
    %1850 = vmatprep.subr.bf16.mxu0 0
    %1851 = vmatpush1.bf16.msra.mxu0 %v1842
    %1852 = vmatprep.subr.bf16.mxu0 0
    %1853 = vmatpush1.bf16.msra.mxu0 0
    %1854 = vmatprep.subr.bf16.mxu0 0
    %1855 = vmatpush1.bf16.msra.mxu0 0
    %1856 = vmatprep.subr.bf16.mxu0 0
    %1857 = vmatpush1.bf16.msra.mxu0 0
    %1858 = vmatprep.subr.bf16.mxu0 0
    %1859 = vmatpush1.bf16.msra.mxu0 0
    %1860 = vmatprep.subr.bf16.mxu0 0
    %1861 = vmatpush1.bf16.msra.mxu0 0
    %1862 = vmatprep.subr.bf16.mxu0 0
    %1863 = vmatpush1.bf16.msra.mxu0 0
    %1864 = vmatprep.subr.bf16.mxu0 0
    %1865 = vmatpush1.bf16.msra.mxu0 0
    %1866 = vmatprep.subr.bf16.mxu0 0
    %1867 = vmatpush1.bf16.msra.mxu0 0
    %1868 = vmatprep.subr.bf16.mxu0 0
    %1869 = vmatpush1.bf16.msra.mxu0 0
    %1870 = vmatprep.subr.bf16.mxu0 0
    %1871 = vmatpush1.bf16.msra.mxu0 0
    %1872 = vmatprep.subr.bf16.mxu0 0
    %1873 = vmatpush1.bf16.msra.mxu0 0
    %1874 = vmatprep.subr.bf16.mxu0 0
    %1875 = vmatpush1.bf16.msra.mxu0 0
    %1876 = vmatprep.subr.bf16.mxu0 0
    %1877 = vmatpush1.bf16.msra.mxu0 0
    %1878 = vmatprep.subr.bf16.mxu0 0
    %1879 = vmatpush1.bf16.msra.mxu0 0
    %1880 = vmatprep.mubr.bf16.mxu0 0
    %1881 = vmatmul.mubr.bf16.gmra.mrb[0].mxu0 %v1846
    %v1882 = vpop.f32.mrb[0].mxu0
    %v1883 = vadd.f32 %v1832, %v1882
    %v1884 = vpop.f32.mrb[0].mxu0
    %v1885 = vpop.f32.mrb[0].mxu0
    %v1886 = vadd.f32 %v1832, %v1885
    %v1887 = vpop.f32.mrb[0].mxu0
    %1888 = vdwg.mxu0
    %v1889 = vadd.f32 %v1434, %v1883
    %v1890 = vadd.f32 %v1435, %v1886
    %v1891 = vld [vmem:[%s6 + $0x5] sm:$0x1]
    %v1892 = vld [vmem:[%s6 + $0x6] sm:$0x1]
    %v1893 = vsel %vm83, %v1889, 0.0
    %1894 = vadd.xlane.f32.xlu0 %v1893
    %v1895 = vpop.xlane.xlu0 %1894
    %v1896 = vsel %vm83, %v1890, 0.0
    %1897 = vadd.xlane.f32.xlu0 %v1896
    %v1898 = vpop.xlane.xlu0 %1897
    %v1899 = vmul.f32 %v1895, %v1403
    %v1900 = vmul.f32 %v1898, %v1403
    %v1901 = vsub.f32 %v1889, %v1899
    %v1902 = vsub.f32 %v1890, %v1900
    %v1903 = vmul.f32 %v1901, %v1901
    %v1904 = vmul.f32 %v1902, %v1902
    %v1905 = vsel %vm83, %v1903, 0.0
    %1906 = vadd.xlane.f32.xlu0 %v1905
    %v1907 = vpop.xlane.xlu0 %1906
    %v1908 = vsel %vm83, %v1904, 0.0
    %1909 = vadd.xlane.f32.xlu0 %v1908
    %v1910 = vpop.xlane.xlu0 %1909
    %v1911 = vmul.f32 %v1907, %v1403
    %v1912 = vmul.f32 %v1910, %v1403
    %v1913 = vadd.f32 %v1911, 1e-05
    %v1914 = vadd.f32 %v1912, 1e-05
    %v1915 = vrsqrt.pop %v1913
    %v1916 = vrsqrt.pop %v1914
    %v1917 = vmul.f32 %v1901, %v1915
    %v1918 = vmul.f32 %v1902, %v1916
    %v1919 = vlaneseq
    %v1920 = vshrl.u32 %v1919, 7
    %v1921 = vsub.s32 0, %v1920
    %v1922 = vrot.slane %v1891, %v1921
    %v1923 = vmul.f32 %v1917, %v1922
    %v1924 = vmul.f32 %v1918, %v1922
    %v1925 = vlaneseq
    %v1926 = vshrl.u32 %v1925, 7
    %v1927 = vsub.s32 0, %v1926
    %v1928 = vrot.slane %v1892, %v1927
    %v1929 = vadd.f32 %v1923, %v1928
    %v1930 = vadd.f32 %v1924, %v1928
    %v1931 = vpack.c.bf16 %v1930, %v1929
    %v1932 = vld [vmem:[#allocation5] sm:$0xf]
    %v1933 = vld [vmem:[#allocation5 + $0x4] sm:$0xf]
    %v1934 = vld [vmem:[#allocation5 + $0x8] sm:$0xf]
    %v1935 = vld [vmem:[#allocation5 + $0xc] sm:$0xf]
    %v1936 = vld [vmem:[%s7] sm:$0x1]
    %v1938 = vlaneseq
    %v1939 = vshrl.u32 %v1938, 7
    %v1940 = vsub.s32 0, %v1939
    %v1941 = vrot.slane %v1936, %v1940
    %v1947 = vunpack.c.l.b16 %v1932
    %v1948 = vunpack.c.l.b16 %v1933
    %v1949 = vunpack.c.l.b16 %v1934
    %v1950 = vunpack.c.l.b16 %v1935
    %v1951 = vpack.c.b16 %v1948, %v1947
    %v1952 = vpack.c.b16 %v1950, %v1949
    %v1956 = vsel %vm83, %v1931, 0
    %1958 = vmatprep.subr.bf16.mxu0 0
    %1959 = vmatpush1.bf16.msra.mxu0 %v1951
    %1960 = vmatprep.subr.bf16.mxu0 0
    %1961 = vmatpush1.bf16.msra.mxu0 %v1952
    %1962 = vmatprep.subr.bf16.mxu0 0
    %1963 = vmatpush1.bf16.msra.mxu0 0
    %1964 = vmatprep.subr.bf16.mxu0 0
    %1965 = vmatpush1.bf16.msra.mxu0 0
    %1966 = vmatprep.subr.bf16.mxu0 0
    %1967 = vmatpush1.bf16.msra.mxu0 0
    %1968 = vmatprep.subr.bf16.mxu0 0
    %1969 = vmatpush1.bf16.msra.mxu0 0
    %1970 = vmatprep.subr.bf16.mxu0 0
    %1971 = vmatpush1.bf16.msra.mxu0 0
    %1972 = vmatprep.subr.bf16.mxu0 0
    %1973 = vmatpush1.bf16.msra.mxu0 0
    %1974 = vmatprep.subr.bf16.mxu0 0
    %1975 = vmatpush1.bf16.msra.mxu0 0
    %1976 = vmatprep.subr.bf16.mxu0 0
    %1977 = vmatpush1.bf16.msra.mxu0 0
    %1978 = vmatprep.subr.bf16.mxu0 0
    %1979 = vmatpush1.bf16.msra.mxu0 0
    %1980 = vmatprep.subr.bf16.mxu0 0
    %1981 = vmatpush1.bf16.msra.mxu0 0
    %1982 = vmatprep.subr.bf16.mxu0 0
    %1983 = vmatpush1.bf16.msra.mxu0 0
    %1984 = vmatprep.subr.bf16.mxu0 0
    %1985 = vmatpush1.bf16.msra.mxu0 0
    %1986 = vmatprep.subr.bf16.mxu0 0
    %1987 = vmatpush1.bf16.msra.mxu0 0
    %1988 = vmatprep.subr.bf16.mxu0 0
    %1989 = vmatpush1.bf16.msra.mxu0 0
    %1990 = vmatprep.mubr.bf16.mxu0 0
    %1991 = vmatmul.mubr.bf16.gmra.mrb[0].mxu0 %v1956
    %v1992 = vpop.f32.mrb[0].mxu0
    %v1993 = vadd.f32 %v1941, %v1992
    %v1994 = vpop.f32.mrb[0].mxu0
    %v1995 = vpop.f32.mrb[0].mxu0
    %v1996 = vadd.f32 %v1941, %v1995
    %v1997 = vpop.f32.mrb[0].mxu0
    %1998 = vdwg.mxu0
    %v1999 = vmax.f32 %v1993, 0.0
    %v2000 = vmax.f32 %v1996, 0.0
    %v2001 = vpack.c.bf16 %v2000, %v1999
    %v2002 = vld [vmem:[%s4] sm:$0xf]
    %v2003 = vld [vmem:[%s4 + $0x4] sm:$0xf]
    %v2004 = vld [vmem:[%s4 + $0x8] sm:$0xf]
    %v2005 = vld [vmem:[%s4 + $0xc] sm:$0xf]
    %v2006 = vld [vmem:[%s4 + $0x10] sm:$0xf]
    %v2007 = vld [vmem:[%s4 + $0x14] sm:$0xf]
    %v2008 = vld [vmem:[%s4 + $0x18] sm:$0xf]
    %v2009 = vld [vmem:[%s4 + $0x1c] sm:$0xf]
    %v2010 = vld [vmem:[%s6 + $0x2] sm:$0x1]
    %v2011 = vlaneseq
    %v2012 = vshrl.u32 %v2011, 7
    %v2013 = vsub.s32 0, %v2012
    %v2014 = vrot.slane %v2010, %v2013
    %v2023 = vunpack.c.l.b16 %v2002
    %v2024 = vunpack.c.l.b16 %v2003
    %v2025 = vunpack.c.l.b16 %v2004
    %v2026 = vunpack.c.l.b16 %v2005
    %v2027 = vunpack.c.l.b16 %v2006
    %v2028 = vunpack.c.l.b16 %v2007
    %v2029 = vunpack.c.l.b16 %v2008
    %v2030 = vunpack.c.l.b16 %v2009
    %v2031 = vpack.c.b16 %v2024, %v2023
    %v2032 = vpack.c.b16 %v2026, %v2025
    %v2033 = vpack.c.b16 %v2028, %v2027
    %v2034 = vpack.c.b16 %v2030, %v2029
    %vm2039 = vcmask 523264
    %v2041 = vsel %vm2039, %v2001, 0
    %2043 = vmatprep.subr.bf16.mxu0 0
    %2044 = vmatpush1.bf16.msra.mxu0 %v2031
    %2045 = vmatprep.subr.bf16.mxu0 0
    %2046 = vmatpush1.bf16.msra.mxu0 %v2032
    %2047 = vmatprep.subr.bf16.mxu0 0
    %2048 = vmatpush1.bf16.msra.mxu0 %v2033
    %2049 = vmatprep.subr.bf16.mxu0 0
    %2050 = vmatpush1.bf16.msra.mxu0 %v2034
    %2051 = vmatprep.subr.bf16.mxu0 0
    %2052 = vmatpush1.bf16.msra.mxu0 0
    %2053 = vmatprep.subr.bf16.mxu0 0
    %2054 = vmatpush1.bf16.msra.mxu0 0
    %2055 = vmatprep.subr.bf16.mxu0 0
    %2056 = vmatpush1.bf16.msra.mxu0 0
    %2057 = vmatprep.subr.bf16.mxu0 0
    %2058 = vmatpush1.bf16.msra.mxu0 0
    %2059 = vmatprep.subr.bf16.mxu0 0
    %2060 = vmatpush1.bf16.msra.mxu0 0
    %2061 = vmatprep.subr.bf16.mxu0 0
    %2062 = vmatpush1.bf16.msra.mxu0 0
    %2063 = vmatprep.subr.bf16.mxu0 0
    %2064 = vmatpush1.bf16.msra.mxu0 0
    %2065 = vmatprep.subr.bf16.mxu0 0
    %2066 = vmatpush1.bf16.msra.mxu0 0
    %2067 = vmatprep.subr.bf16.mxu0 0
    %2068 = vmatpush1.bf16.msra.mxu0 0
    %2069 = vmatprep.subr.bf16.mxu0 0
    %2070 = vmatpush1.bf16.msra.mxu0 0
    %2071 = vmatprep.subr.bf16.mxu0 0
    %2072 = vmatpush1.bf16.msra.mxu0 0
    %2073 = vmatprep.subr.bf16.mxu0 0
    %2074 = vmatpush1.bf16.msra.mxu0 0
    %2075 = vmatprep.mubr.bf16.mxu0 0
    %2076 = vmatmul.mubr.bf16.gmra.mrb[0].mxu0 %v2041
    %v2077 = vpop.f32.mrb[0].mxu0
    %v2078 = vadd.f32 %v2014, %v2077
    %v2079 = vpop.f32.mrb[0].mxu0
    %v2080 = vpop.f32.mrb[0].mxu0
    %v2081 = vadd.f32 %v2014, %v2080
    %v2082 = vpop.f32.mrb[0].mxu0
    %2083 = vdwg.mxu0
    %v2084 = vadd.f32 %v1929, %v2078
    %v2085 = vadd.f32 %v1930, %v2081
    %v2086 = vld [vmem:[%s6 + $0x7] sm:$0x1]
    %v2087 = vld [vmem:[%s6 + $0x8] sm:$0x1]
    %v2088 = vsel %vm83, %v2084, 0.0
    %2089 = vadd.xlane.f32.xlu0 %v2088
    %v2090 = vpop.xlane.xlu0 %2089
    %v2091 = vsel %vm83, %v2085, 0.0
    %2092 = vadd.xlane.f32.xlu0 %v2091
    %v2093 = vpop.xlane.xlu0 %2092
    %v2094 = vmul.f32 %v2090, %v1403
    %v2095 = vmul.f32 %v2093, %v1403
    %v2096 = vsub.f32 %v2084, %v2094
    %v2097 = vsub.f32 %v2085, %v2095
    %v2098 = vmul.f32 %v2096, %v2096
    %v2099 = vmul.f32 %v2097, %v2097
    %v2100 = vsel %vm83, %v2098, 0.0
    %2101 = vadd.xlane.f32.xlu0 %v2100
    %v2102 = vpop.xlane.xlu0 %2101
    %v2103 = vsel %vm83, %v2099, 0.0
    %2104 = vadd.xlane.f32.xlu0 %v2103
    %v2105 = vpop.xlane.xlu0 %2104
    %v2106 = vmul.f32 %v2102, %v1403
    %v2107 = vmul.f32 %v2105, %v1403
    %v2108 = vadd.f32 %v2106, 1e-05
    %v2109 = vadd.f32 %v2107, 1e-05
    %v2110 = vrsqrt.pop %v2108
    %v2111 = vrsqrt.pop %v2109
    %v2112 = vmul.f32 %v2096, %v2110
    %v2113 = vmul.f32 %v2097, %v2111
    %v2114 = vlaneseq
    %v2115 = vshrl.u32 %v2114, 7
    %v2116 = vsub.s32 0, %v2115
    %v2117 = vrot.slane %v2086, %v2116
    %v2118 = vmul.f32 %v2112, %v2117
    %v2119 = vmul.f32 %v2113, %v2117
    %v2120 = vlaneseq
    %v2121 = vshrl.u32 %v2120, 7
    %v2122 = vsub.s32 0, %v2121
    %v2123 = vrot.slane %v2087, %v2122
    %v2124 = vadd.f32 %v2118, %v2123
    %v2125 = vadd.f32 %v2119, %v2123
    %2126 = vst.msk [vmem:[#allocation7] sm:$0xff] %vm83, %v2124
    %2127 = vst.msk [vmem:[#allocation7 + $0x8] sm:$0xff] %vm83, %v2125
    // Predicated region
    $region42: #{tpu_custom_call.1} parent=1 // pred_check
      _
    $region43: #{tpu_custom_call.1} parent=1 // pred_check_branch
      %2129 = sbr.rel (0) target = $region45
    $region44: #{tpu_custom_call.1} parent=1 // pred_region
      %s2131 = ssub.s32 256, 256
      %2132 = vsyncadd [#allocation4], %s2131
      %s2133 = sshll.u32 [#allocation7], 4
      %s2134 = int_to_ptr.vmem [resolvable:$true] %s2133
      %2139 = dma.vmem_to_hbm [thread:$0]  %s2134, 256, %s8, [#allocation4], 128, 128, 8
    $region45: #{tpu_custom_call.1} parent=1 // pred_fallthru
      _
    // Predicated region
    $region46: #{tpu_custom_call.1} parent=1 // pred_check
      _
    $region47: #{tpu_custom_call.1} parent=1 // pred_check_branch
      %2141 = sbr.rel (0) target = $region49
    $region48: #{tpu_custom_call.1} parent=1 // pred_region
      %2142 = dma.done [#allocation4], 256
    $region49: #{tpu_custom_call.1} parent=1 // pred_fallthru
      _
    %2143 = vsyncpa [#allocation3], 1
    %2144 = vsyncpa [#allocation6], 1
    %2145 = vsyncpa [#allocation4], 1

// kernel: tpu_custom_call.1
$region0: #{tpu_custom_call.1}
  #allocation0 [shape = 'u32[]', space=smem, size = 0x4, offset = 0x4, fixed_abs, tag = 'smem constant byte address 0x4 - core index']
  #allocation1 [shape = 'u32[144,128]{1,0:T(1,128)}', space=vmem, size = 0x12000, scoped, tag = 'internal scratch']
  %s0 = inlined_call_operand.vmem [shape: f32[16,32], index: 0, kind: input, shape index: {}]
  %s1 = inlined_call_operand.vmem [shape: bf16[2,32,96], index: 1, kind: input, shape index: {}]
  %s2 = inlined_call_operand.hbm [shape: bf16[2,32,32], index: 2, kind: input, shape index: {}]
  %s3 = inlined_call_operand.hbm [shape: bf16[32,64], index: 3, kind: input, shape index: {}]
  %s4 = inlined_call_operand.vmem [shape: bf16[64,32], index: 4, kind: input, shape index: {}]
  %s5 = inlined_call_operand.vmem [shape: f32[2,96], index: 5, kind: input, shape index: {}]
  %s6 = inlined_call_operand.vmem [shape: f32[16,32], index: 6, kind: input, shape index: {}]
  %s7 = inlined_call_operand.vmem [shape: f32[1,64], index: 7, kind: input, shape index: {}]
  %s8 = inlined_call_operand.hbm [shape: f32[16,32], index: 8, kind: output, shape index: {}]
  %s9 = sld [smem:[#allocation0]]
  $region50: #{tpu_custom_call.1} parent=0
    _
  %s11 = ssub.s32 1, %s9
  %s12 = scalar_select 0, %s11, %s9
  $region1: #{tpu_custom_call.1} parent=0
    #allocation2 [shape = 'u8[16384]{0}', space=vmem, size = 0x4000, scoped, tag = 'input window, operand 2, single buffered']
    #allocation3 [shape = 's32[1]{0}', space=sflag, size = 0x4, scoped, tag = 'scoped memory for tpu_custom_call.1']
    #allocation4 [shape = 's32[1]{0}', space=sflag, size = 0x4, scoped, tag = 'scoped memory for tpu_custom_call.1']
    #allocation5 [shape = 'u8[8192]{0}', space=vmem, size = 0x2000, scoped, tag = 'input window, operand 3, single buffered']
    #allocation6 [shape = 's32[1]{0}', space=sflag, size = 0x4, scoped, tag = 'scoped memory for tpu_custom_call.1']
    #allocation7 [shape = 'u8[8192]{0}', space=vmem, size = 0x2000, scoped, tag = 'output window, operand 0, single buffered']
    %13 = vsyncpa [#allocation3], 0
    %14 = vsyncpa [#allocation6], 0
    %15 = vsyncpa [#allocation4], 0
    // Predicated region
    $region2: #{tpu_custom_call.1} parent=1 // pred_check
      _
    $region3: #{tpu_custom_call.1} parent=1 // pred_check_branch
      %17 = sbr.rel (0) target = $region5
    $region4: #{tpu_custom_call.1} parent=1 // pred_region
      _
    $region5: #{tpu_custom_call.1} parent=1 // pred_fallthru
      _
    // Predicated region
    $region6: #{tpu_custom_call.1} parent=1 // pred_check
      _
    $region7: #{tpu_custom_call.1} parent=1 // pred_check_branch
      %19 = sbr.rel (0) target = $region9
    $region8: #{tpu_custom_call.1} parent=1 // pred_region
      _
    $region9: #{tpu_custom_call.1} parent=1 // pred_fallthru
      _
    // Predicated region
    $region10: #{tpu_custom_call.1} parent=1 // pred_check
      _
    $region11: #{tpu_custom_call.1} parent=1 // pred_check_branch
      %21 = sbr.rel (0) target = $region13
    $region12: #{tpu_custom_call.1} parent=1 // pred_region
      %s23 = ssub.s32 512, 512
      %24 = vsyncadd [#allocation3], %s23
      %s25 = sshll.u32 [#allocation2], 4
      %s26 = int_to_ptr.vmem [resolvable:$true] %s25
      %31 = dma.hbm_to_vmem [thread:$0]  %s2, 512, %s26, [#allocation3], 64, 64, 4
    $region13: #{tpu_custom_call.1} parent=1 // pred_fallthru
      _
    // Predicated region
    $region14: #{tpu_custom_call.1} parent=1 // pred_check
      _
    $region15: #{tpu_custom_call.1} parent=1 // pred_check_branch
      %33 = sbr.rel (0) target = $region17
    $region16: #{tpu_custom_call.1} parent=1 // pred_region
      %s35 = ssub.s32 256, 256
      %36 = vsyncadd [#allocation6], %s35
      %s37 = sshll.u32 [#allocation5], 4
      %s38 = int_to_ptr.vmem [resolvable:$true] %s37
      %43 = dma.hbm_to_vmem [thread:$0]  %s3, 256, %s38, [#allocation6], 64, 64, 4
    $region17: #{tpu_custom_call.1} parent=1 // pred_fallthru
      _
    // Predicated region
    $region18: #{tpu_custom_call.1} parent=1 // pred_check
      _
    $region19: #{tpu_custom_call.1} parent=1 // pred_check_branch
      %45 = sbr.rel (0) target = $region21
    $region20: #{tpu_custom_call.1} parent=1 // pred_region
      _
    $region21: #{tpu_custom_call.1} parent=1 // pred_fallthru
      _
    // Predicated region
    $region22: #{tpu_custom_call.1} parent=1 // pred_check
      _
    $region23: #{tpu_custom_call.1} parent=1 // pred_check_branch
      %47 = sbr.rel (0) target = $region25
    $region24: #{tpu_custom_call.1} parent=1 // pred_region
      _
    $region25: #{tpu_custom_call.1} parent=1 // pred_fallthru
      _
    // Predicated region
    $region26: #{tpu_custom_call.1} parent=1 // pred_check
      _
    $region27: #{tpu_custom_call.1} parent=1 // pred_check_branch
      %49 = sbr.rel (0) target = $region29
    $region28: #{tpu_custom_call.1} parent=1 // pred_region
      _
    $region29: #{tpu_custom_call.1} parent=1 // pred_fallthru
      _
    // Predicated region
    $region30: #{tpu_custom_call.1} parent=1 // pred_check
      _
    $region31: #{tpu_custom_call.1} parent=1 // pred_check_branch
      %51 = sbr.rel (0) target = $region33
    $region32: #{tpu_custom_call.1} parent=1 // pred_region
      _
    $region33: #{tpu_custom_call.1} parent=1 // pred_fallthru
      _
    // Predicated region
    $region34: #{tpu_custom_call.1} parent=1 // pred_check
      _
    $region35: #{tpu_custom_call.1} parent=1 // pred_check_branch
      %53 = sbr.rel (0) target = $region37
    $region36: #{tpu_custom_call.1} parent=1 // pred_region
      %54 = dma.done [#allocation3], 512
    $region37: #{tpu_custom_call.1} parent=1 // pred_fallthru
      _
    // Predicated region
    $region38: #{tpu_custom_call.1} parent=1 // pred_check
      _
    $region39: #{tpu_custom_call.1} parent=1 // pred_check_branch
      %56 = sbr.rel (0) target = $region41
    $region40: #{tpu_custom_call.1} parent=1 // pred_region
      %57 = dma.done [#allocation6], 256
    $region41: #{tpu_custom_call.1} parent=1 // pred_fallthru
      _
    %v59 = vld [vmem:[%s0] sm:$0xff]
    %v60 = vld [vmem:[%s0 + $0x8] sm:$0xff]
    %v61 = vpack.c.bf16 %v60, %v59
    %v62 = vld [vmem:[%s1] sm:$0xf]
    %v63 = vld [vmem:[%s1 + $0x4] sm:$0xf]
    %v64 = vld [vmem:[%s1 + $0x8] sm:$0xf]
    %v65 = vld [vmem:[%s1 + $0xc] sm:$0xf]
    %v66 = vld [vmem:[%s5] sm:$0x1]
    %v67 = vlaneseq
    %v68 = vshrl.u32 %v67, 7
    %v69 = vsub.s32 0, %v68
    %v70 = vrot.slane %v66, %v69
    %v75 = vunpack.c.l.b16 %v62
    %v76 = vunpack.c.l.b16 %v63
    %v77 = vunpack.c.l.b16 %v64
    %v78 = vunpack.c.l.b16 %v65
    %v79 = vpack.c.b16 %v76, %v75
    %v80 = vpack.c.b16 %v78, %v77
    %vm83 = vcmask 261120
    %v85 = vsel %vm83, %v61, 0
    %87 = vmatprep.subr.bf16.mxu0 0
    %88 = vmatpush1.bf16.msra.mxu0 %v79
    %89 = vmatprep.subr.bf16.mxu0 0
    %90 = vmatpush1.bf16.msra.mxu0 %v80
    %91 = vmatprep.subr.bf16.mxu0 0
    %92 = vmatpush1.bf16.msra.mxu0 0
    %93 = vmatprep.subr.bf16.mxu0 0
    %94 = vmatpush1.bf16.msra.mxu0 0
    %95 = vmatprep.subr.bf16.mxu0 0
    %96 = vmatpush1.bf16.msra.mxu0 0
    %97 = vmatprep.subr.bf16.mxu0 0
    %98 = vmatpush1.bf16.msra.mxu0 0
    %99 = vmatprep.subr.bf16.mxu0 0
    %100 = vmatpush1.bf16.msra.mxu0 0
    %101 = vmatprep.subr.bf16.mxu0 0
    %102 = vmatpush1.bf16.msra.mxu0 0
    %103 = vmatprep.subr.bf16.mxu0 0
    %104 = vmatpush1.bf16.msra.mxu0 0
    %105 = vmatprep.subr.bf16.mxu0 0
    %106 = vmatpush1.bf16.msra.mxu0 0
    %107 = vmatprep.subr.bf16.mxu0 0
    %108 = vmatpush1.bf16.msra.mxu0 0
    %109 = vmatprep.subr.bf16.mxu0 0
    %110 = vmatpush1.bf16.msra.mxu0 0
    %111 = vmatprep.subr.bf16.mxu0 0
    %112 = vmatpush1.bf16.msra.mxu0 0
    %113 = vmatprep.subr.bf16.mxu0 0
    %114 = vmatpush1.bf16.msra.mxu0 0
    %115 = vmatprep.subr.bf16.mxu0 0
    %116 = vmatpush1.bf16.msra.mxu0 0
    %117 = vmatprep.subr.bf16.mxu0 0
    %118 = vmatpush1.bf16.msra.mxu0 0
    %119 = vmatprep.mubr.bf16.mxu0 0
    %120 = vmatmul.mubr.bf16.gmra.mrb[0].mxu0 %v85
    %v121 = vpop.f32.mrb[0].mxu0
    %v122 = vadd.f32 %v70, %v121
    %v123 = vpop.f32.mrb[0].mxu0
    %v124 = vpop.f32.mrb[0].mxu0
    %v125 = vadd.f32 %v70, %v124
    %v126 = vpop.f32.mrb[0].mxu0
    %127 = vdwg.mxu0
    %v128 = vmul.f32 %v122, 0.35355338
    %v129 = vmul.f32 %v125, 0.35355338
    %v130 = vpack.c.bf16 %v129, %v128
    %v131 = vpack.c.bf16 %v125, %v122
    %v132 = vld [vmem:[#allocation2] sm:$0xf]
    %v133 = vld [vmem:[#allocation2 + $0x4] sm:$0xf]
    %v134 = vld [vmem:[#allocation2 + $0x8] sm:$0xf]
    %v135 = vld [vmem:[#allocation2 + $0xc] sm:$0xf]
    %137 = vrot.lane.b32.xlu0 %v131, 96
    %v138 = vpop.permute.xlu0 %137
    %vm139 = vcmask 64512
    %v141 = vsel %vm139, %v130, 0
    %v144 = vsel %vm139, %v138, 0
    %146 = vmatprep.subr.bf16.mxu0 0
    %147 = vmatpush1.bf16.xpose.msra.mxu0 %v144
    %148 = vmatprep.subr.bf16.mxu0 0
    %149 = vmatpush1.bf16.xpose.msra.mxu0 0
    %150 = vmatprep.subr.bf16.mxu0 0
    %151 = vmatpush1.bf16.xpose.msra.mxu0 0
    %152 = vmatprep.subr.bf16.mxu0 0
    %153 = vmatpush1.bf16.xpose.msra.mxu0 0
    %154 = vmatprep.subr.bf16.mxu0 0
    %155 = vmatpush1.bf16.xpose.msra.mxu0 0
    %156 = vmatprep.subr.bf16.mxu0 0
    %157 = vmatpush1.bf16.xpose.msra.mxu0 0
    %158 = vmatprep.subr.bf16.mxu0 0
    %159 = vmatpush1.bf16.xpose.msra.mxu0 0
    %160 = vmatprep.subr.bf16.mxu0 0
    %161 = vmatpush1.bf16.xpose.msra.mxu0 0
    %162 = vmatprep.subr.bf16.mxu0 0
    %163 = vmatpush1.bf16.xpose.msra.mxu0 0
    %164 = vmatprep.subr.bf16.mxu0 0
    %165 = vmatpush1.bf16.xpose.msra.mxu0 0
    %166 = vmatprep.subr.bf16.mxu0 0
    %167 = vmatpush1.bf16.xpose.msra.mxu0 0
    %168 = vmatprep.subr.bf16.mxu0 0
    %169 = vmatpush1.bf16.xpose.msra.mxu0 0
    %170 = vmatprep.subr.bf16.mxu0 0
    %171 = vmatpush1.bf16.xpose.msra.mxu0 0
    %172 = vmatprep.subr.bf16.mxu0 0
    %173 = vmatpush1.bf16.xpose.msra.mxu0 0
    %174 = vmatprep.subr.bf16.mxu0 0
    %175 = vmatpush1.bf16.xpose.msra.mxu0 0
    %176 = vmatprep.subr.bf16.mxu0 0
    %177 = vmatpush1.bf16.xpose.msra.mxu0 0
    %178 = vmatprep.mubr.bf16.mxu0 0
    %179 = vmatmul.mubr.bf16.gmra.mrb[0].mxu0 %v141
    %v180 = vpop.f32.mrb[0].mxu0
    %v181 = vadd.f32 0.0, %v180
    %v182 = vpop.f32.mrb[0].mxu0
    %v183 = vpop.f32.mrb[0].mxu0
    %v184 = vpop.f32.mrb[0].mxu0
    %185 = vdwg.mxu0
    %v186 = vsel %vm139, %v181, -inf
    %187 = vmax.xlane.f32.xlu0 %v186
    %v188 = vpop.xlane.xlu0 %187
    %v189 = vsub.f32 %v181, %v188
    %v190 = vmul.f32 %v189, 1.442695
    %v191 = vpow.pop %v190
    %v192 = vsel %vm139, %v191, 0.0
    %193 = vadd.xlane.f32.xlu0 %v192
    %v194 = vpop.xlane.xlu0 %193
    %v195 = vrcp.pop %v194
    %v196 = vmul.f32 %v191, %v195
    %v197 = vpack.c.bf16 %v196, %v196
    %198 = vrot.lane.b32.xlu0 %v131, 64
    %v199 = vpop.permute.xlu0 %198
    %v201 = vsel %vm139, %v197, 0
    %vm203 = vcmask 1043456
    %v205 = vsel %vm203, %v199, 0
    %207 = vmatprep.subr.bf16.mxu0 0
    %208 = vmatpush1.bf16.msra.mxu0 %v205
    %209 = vmatprep.subr.bf16.mxu0 0
    %210 = vmatpush1.bf16.msra.mxu0 0
    %211 = vmatprep.subr.bf16.mxu0 0
    %212 = vmatpush1.bf16.msra.mxu0 0
    %213 = vmatprep.subr.bf16.mxu0 0
    %214 = vmatpush1.bf16.msra.mxu0 0
    %215 = vmatprep.subr.bf16.mxu0 0
    %216 = vmatpush1.bf16.msra.mxu0 0
    %217 = vmatprep.subr.bf16.mxu0 0
    %218 = vmatpush1.bf16.msra.mxu0 0
    %219 = vmatprep.subr.bf16.mxu0 0
    %220 = vmatpush1.bf16.msra.mxu0 0
    %221 = vmatprep.subr.bf16.mxu0 0
    %222 = vmatpush1.bf16.msra.mxu0 0
    %223 = vmatprep.subr.bf16.mxu0 0
    %224 = vmatpush1.bf16.msra.mxu0 0
    %225 = vmatprep.subr.bf16.mxu0 0
    %226 = vmatpush1.bf16.msra.mxu0 0
    %227 = vmatprep.subr.bf16.mxu0 0
    %228 = vmatpush1.bf16.msra.mxu0 0
    %229 = vmatprep.subr.bf16.mxu0 0
    %230 = vmatpush1.bf16.msra.mxu0 0
    %231 = vmatprep.subr.bf16.mxu0 0
    %232 = vmatpush1.bf16.msra.mxu0 0
    %233 = vmatprep.subr.bf16.mxu0 0
    %234 = vmatpush1.bf16.msra.mxu0 0
    %235 = vmatprep.subr.bf16.mxu0 0
    %236 = vmatpush1.bf16.msra.mxu0 0
    %237 = vmatprep.subr.bf16.mxu0 0
    %238 = vmatpush1.bf16.msra.mxu0 0
    %239 = vmatprep.mubr.bf16.mxu0 0
    %240 = vmatmul.mubr.bf16.gmra.mrb[0].mxu0 %v201
    %v241 = vpop.f32.mrb[0].mxu0
    %v242 = vadd.f32 0.0, %v241
    %v243 = vpop.f32.mrb[0].mxu0
    %v244 = vpop.f32.mrb[0].mxu0
    %v245 = vpop.f32.mrb[0].mxu0
    %246 = vdwg.mxu0
    %v247 = vpack.c.bf16 %v242, %v242
    %249 = vrot.lane.b32.xlu0 %v130, 120
    %v250 = vpop.permute.xlu0 %249
    %251 = vrot.lane.b32.xlu0 %v131, 88
    %v252 = vpop.permute.xlu0 %251
    %v254 = vsel %vm139, %v250, 0
    %v257 = vsel %vm139, %v252, 0
    %259 = vmatprep.subr.bf16.mxu0 0
    %260 = vmatpush1.bf16.xpose.msra.mxu0 %v257
    %261 = vmatprep.subr.bf16.mxu0 0
    %262 = vmatpush1.bf16.xpose.msra.mxu0 0
    %263 = vmatprep.subr.bf16.mxu0 0
    %264 = vmatpush1.bf16.xpose.msra.mxu0 0
    %265 = vmatprep.subr.bf16.mxu0 0
    %266 = vmatpush1.bf16.xpose.msra.mxu0 0
    %267 = vmatprep.subr.bf16.mxu0 0
    %268 = vmatpush1.bf16.xpose.msra.mxu0 0
    %269 = vmatprep.subr.bf16.mxu0 0
    %270 = vmatpush1.bf16.xpose.msra.mxu0 0
    %271 = vmatprep.subr.bf16.mxu0 0
    %272 = vmatpush1.bf16.xpose.msra.mxu0 0
    %273 = vmatprep.subr.bf16.mxu0 0
    %274 = vmatpush1.bf16.xpose.msra.mxu0 0
    %275 = vmatprep.subr.bf16.mxu0 0
    %276 = vmatpush1.bf16.xpose.msra.mxu0 0
    %277 = vmatprep.subr.bf16.mxu0 0
    %278 = vmatpush1.bf16.xpose.msra.mxu0 0
    %279 = vmatprep.subr.bf16.mxu0 0
    %280 = vmatpush1.bf16.xpose.msra.mxu0 0
    %281 = vmatprep.subr.bf16.mxu0 0
    %282 = vmatpush1.bf16.xpose.msra.mxu0 0
    %283 = vmatprep.subr.bf16.mxu0 0
    %284 = vmatpush1.bf16.xpose.msra.mxu0 0
    %285 = vmatprep.subr.bf16.mxu0 0
    %286 = vmatpush1.bf16.xpose.msra.mxu0 0
    %287 = vmatprep.subr.bf16.mxu0 0
    %288 = vmatpush1.bf16.xpose.msra.mxu0 0
    %289 = vmatprep.subr.bf16.mxu0 0
    %290 = vmatpush1.bf16.xpose.msra.mxu0 0
    %291 = vmatprep.mubr.bf16.mxu0 0
    %292 = vmatmul.mubr.bf16.gmra.mrb[0].mxu0 %v254
    %v293 = vpop.f32.mrb[0].mxu0
    %v294 = vadd.f32 0.0, %v293
    %v295 = vpop.f32.mrb[0].mxu0
    %v296 = vpop.f32.mrb[0].mxu0
    %v297 = vpop.f32.mrb[0].mxu0
    %298 = vdwg.mxu0
    %v299 = vsel %vm139, %v294, -inf
    %300 = vmax.xlane.f32.xlu0 %v299
    %v301 = vpop.xlane.xlu0 %300
    %v302 = vsub.f32 %v294, %v301
    %v303 = vmul.f32 %v302, 1.442695
    %v304 = vpow.pop %v303
    %v305 = vsel %vm139, %v304, 0.0
    %306 = vadd.xlane.f32.xlu0 %v305
    %v307 = vpop.xlane.xlu0 %306
    %v308 = vrcp.pop %v307
    %v309 = vmul.f32 %v304, %v308
    %v310 = vpack.c.bf16 %v309, %v309
    %311 = vrot.lane.b32.xlu0 %v131, 56
    %v312 = vpop.permute.xlu0 %311
    %v314 = vsel %vm139, %v310, 0
    %v317 = vsel %vm203, %v312, 0
    %319 = vmatprep.subr.bf16.mxu0 0
    %320 = vmatpush1.bf16.msra.mxu0 %v317
    %321 = vmatprep.subr.bf16.mxu0 0
    %322 = vmatpush1.bf16.msra.mxu0 0
    %323 = vmatprep.subr.bf16.mxu0 0
    %324 = vmatpush1.bf16.msra.mxu0 0
    %325 = vmatprep.subr.bf16.mxu0 0
    %326 = vmatpush1.bf16.msra.mxu0 0
    %327 = vmatprep.subr.bf16.mxu0 0
    %328 = vmatpush1.bf16.msra.mxu0 0
    %329 = vmatprep.subr.bf16.mxu0 0
    %330 = vmatpush1.bf16.msra.mxu0 0
    %331 = vmatprep.subr.bf16.mxu0 0
    %332 = vmatpush1.bf16.msra.mxu0 0
    %333 = vmatprep.subr.bf16.mxu0 0
    %334 = vmatpush1.bf16.msra.mxu0 0
    %335 = vmatprep.subr.bf16.mxu0 0
    %336 = vmatpush1.bf16.msra.mxu0 0
    %337 = vmatprep.subr.bf16.mxu0 0
    %338 = vmatpush1.bf16.msra.mxu0 0
    %339 = vmatprep.subr.bf16.mxu0 0
    %340 = vmatpush1.bf16.msra.mxu0 0
    %341 = vmatprep.subr.bf16.mxu0 0
    %342 = vmatpush1.bf16.msra.mxu0 0
    %343 = vmatprep.subr.bf16.mxu0 0
    %344 = vmatpush1.bf16.msra.mxu0 0
    %345 = vmatprep.subr.bf16.mxu0 0
    %346 = vmatpush1.bf16.msra.mxu0 0
    %347 = vmatprep.subr.bf16.mxu0 0
    %348 = vmatpush1.bf16.msra.mxu0 0
    %349 = vmatprep.subr.bf16.mxu0 0
    %350 = vmatpush1.bf16.msra.mxu0 0
    %351 = vmatprep.mubr.bf16.mxu0 0
    %352 = vmatmul.mubr.bf16.gmra.mrb[0].mxu0 %v314
    %v353 = vpop.f32.mrb[0].mxu0
    %v354 = vadd.f32 0.0, %v353
    %v355 = vpop.f32.mrb[0].mxu0
    %v356 = vpop.f32.mrb[0].mxu0
    %v357 = vpop.f32.mrb[0].mxu0
    %358 = vdwg.mxu0
    %v359 = vpack.c.bf16 %v354, %v354
    %v361 = vsel %vm139, %v359, 0
    %v364 = vsel %vm203, %v133, 0
    %366 = vmatprep.subr.bf16.mxu0 0
    %367 = vmatpush1.bf16.msra.mxu0 %v364
    %368 = vmatprep.subr.bf16.mxu0 0
    %369 = vmatpush1.bf16.msra.mxu0 0
    %370 = vmatprep.subr.bf16.mxu0 0
    %371 = vmatpush1.bf16.msra.mxu0 0
    %372 = vmatprep.subr.bf16.mxu0 0
    %373 = vmatpush1.bf16.msra.mxu0 0
    %374 = vmatprep.subr.bf16.mxu0 0
    %375 = vmatpush1.bf16.msra.mxu0 0
    %376 = vmatprep.subr.bf16.mxu0 0
    %377 = vmatpush1.bf16.msra.mxu0 0
    %378 = vmatprep.subr.bf16.mxu0 0
    %379 = vmatpush1.bf16.msra.mxu0 0
    %380 = vmatprep.subr.bf16.mxu0 0
    %381 = vmatpush1.bf16.msra.mxu0 0
    %382 = vmatprep.subr.bf16.mxu0 0
    %383 = vmatpush1.bf16.msra.mxu0 0
    %384 = vmatprep.subr.bf16.mxu0 0
    %385 = vmatpush1.bf16.msra.mxu0 0
    %386 = vmatprep.subr.bf16.mxu0 0
    %387 = vmatpush1.bf16.msra.mxu0 0
    %388 = vmatprep.subr.bf16.mxu0 0
    %389 = vmatpush1.bf16.msra.mxu0 0
    %390 = vmatprep.subr.bf16.mxu0 0
    %391 = vmatpush1.bf16.msra.mxu0 0
    %392 = vmatprep.subr.bf16.mxu0 0
    %393 = vmatpush1.bf16.msra.mxu0 0
    %394 = vmatprep.subr.bf16.mxu0 0
    %395 = vmatpush1.bf16.msra.mxu0 0
    %396 = vmatprep.subr.bf16.mxu0 0
    %397 = vmatpush1.bf16.msra.mxu0 0
    %398 = vmatprep.mubr.bf16.mxu0 0
    %399 = vmatmul.mubr.bf16.gmra.mrb[0].mxu0 %v361
    %v400 = vpop.f32.mrb[0].mxu0
    %v401 = vadd.f32 0.0, %v400
    %v402 = vpop.f32.mrb[0].mxu0
    %v403 = vpop.f32.mrb[0].mxu0
    %v404 = vpop.f32.mrb[0].mxu0
    %405 = vdwg.mxu0
    %v407 = vsel %vm139, %v247, 0
    %v410 = vsel %vm203, %v132, 0
    %412 = vmatprep.subr.bf16.mxu0 0
    %413 = vmatpush1.bf16.msra.mxu0 %v410
    %414 = vmatprep.subr.bf16.mxu0 0
    %415 = vmatpush1.bf16.msra.mxu0 0
    %416 = vmatprep.subr.bf16.mxu0 0
    %417 = vmatpush1.bf16.msra.mxu0 0
    %418 = vmatprep.subr.bf16.mxu0 0
    %419 = vmatpush1.bf16.msra.mxu0 0
    %420 = vmatprep.subr.bf16.mxu0 0
    %421 = vmatpush1.bf16.msra.mxu0 0
    %422 = vmatprep.subr.bf16.mxu0 0
    %423 = vmatpush1.bf16.msra.mxu0 0
    %424 = vmatprep.subr.bf16.mxu0 0
    %425 = vmatpush1.bf16.msra.mxu0 0
    %426 = vmatprep.subr.bf16.mxu0 0
    %427 = vmatpush1.bf16.msra.mxu0 0
    %428 = vmatprep.subr.bf16.mxu0 0
    %429 = vmatpush1.bf16.msra.mxu0 0
    %430 = vmatprep.subr.bf16.mxu0 0
    %431 = vmatpush1.bf16.msra.mxu0 0
    %432 = vmatprep.subr.bf16.mxu0 0
    %433 = vmatpush1.bf16.msra.mxu0 0
    %434 = vmatprep.subr.bf16.mxu0 0
    %435 = vmatpush1.bf16.msra.mxu0 0
    %436 = vmatprep.subr.bf16.mxu0 0
    %437 = vmatpush1.bf16.msra.mxu0 0
    %438 = vmatprep.subr.bf16.mxu0 0
    %439 = vmatpush1.bf16.msra.mxu0 0
    %440 = vmatprep.subr.bf16.mxu0 0
    %441 = vmatpush1.bf16.msra.mxu0 0
    %442 = vmatprep.subr.bf16.mxu0 0
    %443 = vmatpush1.bf16.msra.mxu0 0
    %444 = vmatprep.mubr.bf16.mxu0 0
    %445 = vmatmul.mubr.bf16.gmra.mrb[0].mxu0 %v407
    %v446 = vpop.f32.mrb[0].mxu0
    %v447 = vadd.f32 %v401, %v446
    %v448 = vpop.f32.mrb[0].mxu0
    %v449 = vpop.f32.mrb[0].mxu0
    %v450 = vpop.f32.mrb[0].mxu0
    %451 = vdwg.mxu0
    %452 = vrot.lane.b32.xlu0 %v130, 112
    %v453 = vpop.permute.xlu0 %452
    %454 = vrot.lane.b32.xlu0 %v131, 80
    %v455 = vpop.permute.xlu0 %454
    %v457 = vsel %vm139, %v453, 0
    %v460 = vsel %vm139, %v455, 0
    %462 = vmatprep.subr.bf16.mxu0 0
    %463 = vmatpush1.bf16.xpose.msra.mxu0 %v460
    %464 = vmatprep.subr.bf16.mxu0 0
    %465 = vmatpush1.bf16.xpose.msra.mxu0 0
    %466 = vmatprep.subr.bf16.mxu0 0
    %467 = vmatpush1.bf16.xpose.msra.mxu0 0
    %468 = vmatprep.subr.bf16.mxu0 0
    %469 = vmatpush1.bf16.xpose.msra.mxu0 0
    %470 = vmatprep.subr.bf16.mxu0 0
    %471 = vmatpush1.bf16.xpose.msra.mxu0 0
    %472 = vmatprep.subr.bf16.mxu0 0
    %473 = vmatpush1.bf16.xpose.msra.mxu0 0
    %474 = vmatprep.subr.bf16.mxu0 0
    %475 = vmatpush1.bf16.xpose.msra.mxu0 0
    %476 = vmatprep.subr.bf16.mxu0 0
    %477 = vmatpush1.bf16.xpose.msra.mxu0 0
    %478 = vmatprep.subr.bf16.mxu0 0
    %479 = vmatpush1.bf16.xpose.msra.mxu0 0
    %480 = vmatprep.subr.bf16.mxu0 0
    %481 = vmatpush1.bf16.xpose.msra.mxu0 0
    %482 = vmatprep.subr.bf16.mxu0 0
    %483 = vmatpush1.bf16.xpose.msra.mxu0 0
    %484 = vmatprep.subr.bf16.mxu0 0
    %485 = vmatpush1.bf16.xpose.msra.mxu0 0
    %486 = vmatprep.subr.bf16.mxu0 0
    %487 = vmatpush1.bf16.xpose.msra.mxu0 0
    %488 = vmatprep.subr.bf16.mxu0 0
    %489 = vmatpush1.bf16.xpose.msra.mxu0 0
    %490 = vmatprep.subr.bf16.mxu0 0
    %491 = vmatpush1.bf16.xpose.msra.mxu0 0
    %492 = vmatprep.subr.bf16.mxu0 0
    %493 = vmatpush1.bf16.xpose.msra.mxu0 0
    %494 = vmatprep.mubr.bf16.mxu0 0
    %495 = vmatmul.mubr.bf16.gmra.mrb[0].mxu0 %v457
    %v496 = vpop.f32.mrb[0].mxu0
    %v497 = vadd.f32 0.0, %v496
    %v498 = vpop.f32.mrb[0].mxu0
    %v499 = vpop.f32.mrb[0].mxu0
    %v500 = vpop.f32.mrb[0].mxu0
    %501 = vdwg.mxu0
    %v502 = vsel %vm139, %v497, -inf
    %503 = vmax.xlane.f32.xlu0 %v502
    %v504 = vpop.xlane.xlu0 %503
    %v505 = vsub.f32 %v497, %v504
    %v506 = vmul.f32 %v505, 1.442695
    %v507 = vpow.pop %v506
    %v508 = vsel %vm139, %v507, 0.0
    %509 = vadd.xlane.f32.xlu0 %v508
    %v510 = vpop.xlane.xlu0 %509
    %v511 = vrcp.pop %v510
    %v512 = vmul.f32 %v507, %v511
    %v513 = vpack.c.bf16 %v512, %v512
    %514 = vrot.lane.b32.xlu0 %v131, 48
    %v515 = vpop.permute.xlu0 %514
    %v517 = vsel %vm139, %v513, 0
    %v520 = vsel %vm203, %v515, 0
    %522 = vmatprep.subr.bf16.mxu0 0
    %523 = vmatpush1.bf16.msra.mxu0 %v520
    %524 = vmatprep.subr.bf16.mxu0 0
    %525 = vmatpush1.bf16.msra.mxu0 0
    %526 = vmatprep.subr.bf16.mxu0 0
    %527 = vmatpush1.bf16.msra.mxu0 0
    %528 = vmatprep.subr.bf16.mxu0 0
    %529 = vmatpush1.bf16.msra.mxu0 0
    %530 = vmatprep.subr.bf16.mxu0 0
    %531 = vmatpush1.bf16.msra.mxu0 0
    %532 = vmatprep.subr.bf16.mxu0 0
    %533 = vmatpush1.bf16.msra.mxu0 0
    %534 = vmatprep.subr.bf16.mxu0 0
    %535 = vmatpush1.bf16.msra.mxu0 0
    %536 = vmatprep.subr.bf16.mxu0 0
    %537 = vmatpush1.bf16.msra.mxu0 0
    %538 = vmatprep.subr.bf16.mxu0 0
    %539 = vmatpush1.bf16.msra.mxu0 0
    %540 = vmatprep.subr.bf16.mxu0 0
    %541 = vmatpush1.bf16.msra.mxu0 0
    %542 = vmatprep.subr.bf16.mxu0 0
    %543 = vmatpush1.bf16.msra.mxu0 0
    %544 = vmatprep.subr.bf16.mxu0 0
    %545 = vmatpush1.bf16.msra.mxu0 0
    %546 = vmatprep.subr.bf16.mxu0 0
    %547 = vmatpush1.bf16.msra.mxu0 0
    %548 = vmatprep.subr.bf16.mxu0 0
    %549 = vmatpush1.bf16.msra.mxu0 0
    %550 = vmatprep.subr.bf16.mxu0 0
    %551 = vmatpush1.bf16.msra.mxu0 0
    %552 = vmatprep.subr.bf16.mxu0 0
    %553 = vmatpush1.bf16.msra.mxu0 0
    %554 = vmatprep.mubr.bf16.mxu0 0
    %555 = vmatmul.mubr.bf16.gmra.mrb[0].mxu0 %v517
    %v556 = vpop.f32.mrb[0].mxu0
    %v557 = vadd.f32 0.0, %v556
    %v558 = vpop.f32.mrb[0].mxu0
    %v559 = vpop.f32.mrb[0].mxu0
    %v560 = vpop.f32.mrb[0].mxu0
    %561 = vdwg.mxu0
    %v562 = vpack.c.bf16 %v557, %v557
    %v564 = vsel %vm139, %v562, 0
    %v567 = vsel %vm203, %v134, 0
    %569 = vmatprep.subr.bf16.mxu0 0
    %570 = vmatpush1.bf16.msra.mxu0 %v567
    %571 = vmatprep.subr.bf16.mxu0 0
    %572 = vmatpush1.bf16.msra.mxu0 0
    %573 = vmatprep.subr.bf16.mxu0 0
    %574 = vmatpush1.bf16.msra.mxu0 0
    %575 = vmatprep.subr.bf16.mxu0 0
    %576 = vmatpush1.bf16.msra.mxu0 0
    %577 = vmatprep.subr.bf16.mxu0 0
    %578 = vmatpush1.bf16.msra.mxu0 0
    %579 = vmatprep.subr.bf16.mxu0 0
    %580 = vmatpush1.bf16.msra.mxu0 0
    %581 = vmatprep.subr.bf16.mxu0 0
    %582 = vmatpush1.bf16.msra.mxu0 0
    %583 = vmatprep.subr.bf16.mxu0 0
    %584 = vmatpush1.bf16.msra.mxu0 0
    %585 = vmatprep.subr.bf16.mxu0 0
    %586 = vmatpush1.bf16.msra.mxu0 0
    %587 = vmatprep.subr.bf16.mxu0 0
    %588 = vmatpush1.bf16.msra.mxu0 0
    %589 = vmatprep.subr.bf16.mxu0 0
    %590 = vmatpush1.bf16.msra.mxu0 0
    %591 = vmatprep.subr.bf16.mxu0 0
    %592 = vmatpush1.bf16.msra.mxu0 0
    %593 = vmatprep.subr.bf16.mxu0 0
    %594 = vmatpush1.bf16.msra.mxu0 0
    %595 = vmatprep.subr.bf16.mxu0 0
    %596 = vmatpush1.bf16.msra.mxu0 0
    %597 = vmatprep.subr.bf16.mxu0 0
    %598 = vmatpush1.bf16.msra.mxu0 0
    %599 = vmatprep.subr.bf16.mxu0 0
    %600 = vmatpush1.bf16.msra.mxu0 0
    %601 = vmatprep.mubr.bf16.mxu0 0
    %602 = vmatmul.mubr.bf16.gmra.mrb[0].mxu0 %v564
    %v603 = vpop.f32.mrb[0].mxu0
    %v604 = vadd.f32 0.0, %v603
    %v605 = vpop.f32.mrb[0].mxu0
    %v606 = vpop.f32.mrb[0].mxu0
    %v607 = vpop.f32.mrb[0].mxu0
    %608 = vdwg.mxu0
    %v609 = vadd.f32 %v447, %v604
    %610 = vrot.lane.b32.xlu0 %v130, 104
    %v611 = vpop.permute.xlu0 %610
    %612 = vrot.lane.b32.xlu0 %v131, 72
    %v613 = vpop.permute.xlu0 %612
    %v615 = vsel %vm139, %v611, 0
    %v618 = vsel %vm139, %v613, 0
    %620 = vmatprep.subr.bf16.mxu0 0
    %621 = vmatpush1.bf16.xpose.msra.mxu0 %v618
    %622 = vmatprep.subr.bf16.mxu0 0
    %623 = vmatpush1.bf16.xpose.msra.mxu0 0
    %624 = vmatprep.subr.bf16.mxu0 0
    %625 = vmatpush1.bf16.xpose.msra.mxu0 0
    %626 = vmatprep.subr.bf16.mxu0 0
    %627 = vmatpush1.bf16.xpose.msra.mxu0 0
    %628 = vmatprep.subr.bf16.mxu0 0
    %629 = vmatpush1.bf16.xpose.msra.mxu0 0
    %630 = vmatprep.subr.bf16.mxu0 0
    %631 = vmatpush1.bf16.xpose.msra.mxu0 0
    %632 = vmatprep.subr.bf16.mxu0 0
    %633 = vmatpush1.bf16.xpose.msra.mxu0 0
    %634 = vmatprep.subr.bf16.mxu0 0
    %635 = vmatpush1.bf16.xpose.msra.mxu0 0
    %636 = vmatprep.subr.bf16.mxu0 0
    %637 = vmatpush1.bf16.xpose.msra.mxu0 0
    %638 = vmatprep.subr.bf16.mxu0 0
    %639 = vmatpush1.bf16.xpose.msra.mxu0 0
    %640 = vmatprep.subr.bf16.mxu0 0
    %641 = vmatpush1.bf16.xpose.msra.mxu0 0
    %642 = vmatprep.subr.bf16.mxu0 0
    %643 = vmatpush1.bf16.xpose.msra.mxu0 0
    %644 = vmatprep.subr.bf16.mxu0 0
    %645 = vmatpush1.bf16.xpose.msra.mxu0 0
    %646 = vmatprep.subr.bf16.mxu0 0
    %647 = vmatpush1.bf16.xpose.msra.mxu0 0
    %648 = vmatprep.subr.bf16.mxu0 0
    %649 = vmatpush1.bf16.xpose.msra.mxu0 0
    %650 = vmatprep.subr.bf16.mxu0 0
    %651 = vmatpush1.bf16.xpose.msra.mxu0 0
    %652 = vmatprep.mubr.bf16.mxu0 0
    %653 = vmatmul.mubr.bf16.gmra.mrb[0].mxu0 %v615
    %v654 = vpop.f32.mrb[0].mxu0
    %v655 = vadd.f32 0.0, %v654
    %v656 = vpop.f32.mrb[0].mxu0
    %v657 = vpop.f32.mrb[0].mxu0
    %v658 = vpop.f32.mrb[0].mxu0
    %659 = vdwg.mxu0
    %v660 = vsel %vm139, %v655, -inf
    %661 = vmax.xlane.f32.xlu0 %v660
    %v662 = vpop.xlane.xlu0 %661
    %v663 = vsub.f32 %v655, %v662
    %v664 = vmul.f32 %v663, 1.442695
    %v665 = vpow.pop %v664
    %v666 = vsel %vm139, %v665, 0.0
    %667 = vadd.xlane.f32.xlu0 %v666
    %v668 = vpop.xlane.xlu0 %667
    %v669 = vrcp.pop %v668
    %v670 = vmul.f32 %v665, %v669
    %v671 = vpack.c.bf16 %v670, %v670
    %672 = vrot.lane.b32.xlu0 %v131, 40
    %v673 = vpop.permute.xlu0 %672
    %v675 = vsel %vm139, %v671, 0
    %v678 = vsel %vm203, %v673, 0
    %680 = vmatprep.subr.bf16.mxu0 0
    %681 = vmatpush1.bf16.msra.mxu0 %v678
    %682 = vmatprep.subr.bf16.mxu0 0
    %683 = vmatpush1.bf16.msra.mxu0 0
    %684 = vmatprep.subr.bf16.mxu0 0
    %685 = vmatpush1.bf16.msra.mxu0 0
    %686 = vmatprep.subr.bf16.mxu0 0
    %687 = vmatpush1.bf16.msra.mxu0 0
    %688 = vmatprep.subr.bf16.mxu0 0
    %689 = vmatpush1.bf16.msra.mxu0 0
    %690 = vmatprep.subr.bf16.mxu0 0
    %691 = vmatpush1.bf16.msra.mxu0 0
    %692 = vmatprep.subr.bf16.mxu0 0
    %693 = vmatpush1.bf16.msra.mxu0 0
    %694 = vmatprep.subr.bf16.mxu0 0
    %695 = vmatpush1.bf16.msra.mxu0 0
    %696 = vmatprep.subr.bf16.mxu0 0
    %697 = vmatpush1.bf16.msra.mxu0 0
    %698 = vmatprep.subr.bf16.mxu0 0
    %699 = vmatpush1.bf16.msra.mxu0 0
    %700 = vmatprep.subr.bf16.mxu0 0
    %701 = vmatpush1.bf16.msra.mxu0 0
    %702 = vmatprep.subr.bf16.mxu0 0
    %703 = vmatpush1.bf16.msra.mxu0 0
    %704 = vmatprep.subr.bf16.mxu0 0
    %705 = vmatpush1.bf16.msra.mxu0 0
    %706 = vmatprep.subr.bf16.mxu0 0
    %707 = vmatpush1.bf16.msra.mxu0 0
    %708 = vmatprep.subr.bf16.mxu0 0
    %709 = vmatpush1.bf16.msra.mxu0 0
    %710 = vmatprep.subr.bf16.mxu0 0
    %711 = vmatpush1.bf16.msra.mxu0 0
    %712 = vmatprep.mubr.bf16.mxu0 0
    %713 = vmatmul.mubr.bf16.gmra.mrb[0].mxu0 %v675
    %v714 = vpop.f32.mrb[0].mxu0
    %v715 = vadd.f32 0.0, %v714
    %v716 = vpop.f32.mrb[0].mxu0
    %v717 = vpop.f32.mrb[0].mxu0
    %v718 = vpop.f32.mrb[0].mxu0
    %719 = vdwg.mxu0
    %v720 = vpack.c.bf16 %v715, %v715
    %v722 = vsel %vm139, %v720, 0
    %v725 = vsel %vm203, %v135, 0
    %727 = vmatprep.subr.bf16.mxu0 0
    %728 = vmatpush1.bf16.msra.mxu0 %v725
    %729 = vmatprep.subr.bf16.mxu0 0
    %730 = vmatpush1.bf16.msra.mxu0 0
    %731 = vmatprep.subr.bf16.mxu0 0
    %732 = vmatpush1.bf16.msra.mxu0 0
    %733 = vmatprep.subr.bf16.mxu0 0
    %734 = vmatpush1.bf16.msra.mxu0 0
    %735 = vmatprep.subr.bf16.mxu0 0
    %736 = vmatpush1.bf16.msra.mxu0 0
    %737 = vmatprep.subr.bf16.mxu0 0
    %738 = vmatpush1.bf16.msra.mxu0 0
    %739 = vmatprep.subr.bf16.mxu0 0
    %740 = vmatpush1.bf16.msra.mxu0 0
    %741 = vmatprep.subr.bf16.mxu0 0
    %742 = vmatpush1.bf16.msra.mxu0 0
    %743 = vmatprep.subr.bf16.mxu0 0
    %744 = vmatpush1.bf16.msra.mxu0 0
    %745 = vmatprep.subr.bf16.mxu0 0
    %746 = vmatpush1.bf16.msra.mxu0 0
    %747 = vmatprep.subr.bf16.mxu0 0
    %748 = vmatpush1.bf16.msra.mxu0 0
    %749 = vmatprep.subr.bf16.mxu0 0
    %750 = vmatpush1.bf16.msra.mxu0 0
    %751 = vmatprep.subr.bf16.mxu0 0
    %752 = vmatpush1.bf16.msra.mxu0 0
    %753 = vmatprep.subr.bf16.mxu0 0
    %754 = vmatpush1.bf16.msra.mxu0 0
    %755 = vmatprep.subr.bf16.mxu0 0
    %756 = vmatpush1.bf16.msra.mxu0 0
    %757 = vmatprep.subr.bf16.mxu0 0
    %758 = vmatpush1.bf16.msra.mxu0 0
    %759 = vmatprep.mubr.bf16.mxu0 0
    %760 = vmatmul.mubr.bf16.gmra.mrb[0].mxu0 %v722
    %v761 = vpop.f32.mrb[0].mxu0
    %v762 = vadd.f32 0.0, %v761
    %v763 = vpop.f32.mrb[0].mxu0
    %v764 = vpop.f32.mrb[0].mxu0
    %v765 = vpop.f32.mrb[0].mxu0
    %766 = vdwg.mxu0
    %v767 = vadd.f32 %v609, %v762
    %v768 = vrot.slane %v130, 4
    %v769 = vrot.slane %v131, 4
    %770 = vrot.lane.b32.xlu0 %v769, 96
    %v771 = vpop.permute.xlu0 %770
    %v773 = vsel %vm139, %v768, 0
    %v776 = vsel %vm139, %v771, 0
    %778 = vmatprep.subr.bf16.mxu0 0
    %779 = vmatpush1.bf16.xpose.msra.mxu0 %v776
    %780 = vmatprep.subr.bf16.mxu0 0
    %781 = vmatpush1.bf16.xpose.msra.mxu0 0
    %782 = vmatprep.subr.bf16.mxu0 0
    %783 = vmatpush1.bf16.xpose.msra.mxu0 0
    %784 = vmatprep.subr.bf16.mxu0 0
    %785 = vmatpush1.bf16.xpose.msra.mxu0 0
    %786 = vmatprep.subr.bf16.mxu0 0
    %787 = vmatpush1.bf16.xpose.msra.mxu0 0
    %788 = vmatprep.subr.bf16.mxu0 0
    %789 = vmatpush1.bf16.xpose.msra.mxu0 0
    %790 = vmatprep.subr.bf16.mxu0 0
    %791 = vmatpush1.bf16.xpose.msra.mxu0 0
    %792 = vmatprep.subr.bf16.mxu0 0
    %793 = vmatpush1.bf16.xpose.msra.mxu0 0
    %794 = vmatprep.subr.bf16.mxu0 0
    %795 = vmatpush1.bf16.xpose.msra.mxu0 0
    %796 = vmatprep.subr.bf16.mxu0 0
    %797 = vmatpush1.bf16.xpose.msra.mxu0 0
    %798 = vmatprep.subr.bf16.mxu0 0
    %799 = vmatpush1.bf16.xpose.msra.mxu0 0
    %800 = vmatprep.subr.bf16.mxu0 0
    %801 = vmatpush1.bf16.xpose.msra.mxu0 0
    %802 = vmatprep.subr.bf16.mxu0 0
    %803 = vmatpush1.bf16.xpose.msra.mxu0 0
    %804 = vmatprep.subr.bf16.mxu0 0
    %805 = vmatpush1.bf16.xpose.msra.mxu0 0
    %806 = vmatprep.subr.bf16.mxu0 0
    %807 = vmatpush1.bf16.xpose.msra.mxu0 0
    %808 = vmatprep.subr.bf16.mxu0 0
    %809 = vmatpush1.bf16.xpose.msra.mxu0 0
    %810 = vmatprep.mubr.bf16.mxu0 0
    %811 = vmatmul.mubr.bf16.gmra.mrb[0].mxu0 %v773
    %v812 = vpop.f32.mrb[0].mxu0
    %v813 = vadd.f32 0.0, %v812
    %v814 = vpop.f32.mrb[0].mxu0
    %v815 = vpop.f32.mrb[0].mxu0
    %v816 = vpop.f32.mrb[0].mxu0
    %817 = vdwg.mxu0
    %v818 = vsel %vm139, %v813, -inf
    %819 = vmax.xlane.f32.xlu0 %v818
    %v820 = vpop.xlane.xlu0 %819
    %v821 = vsub.f32 %v813, %v820
    %v822 = vmul.f32 %v821, 1.442695
    %v823 = vpow.pop %v822
    %v824 = vsel %vm139, %v823, 0.0
    %825 = vadd.xlane.f32.xlu0 %v824
    %v826 = vpop.xlane.xlu0 %825
    %v827 = vrcp.pop %v826
    %v828 = vmul.f32 %v823, %v827
    %v829 = vpack.c.bf16 %v828, %v828
    %830 = vrot.lane.b32.xlu0 %v769, 64
    %v831 = vpop.permute.xlu0 %830
    %v833 = vsel %vm139, %v829, 0
    %v836 = vsel %vm203, %v831, 0
    %838 = vmatprep.subr.bf16.mxu0 0
    %839 = vmatpush1.bf16.msra.mxu0 %v836
    %840 = vmatprep.subr.bf16.mxu0 0
    %841 = vmatpush1.bf16.msra.mxu0 0
    %842 = vmatprep.subr.bf16.mxu0 0
    %843 = vmatpush1.bf16.msra.mxu0 0
    %844 = vmatprep.subr.bf16.mxu0 0
    %845 = vmatpush1.bf16.msra.mxu0 0
    %846 = vmatprep.subr.bf16.mxu0 0
    %847 = vmatpush1.bf16.msra.mxu0 0
    %848 = vmatprep.subr.bf16.mxu0 0
    %849 = vmatpush1.bf16.msra.mxu0 0
    %850 = vmatprep.subr.bf16.mxu0 0
    %851 = vmatpush1.bf16.msra.mxu0 0
    %852 = vmatprep.subr.bf16.mxu0 0
    %853 = vmatpush1.bf16.msra.mxu0 0
    %854 = vmatprep.subr.bf16.mxu0 0
    %855 = vmatpush1.bf16.msra.mxu0 0
    %856 = vmatprep.subr.bf16.mxu0 0
    %857 = vmatpush1.bf16.msra.mxu0 0
    %858 = vmatprep.subr.bf16.mxu0 0
    %859 = vmatpush1.bf16.msra.mxu0 0
    %860 = vmatprep.subr.bf16.mxu0 0
    %861 = vmatpush1.bf16.msra.mxu0 0
    %862 = vmatprep.subr.bf16.mxu0 0
    %863 = vmatpush1.bf16.msra.mxu0 0
    %864 = vmatprep.subr.bf16.mxu0 0
    %865 = vmatpush1.bf16.msra.mxu0 0
    %866 = vmatprep.subr.bf16.mxu0 0
    %867 = vmatpush1.bf16.msra.mxu0 0
    %868 = vmatprep.subr.bf16.mxu0 0
    %869 = vmatpush1.bf16.msra.mxu0 0
    %870 = vmatprep.mubr.bf16.mxu0 0
    %871 = vmatmul.mubr.bf16.gmra.mrb[0].mxu0 %v833
    %v872 = vpop.f32.mrb[0].mxu0
    %v873 = vadd.f32 0.0, %v872
    %v874 = vpop.f32.mrb[0].mxu0
    %v875 = vpop.f32.mrb[0].mxu0
    %v876 = vpop.f32.mrb[0].mxu0
    %877 = vdwg.mxu0
    %v878 = vpack.c.bf16 %v873, %v873
    %879 = vrot.lane.b32.xlu0 %v768, 120
    %v880 = vpop.permute.xlu0 %879
    %881 = vrot.lane.b32.xlu0 %v769, 88
    %v882 = vpop.permute.xlu0 %881
    %v884 = vsel %vm139, %v880, 0
    %v887 = vsel %vm139, %v882, 0
    %889 = vmatprep.subr.bf16.mxu0 0
    %890 = vmatpush1.bf16.xpose.msra.mxu0 %v887
    %891 = vmatprep.subr.bf16.mxu0 0
    %892 = vmatpush1.bf16.xpose.msra.mxu0 0
    %893 = vmatprep.subr.bf16.mxu0 0
    %894 = vmatpush1.bf16.xpose.msra.mxu0 0
    %895 = vmatprep.subr.bf16.mxu0 0
    %896 = vmatpush1.bf16.xpose.msra.mxu0 0
    %897 = vmatprep.subr.bf16.mxu0 0
    %898 = vmatpush1.bf16.xpose.msra.mxu0 0
    %899 = vmatprep.subr.bf16.mxu0 0
    %900 = vmatpush1.bf16.xpose.msra.mxu0 0
    %901 = vmatprep.subr.bf16.mxu0 0
    %902 = vmatpush1.bf16.xpose.msra.mxu0 0
    %903 = vmatprep.subr.bf16.mxu0 0
    %904 = vmatpush1.bf16.xpose.msra.mxu0 0
    %905 = vmatprep.subr.bf16.mxu0 0
    %906 = vmatpush1.bf16.xpose.msra.mxu0 0
    %907 = vmatprep.subr.bf16.mxu0 0
    %908 = vmatpush1.bf16.xpose.msra.mxu0 0
    %909 = vmatprep.subr.bf16.mxu0 0
    %910 = vmatpush1.bf16.xpose.msra.mxu0 0
    %911 = vmatprep.subr.bf16.mxu0 0
    %912 = vmatpush1.bf16.xpose.msra.mxu0 0
    %913 = vmatprep.subr.bf16.mxu0 0
    %914 = vmatpush1.bf16.xpose.msra.mxu0 0
    %915 = vmatprep.subr.bf16.mxu0 0
    %916 = vmatpush1.bf16.xpose.msra.mxu0 0
    %917 = vmatprep.subr.bf16.mxu0 0
    %918 = vmatpush1.bf16.xpose.msra.mxu0 0
    %919 = vmatprep.subr.bf16.mxu0 0
    %920 = vmatpush1.bf16.xpose.msra.mxu0 0
    %921 = vmatprep.mubr.bf16.mxu0 0
    %922 = vmatmul.mubr.bf16.gmra.mrb[0].mxu0 %v884
    %v923 = vpop.f32.mrb[0].mxu0
    %v924 = vadd.f32 0.0, %v923
    %v925 = vpop.f32.mrb[0].mxu0
    %v926 = vpop.f32.mrb[0].mxu0
    %v927 = vpop.f32.mrb[0].mxu0
    %928 = vdwg.mxu0
    %v929 = vsel %vm139, %v924, -inf
    %930 = vmax.xlane.f32.xlu0 %v929
    %v931 = vpop.xlane.xlu0 %930
    %v932 = vsub.f32 %v924, %v931
    %v933 = vmul.f32 %v932, 1.442695
    %v934 = vpow.pop %v933
    %v935 = vsel %vm139, %v934, 0.0
    %936 = vadd.xlane.f32.xlu0 %v935
    %v937 = vpop.xlane.xlu0 %936
    %v938 = vrcp.pop %v937
    %v939 = vmul.f32 %v934, %v938
    %v940 = vpack.c.bf16 %v939, %v939
    %941 = vrot.lane.b32.xlu0 %v769, 56
    %v942 = vpop.permute.xlu0 %941
    %v944 = vsel %vm139, %v940, 0
    %v947 = vsel %vm203, %v942, 0
    %949 = vmatprep.subr.bf16.mxu0 0
    %950 = vmatpush1.bf16.msra.mxu0 %v947
    %951 = vmatprep.subr.bf16.mxu0 0
    %952 = vmatpush1.bf16.msra.mxu0 0
    %953 = vmatprep.subr.bf16.mxu0 0
    %954 = vmatpush1.bf16.msra.mxu0 0
    %955 = vmatprep.subr.bf16.mxu0 0
    %956 = vmatpush1.bf16.msra.mxu0 0
    %957 = vmatprep.subr.bf16.mxu0 0
    %958 = vmatpush1.bf16.msra.mxu0 0
    %959 = vmatprep.subr.bf16.mxu0 0
    %960 = vmatpush1.bf16.msra.mxu0 0
    %961 = vmatprep.subr.bf16.mxu0 0
    %962 = vmatpush1.bf16.msra.mxu0 0
    %963 = vmatprep.subr.bf16.mxu0 0
    %964 = vmatpush1.bf16.msra.mxu0 0
    %965 = vmatprep.subr.bf16.mxu0 0
    %966 = vmatpush1.bf16.msra.mxu0 0
    %967 = vmatprep.subr.bf16.mxu0 0
    %968 = vmatpush1.bf16.msra.mxu0 0
    %969 = vmatprep.subr.bf16.mxu0 0
    %970 = vmatpush1.bf16.msra.mxu0 0
    %971 = vmatprep.subr.bf16.mxu0 0
    %972 = vmatpush1.bf16.msra.mxu0 0
    %973 = vmatprep.subr.bf16.mxu0 0
    %974 = vmatpush1.bf16.msra.mxu0 0
    %975 = vmatprep.subr.bf16.mxu0 0
    %976 = vmatpush1.bf16.msra.mxu0 0
    %977 = vmatprep.subr.bf16.mxu0 0
    %978 = vmatpush1.bf16.msra.mxu0 0
    %979 = vmatprep.subr.bf16.mxu0 0
    %980 = vmatpush1.bf16.msra.mxu0 0
    %981 = vmatprep.mubr.bf16.mxu0 0
    %982 = vmatmul.mubr.bf16.gmra.mrb[0].mxu0 %v944
    %v983 = vpop.f32.mrb[0].mxu0
    %v984 = vadd.f32 0.0, %v983
    %v985 = vpop.f32.mrb[0].mxu0
    %v986 = vpop.f32.mrb[0].mxu0
    %v987 = vpop.f32.mrb[0].mxu0
    %988 = vdwg.mxu0
    %v989 = vpack.c.bf16 %v984, %v984
    %v991 = vsel %vm139, %v989, 0
    %993 = vmatprep.subr.bf16.mxu0 0
    %994 = vmatpush1.bf16.msra.mxu0 %v364
    %995 = vmatprep.subr.bf16.mxu0 0
    %996 = vmatpush1.bf16.msra.mxu0 0
    %997 = vmatprep.subr.bf16.mxu0 0
    %998 = vmatpush1.bf16.msra.mxu0 0
    %999 = vmatprep.subr.bf16.mxu0 0
    %1000 = vmatpush1.bf16.msra.mxu0 0
    %1001 = vmatprep.subr.bf16.mxu0 0
    %1002 = vmatpush1.bf16.msra.mxu0 0
    %1003 = vmatprep.subr.bf16.mxu0 0
    %1004 = vmatpush1.bf16.msra.mxu0 0
    %1005 = vmatprep.subr.bf16.mxu0 0
    %1006 = vmatpush1.bf16.msra.mxu0 0
    %1007 = vmatprep.subr.bf16.mxu0 0
    %1008 = vmatpush1.bf16.msra.mxu0 0
    %1009 = vmatprep.subr.bf16.mxu0 0
    %1010 = vmatpush1.bf16.msra.mxu0 0
    %1011 = vmatprep.subr.bf16.mxu0 0
    %1012 = vmatpush1.bf16.msra.mxu0 0
    %1013 = vmatprep.subr.bf16.mxu0 0
    %1014 = vmatpush1.bf16.msra.mxu0 0
    %1015 = vmatprep.subr.bf16.mxu0 0
    %1016 = vmatpush1.bf16.msra.mxu0 0
    %1017 = vmatprep.subr.bf16.mxu0 0
    %1018 = vmatpush1.bf16.msra.mxu0 0
    %1019 = vmatprep.subr.bf16.mxu0 0
    %1020 = vmatpush1.bf16.msra.mxu0 0
    %1021 = vmatprep.subr.bf16.mxu0 0
    %1022 = vmatpush1.bf16.msra.mxu0 0
    %1023 = vmatprep.subr.bf16.mxu0 0
    %1024 = vmatpush1.bf16.msra.mxu0 0
    %1025 = vmatprep.mubr.bf16.mxu0 0
    %1026 = vmatmul.mubr.bf16.gmra.mrb[0].mxu0 %v991
    %v1027 = vpop.f32.mrb[0].mxu0
    %v1028 = vadd.f32 0.0, %v1027
    %v1029 = vpop.f32.mrb[0].mxu0
    %v1030 = vpop.f32.mrb[0].mxu0
    %v1031 = vpop.f32.mrb[0].mxu0
    %1032 = vdwg.mxu0
    %v1034 = vsel %vm139, %v878, 0
    %1036 = vmatprep.subr.bf16.mxu0 0
    %1037 = vmatpush1.bf16.msra.mxu0 %v410
    %1038 = vmatprep.subr.bf16.mxu0 0
    %1039 = vmatpush1.bf16.msra.mxu0 0
    %1040 = vmatprep.subr.bf16.mxu0 0
    %1041 = vmatpush1.bf16.msra.mxu0 0
    %1042 = vmatprep.subr.bf16.mxu0 0
    %1043 = vmatpush1.bf16.msra.mxu0 0
    %1044 = vmatprep.subr.bf16.mxu0 0
    %1045 = vmatpush1.bf16.msra.mxu0 0
    %1046 = vmatprep.subr.bf16.mxu0 0
    %1047 = vmatpush1.bf16.msra.mxu0 0
    %1048 = vmatprep.subr.bf16.mxu0 0
    %1049 = vmatpush1.bf16.msra.mxu0 0
    %1050 = vmatprep.subr.bf16.mxu0 0
    %1051 = vmatpush1.bf16.msra.mxu0 0
    %1052 = vmatprep.subr.bf16.mxu0 0
    %1053 = vmatpush1.bf16.msra.mxu0 0
    %1054 = vmatprep.subr.bf16.mxu0 0
    %1055 = vmatpush1.bf16.msra.mxu0 0
    %1056 = vmatprep.subr.bf16.mxu0 0
    %1057 = vmatpush1.bf16.msra.mxu0 0
    %1058 = vmatprep.subr.bf16.mxu0 0
    %1059 = vmatpush1.bf16.msra.mxu0 0
    %1060 = vmatprep.subr.bf16.mxu0 0
    %1061 = vmatpush1.bf16.msra.mxu0 0
    %1062 = vmatprep.subr.bf16.mxu0 0
    %1063 = vmatpush1.bf16.msra.mxu0 0
    %1064 = vmatprep.subr.bf16.mxu0 0
    %1065 = vmatpush1.bf16.msra.mxu0 0
    %1066 = vmatprep.subr.bf16.mxu0 0
    %1067 = vmatpush1.bf16.msra.mxu0 0
    %1068 = vmatprep.mubr.bf16.mxu0 0
    %1069 = vmatmul.mubr.bf16.gmra.mrb[0].mxu0 %v1034
    %v1070 = vpop.f32.mrb[0].mxu0
    %v1071 = vadd.f32 %v1028, %v1070
    %v1072 = vpop.f32.mrb[0].mxu0
    %v1073 = vpop.f32.mrb[0].mxu0
    %v1074 = vpop.f32.mrb[0].mxu0
    %1075 = vdwg.mxu0
    %1076 = vrot.lane.b32.xlu0 %v768, 112
    %v1077 = vpop.permute.xlu0 %1076
    %1078 = vrot.lane.b32.xlu0 %v769, 80
    %v1079 = vpop.permute.xlu0 %1078
    %v1081 = vsel %vm139, %v1077, 0
    %v1084 = vsel %vm139, %v1079, 0
    %1086 = vmatprep.subr.bf16.mxu0 0
    %1087 = vmatpush1.bf16.xpose.msra.mxu0 %v1084
    %1088 = vmatprep.subr.bf16.mxu0 0
    %1089 = vmatpush1.bf16.xpose.msra.mxu0 0
    %1090 = vmatprep.subr.bf16.mxu0 0
    %1091 = vmatpush1.bf16.xpose.msra.mxu0 0
    %1092 = vmatprep.subr.bf16.mxu0 0
    %1093 = vmatpush1.bf16.xpose.msra.mxu0 0
    %1094 = vmatprep.subr.bf16.mxu0 0
    %1095 = vmatpush1.bf16.xpose.msra.mxu0 0
    %1096 = vmatprep.subr.bf16.mxu0 0
    %1097 = vmatpush1.bf16.xpose.msra.mxu0 0
    %1098 = vmatprep.subr.bf16.mxu0 0
    %1099 = vmatpush1.bf16.xpose.msra.mxu0 0
    %1100 = vmatprep.subr.bf16.mxu0 0
    %1101 = vmatpush1.bf16.xpose.msra.mxu0 0
    %1102 = vmatprep.subr.bf16.mxu0 0
    %1103 = vmatpush1.bf16.xpose.msra.mxu0 0
    %1104 = vmatprep.subr.bf16.mxu0 0
    %1105 = vmatpush1.bf16.xpose.msra.mxu0 0
    %1106 = vmatprep.subr.bf16.mxu0 0
    %1107 = vmatpush1.bf16.xpose.msra.mxu0 0
    %1108 = vmatprep.subr.bf16.mxu0 0
    %1109 = vmatpush1.bf16.xpose.msra.mxu0 0
    %1110 = vmatprep.subr.bf16.mxu0 0
    %1111 = vmatpush1.bf16.xpose.msra.mxu0 0
    %1112 = vmatprep.subr.bf16.mxu0 0
    %1113 = vmatpush1.bf16.xpose.msra.mxu0 0
    %1114 = vmatprep.subr.bf16.mxu0 0
    %1115 = vmatpush1.bf16.xpose.msra.mxu0 0
    %1116 = vmatprep.subr.bf16.mxu0 0
    %1117 = vmatpush1.bf16.xpose.msra.mxu0 0
    %1118 = vmatprep.mubr.bf16.mxu0 0
    %1119 = vmatmul.mubr.bf16.gmra.mrb[0].mxu0 %v1081
    %v1120 = vpop.f32.mrb[0].mxu0
    %v1121 = vadd.f32 0.0, %v1120
    %v1122 = vpop.f32.mrb[0].mxu0
    %v1123 = vpop.f32.mrb[0].mxu0
    %v1124 = vpop.f32.mrb[0].mxu0
    %1125 = vdwg.mxu0
    %v1126 = vsel %vm139, %v1121, -inf
    %1127 = vmax.xlane.f32.xlu0 %v1126
    %v1128 = vpop.xlane.xlu0 %1127
    %v1129 = vsub.f32 %v1121, %v1128
    %v1130 = vmul.f32 %v1129, 1.442695
    %v1131 = vpow.pop %v1130
    %v1132 = vsel %vm139, %v1131, 0.0
    %1133 = vadd.xlane.f32.xlu0 %v1132
    %v1134 = vpop.xlane.xlu0 %1133
    %v1135 = vrcp.pop %v1134
    %v1136 = vmul.f32 %v1131, %v1135
    %v1137 = vpack.c.bf16 %v1136, %v1136
    %1138 = vrot.lane.b32.xlu0 %v769, 48
    %v1139 = vpop.permute.xlu0 %1138
    %v1141 = vsel %vm139, %v1137, 0
    %v1144 = vsel %vm203, %v1139, 0
    %1146 = vmatprep.subr.bf16.mxu0 0
    %1147 = vmatpush1.bf16.msra.mxu0 %v1144
    %1148 = vmatprep.subr.bf16.mxu0 0
    %1149 = vmatpush1.bf16.msra.mxu0 0
    %1150 = vmatprep.subr.bf16.mxu0 0
    %1151 = vmatpush1.bf16.msra.mxu0 0
    %1152 = vmatprep.subr.bf16.mxu0 0
    %1153 = vmatpush1.bf16.msra.mxu0 0
    %1154 = vmatprep.subr.bf16.mxu0 0
    %1155 = vmatpush1.bf16.msra.mxu0 0
    %1156 = vmatprep.subr.bf16.mxu0 0
    %1157 = vmatpush1.bf16.msra.mxu0 0
    %1158 = vmatprep.subr.bf16.mxu0 0
    %1159 = vmatpush1.bf16.msra.mxu0 0
    %1160 = vmatprep.subr.bf16.mxu0 0
    %1161 = vmatpush1.bf16.msra.mxu0 0
    %1162 = vmatprep.subr.bf16.mxu0 0
    %1163 = vmatpush1.bf16.msra.mxu0 0
    %1164 = vmatprep.subr.bf16.mxu0 0
    %1165 = vmatpush1.bf16.msra.mxu0 0
    %1166 = vmatprep.subr.bf16.mxu0 0
    %1167 = vmatpush1.bf16.msra.mxu0 0
    %1168 = vmatprep.subr.bf16.mxu0 0
    %1169 = vmatpush1.bf16.msra.mxu0 0
    %1170 = vmatprep.subr.bf16.mxu0 0
    %1171 = vmatpush1.bf16.msra.mxu0 0
    %1172 = vmatprep.subr.bf16.mxu0 0
    %1173 = vmatpush1.bf16.msra.mxu0 0
    %1174 = vmatprep.subr.bf16.mxu0 0
    %1175 = vmatpush1.bf16.msra.mxu0 0
    %1176 = vmatprep.subr.bf16.mxu0 0
    %1177 = vmatpush1.bf16.msra.mxu0 0
    %1178 = vmatprep.mubr.bf16.mxu0 0
    %1179 = vmatmul.mubr.bf16.gmra.mrb[0].mxu0 %v1141
    %v1180 = vpop.f32.mrb[0].mxu0
    %v1181 = vadd.f32 0.0, %v1180
    %v1182 = vpop.f32.mrb[0].mxu0
    %v1183 = vpop.f32.mrb[0].mxu0
    %v1184 = vpop.f32.mrb[0].mxu0
    %1185 = vdwg.mxu0
    %v1186 = vpack.c.bf16 %v1181, %v1181
    %v1188 = vsel %vm139, %v1186, 0
    %1190 = vmatprep.subr.bf16.mxu0 0
    %1191 = vmatpush1.bf16.msra.mxu0 %v567
    %1192 = vmatprep.subr.bf16.mxu0 0
    %1193 = vmatpush1.bf16.msra.mxu0 0
    %1194 = vmatprep.subr.bf16.mxu0 0
    %1195 = vmatpush1.bf16.msra.mxu0 0
    %1196 = vmatprep.subr.bf16.mxu0 0
    %1197 = vmatpush1.bf16.msra.mxu0 0
    %1198 = vmatprep.subr.bf16.mxu0 0
    %1199 = vmatpush1.bf16.msra.mxu0 0
    %1200 = vmatprep.subr.bf16.mxu0 0
    %1201 = vmatpush1.bf16.msra.mxu0 0
    %1202 = vmatprep.subr.bf16.mxu0 0
    %1203 = vmatpush1.bf16.msra.mxu0 0
    %1204 = vmatprep.subr.bf16.mxu0 0
    %1205 = vmatpush1.bf16.msra.mxu0 0
    %1206 = vmatprep.subr.bf16.mxu0 0
    %1207 = vmatpush1.bf16.msra.mxu0 0
    %1208 = vmatprep.subr.bf16.mxu0 0
    %1209 = vmatpush1.bf16.msra.mxu0 0
    %1210 = vmatprep.subr.bf16.mxu0 0
    %1211 = vmatpush1.bf16.msra.mxu0 0
    %1212 = vmatprep.subr.bf16.mxu0 0
    %1213 = vmatpush1.bf16.msra.mxu0 0
    %1214 = vmatprep.subr.bf16.mxu0 0
    %1215 = vmatpush1.bf16.msra.mxu0 0
    %1216 = vmatprep.subr.bf16.mxu0 0
    %1217 = vmatpush1.bf16.msra.mxu0 0
    %1218 = vmatprep.subr.bf16.mxu0 0
    %1219 = vmatpush1.bf16.msra.mxu0 0
    %1220 = vmatprep.subr.bf16.mxu0 0
    %1221 = vmatpush1.bf16.msra.mxu0 0
    %1222 = vmatprep.mubr.bf16.mxu0 0
    %1223 = vmatmul.mubr.bf16.gmra.mrb[0].mxu0 %v1188
    %v1224 = vpop.f32.mrb[0].mxu0
    %v1225 = vadd.f32 0.0, %v1224
    %v1226 = vpop.f32.mrb[0].mxu0
    %v1227 = vpop.f32.mrb[0].mxu0
    %v1228 = vpop.f32.mrb[0].mxu0
    %1229 = vdwg.mxu0
    %v1230 = vadd.f32 %v1071, %v1225
    %1231 = vrot.lane.b32.xlu0 %v768, 104
    %v1232 = vpop.permute.xlu0 %1231
    %1233 = vrot.lane.b32.xlu0 %v769, 72
    %v1234 = vpop.permute.xlu0 %1233
    %v1236 = vsel %vm139, %v1232, 0
    %v1239 = vsel %vm139, %v1234, 0
    %1241 = vmatprep.subr.bf16.mxu0 0
    %1242 = vmatpush1.bf16.xpose.msra.mxu0 %v1239
    %1243 = vmatprep.subr.bf16.mxu0 0
    %1244 = vmatpush1.bf16.xpose.msra.mxu0 0
    %1245 = vmatprep.subr.bf16.mxu0 0
    %1246 = vmatpush1.bf16.xpose.msra.mxu0 0
    %1247 = vmatprep.subr.bf16.mxu0 0
    %1248 = vmatpush1.bf16.xpose.msra.mxu0 0
    %1249 = vmatprep.subr.bf16.mxu0 0
    %1250 = vmatpush1.bf16.xpose.msra.mxu0 0
    %1251 = vmatprep.subr.bf16.mxu0 0
    %1252 = vmatpush1.bf16.xpose.msra.mxu0 0
    %1253 = vmatprep.subr.bf16.mxu0 0
    %1254 = vmatpush1.bf16.xpose.msra.mxu0 0
    %1255 = vmatprep.subr.bf16.mxu0 0
    %1256 = vmatpush1.bf16.xpose.msra.mxu0 0
    %1257 = vmatprep.subr.bf16.mxu0 0
    %1258 = vmatpush1.bf16.xpose.msra.mxu0 0
    %1259 = vmatprep.subr.bf16.mxu0 0
    %1260 = vmatpush1.bf16.xpose.msra.mxu0 0
    %1261 = vmatprep.subr.bf16.mxu0 0
    %1262 = vmatpush1.bf16.xpose.msra.mxu0 0
    %1263 = vmatprep.subr.bf16.mxu0 0
    %1264 = vmatpush1.bf16.xpose.msra.mxu0 0
    %1265 = vmatprep.subr.bf16.mxu0 0
    %1266 = vmatpush1.bf16.xpose.msra.mxu0 0
    %1267 = vmatprep.subr.bf16.mxu0 0
    %1268 = vmatpush1.bf16.xpose.msra.mxu0 0
    %1269 = vmatprep.subr.bf16.mxu0 0
    %1270 = vmatpush1.bf16.xpose.msra.mxu0 0
    %1271 = vmatprep.subr.bf16.mxu0 0
    %1272 = vmatpush1.bf16.xpose.msra.mxu0 0
    %1273 = vmatprep.mubr.bf16.mxu0 0
    %1274 = vmatmul.mubr.bf16.gmra.mrb[0].mxu0 %v1236
    %v1275 = vpop.f32.mrb[0].mxu0
    %v1276 = vadd.f32 0.0, %v1275
    %v1277 = vpop.f32.mrb[0].mxu0
    %v1278 = vpop.f32.mrb[0].mxu0
    %v1279 = vpop.f32.mrb[0].mxu0
    %1280 = vdwg.mxu0
    %v1281 = vsel %vm139, %v1276, -inf
    %1282 = vmax.xlane.f32.xlu0 %v1281
    %v1283 = vpop.xlane.xlu0 %1282
    %v1284 = vsub.f32 %v1276, %v1283
    %v1285 = vmul.f32 %v1284, 1.442695
    %v1286 = vpow.pop %v1285
    %v1287 = vsel %vm139, %v1286, 0.0
    %1288 = vadd.xlane.f32.xlu0 %v1287
    %v1289 = vpop.xlane.xlu0 %1288
    %v1290 = vrcp.pop %v1289
    %v1291 = vmul.f32 %v1286, %v1290
    %v1292 = vpack.c.bf16 %v1291, %v1291
    %1293 = vrot.lane.b32.xlu0 %v769, 40
    %v1294 = vpop.permute.xlu0 %1293
    %v1296 = vsel %vm139, %v1292, 0
    %v1299 = vsel %vm203, %v1294, 0
    %1301 = vmatprep.subr.bf16.mxu0 0
    %1302 = vmatpush1.bf16.msra.mxu0 %v1299
    %1303 = vmatprep.subr.bf16.mxu0 0
    %1304 = vmatpush1.bf16.msra.mxu0 0
    %1305 = vmatprep.subr.bf16.mxu0 0
    %1306 = vmatpush1.bf16.msra.mxu0 0
    %1307 = vmatprep.subr.bf16.mxu0 0
    %1308 = vmatpush1.bf16.msra.mxu0 0
    %1309 = vmatprep.subr.bf16.mxu0 0
    %1310 = vmatpush1.bf16.msra.mxu0 0
    %1311 = vmatprep.subr.bf16.mxu0 0
    %1312 = vmatpush1.bf16.msra.mxu0 0
    %1313 = vmatprep.subr.bf16.mxu0 0
    %1314 = vmatpush1.bf16.msra.mxu0 0
    %1315 = vmatprep.subr.bf16.mxu0 0
    %1316 = vmatpush1.bf16.msra.mxu0 0
    %1317 = vmatprep.subr.bf16.mxu0 0
    %1318 = vmatpush1.bf16.msra.mxu0 0
    %1319 = vmatprep.subr.bf16.mxu0 0
    %1320 = vmatpush1.bf16.msra.mxu0 0
    %1321 = vmatprep.subr.bf16.mxu0 0
    %1322 = vmatpush1.bf16.msra.mxu0 0
    %1323 = vmatprep.subr.bf16.mxu0 0
    %1324 = vmatpush1.bf16.msra.mxu0 0
    %1325 = vmatprep.subr.bf16.mxu0 0
    %1326 = vmatpush1.bf16.msra.mxu0 0
    %1327 = vmatprep.subr.bf16.mxu0 0
    %1328 = vmatpush1.bf16.msra.mxu0 0
    %1329 = vmatprep.subr.bf16.mxu0 0
    %1330 = vmatpush1.bf16.msra.mxu0 0
    %1331 = vmatprep.subr.bf16.mxu0 0
    %1332 = vmatpush1.bf16.msra.mxu0 0
    %1333 = vmatprep.mubr.bf16.mxu0 0
    %1334 = vmatmul.mubr.bf16.gmra.mrb[0].mxu0 %v1296
    %v1335 = vpop.f32.mrb[0].mxu0
    %v1336 = vadd.f32 0.0, %v1335
    %v1337 = vpop.f32.mrb[0].mxu0
    %v1338 = vpop.f32.mrb[0].mxu0
    %v1339 = vpop.f32.mrb[0].mxu0
    %1340 = vdwg.mxu0
    %v1341 = vpack.c.bf16 %v1336, %v1336
    %v1343 = vsel %vm139, %v1341, 0
    %1345 = vmatprep.subr.bf16.mxu0 0
    %1346 = vmatpush1.bf16.msra.mxu0 %v725
    %1347 = vmatprep.subr.bf16.mxu0 0
    %1348 = vmatpush1.bf16.msra.mxu0 0
    %1349 = vmatprep.subr.bf16.mxu0 0
    %1350 = vmatpush1.bf16.msra.mxu0 0
    %1351 = vmatprep.subr.bf16.mxu0 0
    %1352 = vmatpush1.bf16.msra.mxu0 0
    %1353 = vmatprep.subr.bf16.mxu0 0
    %1354 = vmatpush1.bf16.msra.mxu0 0
    %1355 = vmatprep.subr.bf16.mxu0 0
    %1356 = vmatpush1.bf16.msra.mxu0 0
    %1357 = vmatprep.subr.bf16.mxu0 0
    %1358 = vmatpush1.bf16.msra.mxu0 0
    %1359 = vmatprep.subr.bf16.mxu0 0
    %1360 = vmatpush1.bf16.msra.mxu0 0
    %1361 = vmatprep.subr.bf16.mxu0 0
    %1362 = vmatpush1.bf16.msra.mxu0 0
    %1363 = vmatprep.subr.bf16.mxu0 0
    %1364 = vmatpush1.bf16.msra.mxu0 0
    %1365 = vmatprep.subr.bf16.mxu0 0
    %1366 = vmatpush1.bf16.msra.mxu0 0
    %1367 = vmatprep.subr.bf16.mxu0 0
    %1368 = vmatpush1.bf16.msra.mxu0 0
    %1369 = vmatprep.subr.bf16.mxu0 0
    %1370 = vmatpush1.bf16.msra.mxu0 0
    %1371 = vmatprep.subr.bf16.mxu0 0
    %1372 = vmatpush1.bf16.msra.mxu0 0
    %1373 = vmatprep.subr.bf16.mxu0 0
    %1374 = vmatpush1.bf16.msra.mxu0 0
    %1375 = vmatprep.subr.bf16.mxu0 0
    %1376 = vmatpush1.bf16.msra.mxu0 0
    %1377 = vmatprep.mubr.bf16.mxu0 0
    %1378 = vmatmul.mubr.bf16.gmra.mrb[0].mxu0 %v1343
    %v1379 = vpop.f32.mrb[0].mxu0
    %v1380 = vadd.f32 0.0, %v1379
    %v1381 = vpop.f32.mrb[0].mxu0
    %v1382 = vpop.f32.mrb[0].mxu0
    %v1383 = vpop.f32.mrb[0].mxu0
    %1384 = vdwg.mxu0
    %v1385 = vadd.f32 %v1230, %v1380
    %v1386 = vld [vmem:[%s6] sm:$0x1]
    %v1387 = vlaneseq
    %v1388 = vshrl.u32 %v1387, 7
    %v1389 = vsub.s32 0, %v1388
    %v1390 = vrot.slane %v1386, %v1389
    %v1391 = vadd.f32 %v767, %v1390
    %v1392 = vadd.f32 %v1385, %v1390
    %v1393 = vadd.f32 %v59, %v1391
    %v1394 = vadd.f32 %v60, %v1392
    %v1395 = vld [vmem:[%s6 + $0x3] sm:$0x1]
    %v1396 = vld [vmem:[%s6 + $0x4] sm:$0x1]
    %v1397 = vsel %vm83, %v1393, 0.0
    %1398 = vadd.xlane.f32.xlu0 %v1397
    %v1399 = vpop.xlane.xlu0 %1398
    %v1400 = vsel %vm83, %v1394, 0.0
    %1401 = vadd.xlane.f32.xlu0 %v1400
    %v1402 = vpop.xlane.xlu0 %1401
    %v1403 = vrcp.pop 32.0
    %v1404 = vmul.f32 %v1399, %v1403
    %v1405 = vmul.f32 %v1402, %v1403
    %v1406 = vsub.f32 %v1393, %v1404
    %v1407 = vsub.f32 %v1394, %v1405
    %v1408 = vmul.f32 %v1406, %v1406
    %v1409 = vmul.f32 %v1407, %v1407
    %v1410 = vsel %vm83, %v1408, 0.0
    %1411 = vadd.xlane.f32.xlu0 %v1410
    %v1412 = vpop.xlane.xlu0 %1411
    %v1413 = vsel %vm83, %v1409, 0.0
    %1414 = vadd.xlane.f32.xlu0 %v1413
    %v1415 = vpop.xlane.xlu0 %1414
    %v1416 = vmul.f32 %v1412, %v1403
    %v1417 = vmul.f32 %v1415, %v1403
    %v1418 = vadd.f32 %v1416, 1e-05
    %v1419 = vadd.f32 %v1417, 1e-05
    %v1420 = vrsqrt.pop %v1418
    %v1421 = vrsqrt.pop %v1419
    %v1422 = vmul.f32 %v1406, %v1420
    %v1423 = vmul.f32 %v1407, %v1421
    %v1424 = vlaneseq
    %v1425 = vshrl.u32 %v1424, 7
    %v1426 = vsub.s32 0, %v1425
    %v1427 = vrot.slane %v1395, %v1426
    %v1428 = vmul.f32 %v1422, %v1427
    %v1429 = vmul.f32 %v1423, %v1427
    %v1430 = vlaneseq
    %v1431 = vshrl.u32 %v1430, 7
    %v1432 = vsub.s32 0, %v1431
    %v1433 = vrot.slane %v1396, %v1432
    %v1434 = vadd.f32 %v1428, %v1433
    %v1435 = vadd.f32 %v1429, %v1433
    %v1436 = vpack.c.bf16 %v1435, %v1434
    %s1437 = scalar_lea.vmem %s1, 16
    %v1438 = vld [vmem:[%s1437] sm:$0xf]
    %v1439 = vld [vmem:[%s1437 + $0x4] sm:$0xf]
    %v1440 = vld [vmem:[%s1437 + $0x8] sm:$0xf]
    %v1441 = vld [vmem:[%s1437 + $0xc] sm:$0xf]
    %v1442 = vld [vmem:[%s5 + $0x1] sm:$0x1]
    %v1443 = vlaneseq
    %v1444 = vshrl.u32 %v1443, 7
    %v1445 = vsub.s32 0, %v1444
    %v1446 = vrot.slane %v1442, %v1445
    %v1451 = vunpack.c.l.b16 %v1438
    %v1452 = vunpack.c.l.b16 %v1439
    %v1453 = vunpack.c.l.b16 %v1440
    %v1454 = vunpack.c.l.b16 %v1441
    %v1455 = vpack.c.b16 %v1452, %v1451
    %v1456 = vpack.c.b16 %v1454, %v1453
    %v1460 = vsel %vm83, %v1436, 0
    %1462 = vmatprep.subr.bf16.mxu0 0
    %1463 = vmatpush1.bf16.msra.mxu0 %v1455
    %1464 = vmatprep.subr.bf16.mxu0 0
    %1465 = vmatpush1.bf16.msra.mxu0 %v1456
    %1466 = vmatprep.subr.bf16.mxu0 0
    %1467 = vmatpush1.bf16.msra.mxu0 0
    %1468 = vmatprep.subr.bf16.mxu0 0
    %1469 = vmatpush1.bf16.msra.mxu0 0
    %1470 = vmatprep.subr.bf16.mxu0 0
    %1471 = vmatpush1.bf16.msra.mxu0 0
    %1472 = vmatprep.subr.bf16.mxu0 0
    %1473 = vmatpush1.bf16.msra.mxu0 0
    %1474 = vmatprep.subr.bf16.mxu0 0
    %1475 = vmatpush1.bf16.msra.mxu0 0
    %1476 = vmatprep.subr.bf16.mxu0 0
    %1477 = vmatpush1.bf16.msra.mxu0 0
    %1478 = vmatprep.subr.bf16.mxu0 0
    %1479 = vmatpush1.bf16.msra.mxu0 0
    %1480 = vmatprep.subr.bf16.mxu0 0
    %1481 = vmatpush1.bf16.msra.mxu0 0
    %1482 = vmatprep.subr.bf16.mxu0 0
    %1483 = vmatpush1.bf16.msra.mxu0 0
    %1484 = vmatprep.subr.bf16.mxu0 0
    %1485 = vmatpush1.bf16.msra.mxu0 0
    %1486 = vmatprep.subr.bf16.mxu0 0
    %1487 = vmatpush1.bf16.msra.mxu0 0
    %1488 = vmatprep.subr.bf16.mxu0 0
    %1489 = vmatpush1.bf16.msra.mxu0 0
    %1490 = vmatprep.subr.bf16.mxu0 0
    %1491 = vmatpush1.bf16.msra.mxu0 0
    %1492 = vmatprep.subr.bf16.mxu0 0
    %1493 = vmatpush1.bf16.msra.mxu0 0
    %1494 = vmatprep.mubr.bf16.mxu0 0
    %1495 = vmatmul.mubr.bf16.gmra.mrb[0].mxu0 %v1460
    %v1496 = vpop.f32.mrb[0].mxu0
    %v1497 = vadd.f32 %v1446, %v1496
    %v1498 = vpop.f32.mrb[0].mxu0
    %v1499 = vpop.f32.mrb[0].mxu0
    %v1500 = vadd.f32 %v1446, %v1499
    %v1501 = vpop.f32.mrb[0].mxu0
    %1502 = vdwg.mxu0
    %v1503 = vsel %vm83, %v1497, -inf
    %1504 = vmax.xlane.f32.xlu0 %v1503
    %v1505 = vpop.xlane.xlu0 %1504
    %v1506 = vsel %vm83, %v1500, -inf
    %1507 = vmax.xlane.f32.xlu0 %v1506
    %v1508 = vpop.xlane.xlu0 %1507
    %v1509 = vsub.f32 %v1497, %v1505
    %v1510 = vsub.f32 %v1500, %v1508
    %v1511 = vmul.f32 %v1509, 1.442695
    %v1512 = vpow.pop %v1511
    %v1513 = vmul.f32 %v1510, 1.442695
    %v1514 = vpow.pop %v1513
    %v1515 = vsel %vm83, %v1512, 0.0
    %1516 = vadd.xlane.f32.xlu0 %v1515
    %v1517 = vpop.xlane.xlu0 %1516
    %v1518 = vsel %vm83, %v1514, 0.0
    %1519 = vadd.xlane.f32.xlu0 %v1518
    %v1520 = vpop.xlane.xlu0 %1519
    %v1521 = vrcp.pop %v1517
    %v1522 = vrcp.pop %v1520
    %v1523 = vmul.f32 %v1512, %v1521
    %v1524 = vmul.f32 %v1514, %v1522
    %vm1525 = vcmask 523520
    %v1526 = vsel %vm1525, %v1497, -inf
    %v1527 = vrot.slane %v1526, 4
    %v1528 = vmax.f32 %v1526, %v1527
    %v1529 = vrot.slane %v1528, 2
    %v1530 = vmax.f32 %v1528, %v1529
    %v1531 = vrot.slane %v1530, 1
    %v1532 = vmax.f32 %v1530, %v1531
    %v1533 = vsub.f32 %v1497, %v1532
    %v1534 = vmul.f32 %v1533, 1.442695
    %v1535 = vpow.pop %v1534
    %v1536 = vsel %vm1525, %v1535, 0.0
    %v1537 = vrot.slane %v1536, 4
    %v1538 = vadd.f32 %v1536, %v1537
    %v1539 = vrot.slane %v1538, 2
    %v1540 = vadd.f32 %v1538, %v1539
    %v1541 = vrot.slane %v1540, 1
    %v1542 = vadd.f32 %v1540, %v1541
    %v1543 = vrcp.pop %v1542
    %v1544 = vmul.f32 %v1535, %v1543
    %v1545 = vpack.c.bf16 %v1544, %v1544
    %v1546 = vpack.c.bf16 %v1497, %v1497
    %1548 = vrot.lane.b32.xlu0 %v1545, 96
    %v1549 = vpop.permute.xlu0 %1548
    %1551 = vxpose.xlu0.c.b16.start [1/8] %v1549, 128
    %1552 = vxpose.xlu0.c.b16.cont [2/8] 0, 128
    %1553 = vxpose.xlu0.c.b16.cont [3/8] 0, 128
    %1554 = vxpose.xlu0.c.b16.cont [4/8] 0, 128
    %1555 = vxpose.xlu0.c.b16.cont [5/8] 0, 128
    %1556 = vxpose.xlu0.c.b16.cont [6/8] 0, 128
    %1557 = vxpose.xlu0.c.b16.cont [7/8] 0, 128
    %1558 = vxpose.xlu0.c.b16.end [8/8] 0, 128
    %v1559 = vpop.trf.xlu0
    %v1560 = vpop.trf.xlu0
    %v1561 = vpop.trf.xlu0
    %v1562 = vpop.trf.xlu0
    %v1563 = vpop.trf.xlu0
    %v1564 = vpop.trf.xlu0
    %v1565 = vpop.trf.xlu0
    %v1566 = vpop.trf.xlu0
    %1568 = vrot.lane.b32.xlu0 %v1546, 64
    %v1569 = vpop.permute.xlu0 %1568
    %v1571 = vsel %vm139, %v1559, 0
    %v1574 = vsel %vm139, %v1560, 0
    %v1577 = vsel %vm203, %v1569, 0
    %1579 = vmatprep.subr.bf16.mxu0 0
    %1580 = vmatpush1.bf16.msra.mxu0 %v1577
    %1581 = vmatprep.subr.bf16.mxu0 0
    %1582 = vmatpush1.bf16.msra.mxu0 0
    %1583 = vmatprep.subr.bf16.mxu0 0
    %1584 = vmatpush1.bf16.msra.mxu0 0
    %1585 = vmatprep.subr.bf16.mxu0 0
    %1586 = vmatpush1.bf16.msra.mxu0 0
    %1587 = vmatprep.subr.bf16.mxu0 0
    %1588 = vmatpush1.bf16.msra.mxu0 0
    %1589 = vmatprep.subr.bf16.mxu0 0
    %1590 = vmatpush1.bf16.msra.mxu0 0
    %1591 = vmatprep.subr.bf16.mxu0 0
    %1592 = vmatpush1.bf16.msra.mxu0 0
    %1593 = vmatprep.subr.bf16.mxu0 0
    %1594 = vmatpush1.bf16.msra.mxu0 0
    %1595 = vmatprep.subr.bf16.mxu0 0
    %1596 = vmatpush1.bf16.msra.mxu0 0
    %1597 = vmatprep.subr.bf16.mxu0 0
    %1598 = vmatpush1.bf16.msra.mxu0 0
    %1599 = vmatprep.subr.bf16.mxu0 0
    %1600 = vmatpush1.bf16.msra.mxu0 0
    %1601 = vmatprep.subr.bf16.mxu0 0
    %1602 = vmatpush1.bf16.msra.mxu0 0
    %1603 = vmatprep.subr.bf16.mxu0 0
    %1604 = vmatpush1.bf16.msra.mxu0 0
    %1605 = vmatprep.subr.bf16.mxu0 0
    %1606 = vmatpush1.bf16.msra.mxu0 0
    %1607 = vmatprep.subr.bf16.mxu0 0
    %1608 = vmatpush1.bf16.msra.mxu0 0
    %1609 = vmatprep.subr.bf16.mxu0 0
    %1610 = vmatpush1.bf16.msra.mxu0 0
    %1611 = vmatprep.mubr.bf16.mxu0 0
    %1612 = vmatmul.mubr.bf16.gmra.mrb[0].mxu0 %v1571
    %v1613 = vpop.f32.mrb[0].mxu0
    %v1614 = vadd.f32 0.0, %v1613
    %v1615 = vpop.f32.mrb[0].mxu0
    %v1616 = vpop.f32.mrb[0].mxu0
    %v1617 = vadd.f32 0.0, %v1616
    %v1618 = vpop.f32.mrb[0].mxu0
    %1619 = vmatprep.mubr.bf16.mxu0 0
    %1620 = vmatmul.mubr.bf16.gmra.mrb[0].mxu0 %v1574
    %v1621 = vpop.f32.mrb[0].mxu0
    %v1622 = vadd.f32 0.0, %v1621
    %v1623 = vpop.f32.mrb[0].mxu0
    %v1624 = vpop.f32.mrb[0].mxu0
    %v1625 = vadd.f32 0.0, %v1624
    %v1626 = vpop.f32.mrb[0].mxu0
    %1627 = vdwg.mxu0
    %v1628 = vpack.c.bf16 %v1523, %v1523
    %v1629 = vpack.c.bf16 %v1617, %v1614
    %v1630 = vpack.c.bf16 %v1625, %v1622
    %v1632 = vsel %vm83, %v1628, 0
    %1634 = vmatprep.subr.bf16.mxu0 0
    %1635 = vmatpush1.bf16.msra.mxu0 %v1629
    %1636 = vmatprep.subr.bf16.mxu0 0
    %1637 = vmatpush1.bf16.msra.mxu0 %v1630
    %1638 = vmatprep.subr.bf16.mxu0 0
    %1639 = vmatpush1.bf16.msra.mxu0 0
    %1640 = vmatprep.subr.bf16.mxu0 0
    %1641 = vmatpush1.bf16.msra.mxu0 0
    %1642 = vmatprep.subr.bf16.mxu0 0
    %1643 = vmatpush1.bf16.msra.mxu0 0
    %1644 = vmatprep.subr.bf16.mxu0 0
    %1645 = vmatpush1.bf16.msra.mxu0 0
    %1646 = vmatprep.subr.bf16.mxu0 0
    %1647 = vmatpush1.bf16.msra.mxu0 0
    %1648 = vmatprep.subr.bf16.mxu0 0
    %1649 = vmatpush1.bf16.msra.mxu0 0
    %1650 = vmatprep.subr.bf16.mxu0 0
    %1651 = vmatpush1.bf16.msra.mxu0 0
    %1652 = vmatprep.subr.bf16.mxu0 0
    %1653 = vmatpush1.bf16.msra.mxu0 0
    %1654 = vmatprep.subr.bf16.mxu0 0
    %1655 = vmatpush1.bf16.msra.mxu0 0
    %1656 = vmatprep.subr.bf16.mxu0 0
    %1657 = vmatpush1.bf16.msra.mxu0 0
    %1658 = vmatprep.subr.bf16.mxu0 0
    %1659 = vmatpush1.bf16.msra.mxu0 0
    %1660 = vmatprep.subr.bf16.mxu0 0
    %1661 = vmatpush1.bf16.msra.mxu0 0
    %1662 = vmatprep.subr.bf16.mxu0 0
    %1663 = vmatpush1.bf16.msra.mxu0 0
    %1664 = vmatprep.subr.bf16.mxu0 0
    %1665 = vmatpush1.bf16.msra.mxu0 0
    %1666 = vmatprep.mubr.bf16.mxu0 0
    %1667 = vmatmul.mubr.bf16.gmra.mrb[0].mxu0 %v1632
    %v1668 = vpop.f32.mrb[0].mxu0
    %v1669 = vadd.f32 0.0, %v1668
    %v1670 = vpop.f32.mrb[0].mxu0
    %v1671 = vpop.f32.mrb[0].mxu0
    %v1672 = vpop.f32.mrb[0].mxu0
    %1673 = vdwg.mxu0
    %v1674 = vsel %vm1525, %v1500, -inf
    %v1675 = vrot.slane %v1674, 4
    %v1676 = vmax.f32 %v1674, %v1675
    %v1677 = vrot.slane %v1676, 2
    %v1678 = vmax.f32 %v1676, %v1677
    %v1679 = vrot.slane %v1678, 1
    %v1680 = vmax.f32 %v1678, %v1679
    %v1681 = vsub.f32 %v1500, %v1680
    %v1682 = vmul.f32 %v1681, 1.442695
    %v1683 = vpow.pop %v1682
    %v1684 = vsel %vm1525, %v1683, 0.0
    %v1685 = vrot.slane %v1684, 4
    %v1686 = vadd.f32 %v1684, %v1685
    %v1687 = vrot.slane %v1686, 2
    %v1688 = vadd.f32 %v1686, %v1687
    %v1689 = vrot.slane %v1688, 1
    %v1690 = vadd.f32 %v1688, %v1689
    %v1691 = vrcp.pop %v1690
    %v1692 = vmul.f32 %v1683, %v1691
    %v1693 = vpack.c.bf16 %v1692, %v1692
    %v1694 = vpack.c.bf16 %v1500, %v1500
    %1696 = vrot.lane.b32.xlu0 %v1693, 96
    %v1697 = vpop.permute.xlu0 %1696
    %1699 = vxpose.xlu0.c.b16.start [1/8] %v1697, 128
    %1700 = vxpose.xlu0.c.b16.cont [2/8] 0, 128
    %1701 = vxpose.xlu0.c.b16.cont [3/8] 0, 128
    %1702 = vxpose.xlu0.c.b16.cont [4/8] 0, 128
    %1703 = vxpose.xlu0.c.b16.cont [5/8] 0, 128
    %1704 = vxpose.xlu0.c.b16.cont [6/8] 0, 128
    %1705 = vxpose.xlu0.c.b16.cont [7/8] 0, 128
    %1706 = vxpose.xlu0.c.b16.end [8/8] 0, 128
    %v1707 = vpop.trf.xlu0
    %v1708 = vpop.trf.xlu0
    %v1709 = vpop.trf.xlu0
    %v1710 = vpop.trf.xlu0
    %v1711 = vpop.trf.xlu0
    %v1712 = vpop.trf.xlu0
    %v1713 = vpop.trf.xlu0
    %v1714 = vpop.trf.xlu0
    %1716 = vrot.lane.b32.xlu0 %v1694, 64
    %v1717 = vpop.permute.xlu0 %1716
    %v1719 = vsel %vm139, %v1707, 0
    %v1722 = vsel %vm139, %v1708, 0
    %v1725 = vsel %vm203, %v1717, 0
    %1727 = vmatprep.subr.bf16.mxu0 0
    %1728 = vmatpush1.bf16.msra.mxu0 %v1725
    %1729 = vmatprep.subr.bf16.mxu0 0
    %1730 = vmatpush1.bf16.msra.mxu0 0
    %1731 = vmatprep.subr.bf16.mxu0 0
    %1732 = vmatpush1.bf16.msra.mxu0 0
    %1733 = vmatprep.subr.bf16.mxu0 0
    %1734 = vmatpush1.bf16.msra.mxu0 0
    %1735 = vmatprep.subr.bf16.mxu0 0
    %1736 = vmatpush1.bf16.msra.mxu0 0
    %1737 = vmatprep.subr.bf16.mxu0 0
    %1738 = vmatpush1.bf16.msra.mxu0 0
    %1739 = vmatprep.subr.bf16.mxu0 0
    %1740 = vmatpush1.bf16.msra.mxu0 0
    %1741 = vmatprep.subr.bf16.mxu0 0
    %1742 = vmatpush1.bf16.msra.mxu0 0
    %1743 = vmatprep.subr.bf16.mxu0 0
    %1744 = vmatpush1.bf16.msra.mxu0 0
    %1745 = vmatprep.subr.bf16.mxu0 0
    %1746 = vmatpush1.bf16.msra.mxu0 0
    %1747 = vmatprep.subr.bf16.mxu0 0
    %1748 = vmatpush1.bf16.msra.mxu0 0
    %1749 = vmatprep.subr.bf16.mxu0 0
    %1750 = vmatpush1.bf16.msra.mxu0 0
    %1751 = vmatprep.subr.bf16.mxu0 0
    %1752 = vmatpush1.bf16.msra.mxu0 0
    %1753 = vmatprep.subr.bf16.mxu0 0
    %1754 = vmatpush1.bf16.msra.mxu0 0
    %1755 = vmatprep.subr.bf16.mxu0 0
    %1756 = vmatpush1.bf16.msra.mxu0 0
    %1757 = vmatprep.subr.bf16.mxu0 0
    %1758 = vmatpush1.bf16.msra.mxu0 0
    %1759 = vmatprep.mubr.bf16.mxu0 0
    %1760 = vmatmul.mubr.bf16.gmra.mrb[0].mxu0 %v1719
    %v1761 = vpop.f32.mrb[0].mxu0
    %v1762 = vadd.f32 0.0, %v1761
    %v1763 = vpop.f32.mrb[0].mxu0
    %v1764 = vpop.f32.mrb[0].mxu0
    %v1765 = vadd.f32 0.0, %v1764
    %v1766 = vpop.f32.mrb[0].mxu0
    %1767 = vmatprep.mubr.bf16.mxu0 0
    %1768 = vmatmul.mubr.bf16.gmra.mrb[0].mxu0 %v1722
    %v1769 = vpop.f32.mrb[0].mxu0
    %v1770 = vadd.f32 0.0, %v1769
    %v1771 = vpop.f32.mrb[0].mxu0
    %v1772 = vpop.f32.mrb[0].mxu0
    %v1773 = vadd.f32 0.0, %v1772
    %v1774 = vpop.f32.mrb[0].mxu0
    %1775 = vdwg.mxu0
    %v1776 = vpack.c.bf16 %v1524, %v1524
    %v1777 = vpack.c.bf16 %v1765, %v1762
    %v1778 = vpack.c.bf16 %v1773, %v1770
    %v1780 = vsel %vm83, %v1776, 0
    %1782 = vmatprep.subr.bf16.mxu0 0
    %1783 = vmatpush1.bf16.msra.mxu0 %v1777
    %1784 = vmatprep.subr.bf16.mxu0 0
    %1785 = vmatpush1.bf16.msra.mxu0 %v1778
    %1786 = vmatprep.subr.bf16.mxu0 0
    %1787 = vmatpush1.bf16.msra.mxu0 0
    %1788 = vmatprep.subr.bf16.mxu0 0
    %1789 = vmatpush1.bf16.msra.mxu0 0
    %1790 = vmatprep.subr.bf16.mxu0 0
    %1791 = vmatpush1.bf16.msra.mxu0 0
    %1792 = vmatprep.subr.bf16.mxu0 0
    %1793 = vmatpush1.bf16.msra.mxu0 0
    %1794 = vmatprep.subr.bf16.mxu0 0
    %1795 = vmatpush1.bf16.msra.mxu0 0
    %1796 = vmatprep.subr.bf16.mxu0 0
    %1797 = vmatpush1.bf16.msra.mxu0 0
    %1798 = vmatprep.subr.bf16.mxu0 0
    %1799 = vmatpush1.bf16.msra.mxu0 0
    %1800 = vmatprep.subr.bf16.mxu0 0
    %1801 = vmatpush1.bf16.msra.mxu0 0
    %1802 = vmatprep.subr.bf16.mxu0 0
    %1803 = vmatpush1.bf16.msra.mxu0 0
    %1804 = vmatprep.subr.bf16.mxu0 0
    %1805 = vmatpush1.bf16.msra.mxu0 0
    %1806 = vmatprep.subr.bf16.mxu0 0
    %1807 = vmatpush1.bf16.msra.mxu0 0
    %1808 = vmatprep.subr.bf16.mxu0 0
    %1809 = vmatpush1.bf16.msra.mxu0 0
    %1810 = vmatprep.subr.bf16.mxu0 0
    %1811 = vmatpush1.bf16.msra.mxu0 0
    %1812 = vmatprep.subr.bf16.mxu0 0
    %1813 = vmatpush1.bf16.msra.mxu0 0
    %1814 = vmatprep.mubr.bf16.mxu0 0
    %1815 = vmatmul.mubr.bf16.gmra.mrb[0].mxu0 %v1780
    %v1816 = vpop.f32.mrb[0].mxu0
    %v1817 = vadd.f32 0.0, %v1816
    %v1818 = vpop.f32.mrb[0].mxu0
    %v1819 = vpop.f32.mrb[0].mxu0
    %v1820 = vpop.f32.mrb[0].mxu0
    %1821 = vdwg.mxu0
    %v1822 = vpack.c.bf16 %v1817, %v1669
    %s1823 = scalar_lea.vmem [#allocation2], 16
    %v1824 = vld [vmem:[%s1823] sm:$0xf]
    %v1825 = vld [vmem:[%s1823 + $0x4] sm:$0xf]
    %v1826 = vld [vmem:[%s1823 + $0x8] sm:$0xf]
    %v1827 = vld [vmem:[%s1823 + $0xc] sm:$0xf]
    %v1828 = vld [vmem:[%s6 + $0x1] sm:$0x1]
    %v1829 = vlaneseq
    %v1830 = vshrl.u32 %v1829, 7
    %v1831 = vsub.s32 0, %v1830
    %v1832 = vrot.slane %v1828, %v1831
    %v1837 = vunpack.c.l.b16 %v1824
    %v1838 = vunpack.c.l.b16 %v1825
    %v1839 = vunpack.c.l.b16 %v1826
    %v1840 = vunpack.c.l.b16 %v1827
    %v1841 = vpack.c.b16 %v1838, %v1837
    %v1842 = vpack.c.b16 %v1840, %v1839
    %v1846 = vsel %vm83, %v1822, 0
    %1848 = vmatprep.subr.bf16.mxu0 0
    %1849 = vmatpush1.bf16.msra.mxu0 %v1841
    %1850 = vmatprep.subr.bf16.mxu0 0
    %1851 = vmatpush1.bf16.msra.mxu0 %v1842
    %1852 = vmatprep.subr.bf16.mxu0 0
    %1853 = vmatpush1.bf16.msra.mxu0 0
    %1854 = vmatprep.subr.bf16.mxu0 0
    %1855 = vmatpush1.bf16.msra.mxu0 0
    %1856 = vmatprep.subr.bf16.mxu0 0
    %1857 = vmatpush1.bf16.msra.mxu0 0
    %1858 = vmatprep.subr.bf16.mxu0 0
    %1859 = vmatpush1.bf16.msra.mxu0 0
    %1860 = vmatprep.subr.bf16.mxu0 0
    %1861 = vmatpush1.bf16.msra.mxu0 0
    %1862 = vmatprep.subr.bf16.mxu0 0
    %1863 = vmatpush1.bf16.msra.mxu0 0
    %1864 = vmatprep.subr.bf16.mxu0 0
    %1865 = vmatpush1.bf16.msra.mxu0 0
    %1866 = vmatprep.subr.bf16.mxu0 0
    %1867 = vmatpush1.bf16.msra.mxu0 0
    %1868 = vmatprep.subr.bf16.mxu0 0
    %1869 = vmatpush1.bf16.msra.mxu0 0
    %1870 = vmatprep.subr.bf16.mxu0 0
    %1871 = vmatpush1.bf16.msra.mxu0 0
    %1872 = vmatprep.subr.bf16.mxu0 0
    %1873 = vmatpush1.bf16.msra.mxu0 0
    %1874 = vmatprep.subr.bf16.mxu0 0
    %1875 = vmatpush1.bf16.msra.mxu0 0
    %1876 = vmatprep.subr.bf16.mxu0 0
    %1877 = vmatpush1.bf16.msra.mxu0 0
    %1878 = vmatprep.subr.bf16.mxu0 0
    %1879 = vmatpush1.bf16.msra.mxu0 0
    %1880 = vmatprep.mubr.bf16.mxu0 0
    %1881 = vmatmul.mubr.bf16.gmra.mrb[0].mxu0 %v1846
    %v1882 = vpop.f32.mrb[0].mxu0
    %v1883 = vadd.f32 %v1832, %v1882
    %v1884 = vpop.f32.mrb[0].mxu0
    %v1885 = vpop.f32.mrb[0].mxu0
    %v1886 = vadd.f32 %v1832, %v1885
    %v1887 = vpop.f32.mrb[0].mxu0
    %1888 = vdwg.mxu0
    %v1889 = vadd.f32 %v1434, %v1883
    %v1890 = vadd.f32 %v1435, %v1886
    %v1891 = vld [vmem:[%s6 + $0x5] sm:$0x1]
    %v1892 = vld [vmem:[%s6 + $0x6] sm:$0x1]
    %v1893 = vsel %vm83, %v1889, 0.0
    %1894 = vadd.xlane.f32.xlu0 %v1893
    %v1895 = vpop.xlane.xlu0 %1894
    %v1896 = vsel %vm83, %v1890, 0.0
    %1897 = vadd.xlane.f32.xlu0 %v1896
    %v1898 = vpop.xlane.xlu0 %1897
    %v1899 = vmul.f32 %v1895, %v1403
    %v1900 = vmul.f32 %v1898, %v1403
    %v1901 = vsub.f32 %v1889, %v1899
    %v1902 = vsub.f32 %v1890, %v1900
    %v1903 = vmul.f32 %v1901, %v1901
    %v1904 = vmul.f32 %v1902, %v1902
    %v1905 = vsel %vm83, %v1903, 0.0
    %1906 = vadd.xlane.f32.xlu0 %v1905
    %v1907 = vpop.xlane.xlu0 %1906
    %v1908 = vsel %vm83, %v1904, 0.0
    %1909 = vadd.xlane.f32.xlu0 %v1908
    %v1910 = vpop.xlane.xlu0 %1909
    %v1911 = vmul.f32 %v1907, %v1403
    %v1912 = vmul.f32 %v1910, %v1403
    %v1913 = vadd.f32 %v1911, 1e-05
    %v1914 = vadd.f32 %v1912, 1e-05
    %v1915 = vrsqrt.pop %v1913
    %v1916 = vrsqrt.pop %v1914
    %v1917 = vmul.f32 %v1901, %v1915
    %v1918 = vmul.f32 %v1902, %v1916
    %v1919 = vlaneseq
    %v1920 = vshrl.u32 %v1919, 7
    %v1921 = vsub.s32 0, %v1920
    %v1922 = vrot.slane %v1891, %v1921
    %v1923 = vmul.f32 %v1917, %v1922
    %v1924 = vmul.f32 %v1918, %v1922
    %v1925 = vlaneseq
    %v1926 = vshrl.u32 %v1925, 7
    %v1927 = vsub.s32 0, %v1926
    %v1928 = vrot.slane %v1892, %v1927
    %v1929 = vadd.f32 %v1923, %v1928
    %v1930 = vadd.f32 %v1924, %v1928
    %v1931 = vpack.c.bf16 %v1930, %v1929
    %v1932 = vld [vmem:[#allocation5] sm:$0xf]
    %v1933 = vld [vmem:[#allocation5 + $0x4] sm:$0xf]
    %v1934 = vld [vmem:[#allocation5 + $0x8] sm:$0xf]
    %v1935 = vld [vmem:[#allocation5 + $0xc] sm:$0xf]
    %v1936 = vld [vmem:[%s7] sm:$0x1]
    %v1938 = vlaneseq
    %v1939 = vshrl.u32 %v1938, 7
    %v1940 = vsub.s32 0, %v1939
    %v1941 = vrot.slane %v1936, %v1940
    %v1947 = vunpack.c.l.b16 %v1932
    %v1948 = vunpack.c.l.b16 %v1933
    %v1949 = vunpack.c.l.b16 %v1934
    %v1950 = vunpack.c.l.b16 %v1935
    %v1951 = vpack.c.b16 %v1948, %v1947
    %v1952 = vpack.c.b16 %v1950, %v1949
    %v1956 = vsel %vm83, %v1931, 0
    %1958 = vmatprep.subr.bf16.mxu0 0
    %1959 = vmatpush1.bf16.msra.mxu0 %v1951
    %1960 = vmatprep.subr.bf16.mxu0 0
    %1961 = vmatpush1.bf16.msra.mxu0 %v1952
    %1962 = vmatprep.subr.bf16.mxu0 0
    %1963 = vmatpush1.bf16.msra.mxu0 0
    %1964 = vmatprep.subr.bf16.mxu0 0
    %1965 = vmatpush1.bf16.msra.mxu0 0
    %1966 = vmatprep.subr.bf16.mxu0 0
    %1967 = vmatpush1.bf16.msra.mxu0 0
    %1968 = vmatprep.subr.bf16.mxu0 0
    %1969 = vmatpush1.bf16.msra.mxu0 0
    %1970 = vmatprep.subr.bf16.mxu0 0
    %1971 = vmatpush1.bf16.msra.mxu0 0
    %1972 = vmatprep.subr.bf16.mxu0 0
    %1973 = vmatpush1.bf16.msra.mxu0 0
    %1974 = vmatprep.subr.bf16.mxu0 0
    %1975 = vmatpush1.bf16.msra.mxu0 0
    %1976 = vmatprep.subr.bf16.mxu0 0
    %1977 = vmatpush1.bf16.msra.mxu0 0
    %1978 = vmatprep.subr.bf16.mxu0 0
    %1979 = vmatpush1.bf16.msra.mxu0 0
    %1980 = vmatprep.subr.bf16.mxu0 0
    %1981 = vmatpush1.bf16.msra.mxu0 0
    %1982 = vmatprep.subr.bf16.mxu0 0
    %1983 = vmatpush1.bf16.msra.mxu0 0
    %1984 = vmatprep.subr.bf16.mxu0 0
    %1985 = vmatpush1.bf16.msra.mxu0 0
    %1986 = vmatprep.subr.bf16.mxu0 0
    %1987 = vmatpush1.bf16.msra.mxu0 0
    %1988 = vmatprep.subr.bf16.mxu0 0
    %1989 = vmatpush1.bf16.msra.mxu0 0
    %1990 = vmatprep.mubr.bf16.mxu0 0
    %1991 = vmatmul.mubr.bf16.gmra.mrb[0].mxu0 %v1956
    %v1992 = vpop.f32.mrb[0].mxu0
    %v1993 = vadd.f32 %v1941, %v1992
    %v1994 = vpop.f32.mrb[0].mxu0
    %v1995 = vpop.f32.mrb[0].mxu0
    %v1996 = vadd.f32 %v1941, %v1995
    %v1997 = vpop.f32.mrb[0].mxu0
    %1998 = vdwg.mxu0
    %v1999 = vmax.f32 %v1993, 0.0
    %v2000 = vmax.f32 %v1996, 0.0
    %v2001 = vpack.c.bf16 %v2000, %v1999
    %v2002 = vld [vmem:[%s4] sm:$0xf]
    %v2003 = vld [vmem:[%s4 + $0x4] sm:$0xf]
    %v2004 = vld [vmem:[%s4 + $0x8] sm:$0xf]
    %v2005 = vld [vmem:[%s4 + $0xc] sm:$0xf]
    %v2006 = vld [vmem:[%s4 + $0x10] sm:$0xf]
    %v2007 = vld [vmem:[%s4 + $0x14] sm:$0xf]
    %v2008 = vld [vmem:[%s4 + $0x18] sm:$0xf]
    %v2009 = vld [vmem:[%s4 + $0x1c] sm:$0xf]
    %v2010 = vld [vmem:[%s6 + $0x2] sm:$0x1]
    %v2011 = vlaneseq
    %v2012 = vshrl.u32 %v2011, 7
    %v2013 = vsub.s32 0, %v2012
    %v2014 = vrot.slane %v2010, %v2013
    %v2023 = vunpack.c.l.b16 %v2002
    %v2024 = vunpack.c.l.b16 %v2003
    %v2025 = vunpack.c.l.b16 %v2004
    %v2026 = vunpack.c.l.b16 %v2005
    %v2027 = vunpack.c.l.b16 %v2006
    %v2028 = vunpack.c.l.b16 %v2007
    %v2029 = vunpack.c.l.b16 %v2008
    %v2030 = vunpack.c.l.b16 %v2009
    %v2031 = vpack.c.b16 %v2024, %v2023
    %v2032 = vpack.c.b16 %v2026, %v2025
    %v2033 = vpack.c.b16 %v2028, %v2027
    %v2034 = vpack.c.b16 %v2030, %v2029
    %vm2039 = vcmask 523264
    %v2041 = vsel %vm2039, %v2001, 0
    %2043 = vmatprep.subr.bf16.mxu0 0
    %2044 = vmatpush1.bf16.msra.mxu0 %v2031
    %2045 = vmatprep.subr.bf16.mxu0 0
    %2046 = vmatpush1.bf16.msra.mxu0 %v2032
    %2047 = vmatprep.subr.bf16.mxu0 0
    %2048 = vmatpush1.bf16.msra.mxu0 %v2033
    %2049 = vmatprep.subr.bf16.mxu0 0
    %2050 = vmatpush1.bf16.msra.mxu0 %v2034
    %2051 = vmatprep.subr.bf16.mxu0 0
    %2052 = vmatpush1.bf16.msra.mxu0 0
    %2053 = vmatprep.subr.bf16.mxu0 0
    %2054 = vmatpush1.bf16.msra.mxu0 0
    %2055 = vmatprep.subr.bf16.mxu0 0
    %2056 = vmatpush1.bf16.msra.mxu0 0
    %2057 = vmatprep.subr.bf16.mxu0 0
    %2058 = vmatpush1.bf16.msra.mxu0 0
    %2059 = vmatprep.subr.bf16.mxu0 0
    %2060 = vmatpush1.bf16.msra.mxu0 0
    %2061 = vmatprep.subr.bf16.mxu0 0
    %2062 = vmatpush1.bf16.msra.mxu0 0
    %2063 = vmatprep.subr.bf16.mxu0 0
    %2064 = vmatpush1.bf16.msra.mxu0 0
    %2065 = vmatprep.subr.bf16.mxu0 0
    %2066 = vmatpush1.bf16.msra.mxu0 0
    %2067 = vmatprep.subr.bf16.mxu0 0
    %2068 = vmatpush1.bf16.msra.mxu0 0
    %2069 = vmatprep.subr.bf16.mxu0 0
    %2070 = vmatpush1.bf16.msra.mxu0 0
    %2071 = vmatprep.subr.bf16.mxu0 0
    %2072 = vmatpush1.bf16.msra.mxu0 0
    %2073 = vmatprep.subr.bf16.mxu0 0
    %2074 = vmatpush1.bf16.msra.mxu0 0
    %2075 = vmatprep.mubr.bf16.mxu0 0
    %2076 = vmatmul.mubr.bf16.gmra.mrb[0].mxu0 %v2041
    %v2077 = vpop.f32.mrb[0].mxu0
    %v2078 = vadd.f32 %v2014, %v2077
    %v2079 = vpop.f32.mrb[0].mxu0
    %v2080 = vpop.f32.mrb[0].mxu0
    %v2081 = vadd.f32 %v2014, %v2080
    %v2082 = vpop.f32.mrb[0].mxu0
    %2083 = vdwg.mxu0
    %v2084 = vadd.f32 %v1929, %v2078
    %v2085 = vadd.f32 %v1930, %v2081
    %v2086 = vld [vmem:[%s6 + $0x7] sm:$0x1]
    %v2087 = vld [vmem:[%s6 + $0x8] sm:$0x1]
    %v2088 = vsel %vm83, %v2084, 0.0
    %2089 = vadd.xlane.f32.xlu0 %v2088
    %v2090 = vpop.xlane.xlu0 %2089
    %v2091 = vsel %vm83, %v2085, 0.0
    %2092 = vadd.xlane.f32.xlu0 %v2091
    %v2093 = vpop.xlane.xlu0 %2092
    %v2094 = vmul.f32 %v2090, %v1403
    %v2095 = vmul.f32 %v2093, %v1403
    %v2096 = vsub.f32 %v2084, %v2094
    %v2097 = vsub.f32 %v2085, %v2095
    %v2098 = vmul.f32 %v2096, %v2096
    %v2099 = vmul.f32 %v2097, %v2097
    %v2100 = vsel %vm83, %v2098, 0.0
    %2101 = vadd.xlane.f32.xlu0 %v2100
    %v2102 = vpop.xlane.xlu0 %2101
    %v2103 = vsel %vm83, %v2099, 0.0
    %2104 = vadd.xlane.f32.xlu0 %v2103
    %v2105 = vpop.xlane.xlu0 %2104
    %v2106 = vmul.f32 %v2102, %v1403
    %v2107 = vmul.f32 %v2105, %v1403
    %v2108 = vadd.f32 %v2106, 1e-05
    %v2109 = vadd.f32 %v2107, 1e-05
    %v2110 = vrsqrt.pop %v2108
    %v2111 = vrsqrt.pop %v2109
    %v2112 = vmul.f32 %v2096, %v2110
    %v2113 = vmul.f32 %v2097, %v2111
    %v2114 = vlaneseq
    %v2115 = vshrl.u32 %v2114, 7
    %v2116 = vsub.s32 0, %v2115
    %v2117 = vrot.slane %v2086, %v2116
    %v2118 = vmul.f32 %v2112, %v2117
    %v2119 = vmul.f32 %v2113, %v2117
    %v2120 = vlaneseq
    %v2121 = vshrl.u32 %v2120, 7
    %v2122 = vsub.s32 0, %v2121
    %v2123 = vrot.slane %v2087, %v2122
    %v2124 = vadd.f32 %v2118, %v2123
    %v2125 = vadd.f32 %v2119, %v2123
    %2126 = vst.msk [vmem:[#allocation7] sm:$0xff] %vm83, %v2124
    %2127 = vst.msk [vmem:[#allocation7 + $0x8] sm:$0xff] %vm83, %v2125
    // Predicated region
    $region42: #{tpu_custom_call.1} parent=1 // pred_check
      _
    $region43: #{tpu_custom_call.1} parent=1 // pred_check_branch
      %2129 = sbr.rel (0) target = $region45
    $region44: #{tpu_custom_call.1} parent=1 // pred_region
      %s2131 = ssub.s32 256, 256
      %2132 = vsyncadd [#allocation4], %s2131
      %s2133 = sshll.u32 [#allocation7], 4
      %s2134 = int_to_ptr.vmem [resolvable:$true] %s2133
      %2139 = dma.vmem_to_hbm [thread:$0]  %s2134, 256, %s8, [#allocation4], 128, 128, 8
    $region45: #{tpu_custom_call.1} parent=1 // pred_fallthru
      _
    // Predicated region
    $region46: #{tpu_custom_call.1} parent=1 // pred_check
      _
    $region47: #{tpu_custom_call.1} parent=1 // pred_check_branch
      %2141 = sbr.rel (0) target = $region49
    $region48: #{tpu_custom_call.1} parent=1 // pred_region
      %2142 = dma.done [#allocation4], 256
    $region49: #{tpu_custom_call.1} parent=1 // pred_fallthru
      _
    %2143 = vsyncpa [#allocation3], 1
    %2144 = vsyncpa [#allocation6], 1
    %2145 = vsyncpa [#allocation4], 1

</llo_original>
